<compile_context>
chip_gen: v7x
topology: tpu7x:2x2x1
jax: 0.10.0
libtpu: 0.0.40
codegen_flags: <defaults>
</compile_context>

<pallas_src>
import math
from functools import partial

import jax
import jax.numpy as jnp
from jax.experimental import pallas as pl
from jax.experimental.pallas import tpu as pltpu


def _round_up(x, m):
    return (x + m - 1) // m * m


# ----------------------------- in-kernel helpers -----------------------------

def _layernorm(x, gamma, beta, d_real, eps=1e-5):
    """LayerNorm over the first d_real features of a zero-padded (rows, Dp) array.

    Padded columns of x are exactly zero, so sum(x)/d_real and sum(x*x)/d_real
    give the correct mean / E[x^2]; gamma/beta are zero-padded so the padded
    output columns stay exactly zero.
    """
    inv_d = 1.0 / d_real
    mean = jnp.sum(x, axis=-1, keepdims=True) * inv_d
    mean_sq = jnp.sum(x * x, axis=-1, keepdims=True) * inv_d
    var = mean_sq - mean * mean
    return (x - mean) * jax.lax.rsqrt(var + eps) * gamma + beta


def _mha(x_q, x_kv, bias, wq, bq, wkv, bkv, wo, bo, n_head, d_model):
    """Multi-head attention on one query-row tile.

    x_q: (Tq, Dp) f32 query rows.   x_kv: (S, Dp) f32 key/value rows.
    bias: (Tq, S) additive mask bias (0 keep, -1e9 masked), bf16.
    wq: (Dp, Dp) bf16; wkv: (Dp, 2*Dp) bf16 (K|V fused); wo: (d_model, Dp) bf16.
    Biases are f32.  Matmuls take bf16 operands with f32 accumulation.
    """
    dp = x_q.shape[-1]
    dh = d_model // n_head
    scale = 1.0 / math.sqrt(dh)

    q = jnp.dot(x_q.astype(jnp.bfloat16), wq,
                preferred_element_type=jnp.float32) + bq          # (Tq, Dp)
    kv = jnp.dot(x_kv.astype(jnp.bfloat16), wkv,
                 preferred_element_type=jnp.float32) + bkv        # (S, 2*Dp)

    # Head-invariant work hoisted out of the per-head loop.
    q_bf = (q * scale).astype(jnp.bfloat16)
    k_bf = kv[:, :dp].astype(jnp.bfloat16)
    v_bf = kv[:, dp:].astype(jnp.bfloat16)
    bias_f32 = bias.astype(jnp.float32)

    head_outs = []
    for h in range(n_head):                      # static unroll over heads
        lo = h * dh
        qh = q_bf[:, lo:lo + dh]                 # (Tq, dh)
        kh = k_bf[:, lo:lo + dh]                 # (S, dh)
        vh = v_bf[:, lo:lo + dh]                 # (S, dh)
        # q @ k^T via dot_general (no materialized transpose).
        s = jnp.einsum("qd,kd->qk", qh, kh,
                       preferred_element_type=jnp.float32) + bias_f32
        s = s - jnp.max(s, axis=-1, keepdims=True)
        p = jnp.exp(s)
        p = p * pl.reciprocal(jnp.sum(p, axis=-1, keepdims=True), approx=True)
        head_outs.append(jnp.dot(p.astype(jnp.bfloat16), vh,
                                 preferred_element_type=jnp.float32))

    o = jnp.concatenate(head_outs, axis=-1)      # (Tq, d_model)
    return jnp.dot(o.astype(jnp.bfloat16), wo,
                   preferred_element_type=jnp.float32) + bo       # (Tq, Dp)


# --------------------------------- kernel ------------------------------------

def decoder_layer_kernel(
    enc_ref, dec_kv_ref, dec_q_ref, trg_bias_ref, src_bias_ref,
    wq1_ref, bq1_ref, wkv1_ref, bkv1_ref, wo1_ref, bo1_ref,
    wq2_ref, bq2_ref, wkv2_ref, bkv2_ref, wo2_ref, bo2_ref,
    gamma_ref, beta_ref,
    wff1_ref, bff1_ref, wff2_ref, bff2_ref,
    out_ref, *, n_head, d_model,
):
    enc = enc_ref[0]              # (S, Dp)  full encoder sequence (cross-attn K/V)
    dec_kv = dec_kv_ref[0]        # (S, Dp)  full decoder sequence (self-attn K/V)
    dec_q = dec_q_ref[0]          # (Tq, Dp) decoder query rows for this tile
    trg_bias = trg_bias_ref[0]    # (Tq, S)  additive mask bias (bf16)
    src_bias = src_bias_ref[0]    # (Tq, S)
    gamma = gamma_ref[...]        # (1, Dp)
    beta = beta_ref[...]          # (1, Dp)

    # --- block 1: masked self-attention + residual + norm1 (dropout = id) ---
    x = _mha(dec_q, dec_kv, trg_bias,
             wq1_ref[...], bq1_ref[...], wkv1_ref[...], bkv1_ref[...],
             wo1_ref[...], bo1_ref[...], n_head, d_model)
    x = _layernorm(x + dec_q, gamma, beta, d_model)

    # --- block 2: cross-attention over encoder output + residual + norm1 ---
    resid = x
    x = _mha(x, enc, src_bias,
             wq2_ref[...], bq2_ref[...], wkv2_ref[...], bkv2_ref[...],
             wo2_ref[...], bo2_ref[...], n_head, d_model)
    x = _layernorm(x + resid, gamma, beta, d_model)

    # --- block 3: feedforward (Linear -> ReLU -> Linear) + residual + norm1 ---
    resid = x
    h = jnp.maximum(
        jnp.dot(x.astype(jnp.bfloat16), wff1_ref[...],
                preferred_element_type=jnp.float32) + bff1_ref[...], 0.0)
    y = jnp.dot(h.astype(jnp.bfloat16), wff2_ref[...],
                preferred_element_type=jnp.float32) + bff2_ref[...]
    x = _layernorm(y + resid, gamma, beta, d_model)

    out_ref[0] = x.astype(out_ref.dtype)


# -------------------------------- wrapper -------------------------------------

def decoder_layer(encoder_output, decoder_input, trg_mask, src_mask, params,
                  n_head, *, q_tile=128):
    B, S, D = decoder_input.shape
    H = params["wff1"].shape[1]
    assert D % n_head == 0, "dim_vector must be divisible by n_head"
    Dp = _round_up(D, 128)                 # lane-dense feature dims
    Hp = _round_up(H, 128)

    tq = S if S <= q_tile else q_tile      # query-row tile (second grid axis)
    assert S % tq == 0, "sequence length must be divisible by the query tile"
    n_qt = S // tq

    f32, bf16 = jnp.float32, jnp.bfloat16

    def pad2(w, r, c):
        return jnp.pad(w, ((0, r - w.shape[0]), (0, c - w.shape[1])))

    def pad_seq(x):                        # (B, S, D) -> (B, S, Dp)
        return jnp.pad(x, ((0, 0), (0, 0), (0, Dp - D))).astype(f32)

    enc_p = pad_seq(encoder_output)
    dec_p = pad_seq(decoder_input)

    # additive mask bias: 0 where keep, -1e9 where masked (bf16 halves DMA)
    trg_bias = ((trg_mask.astype(f32) - 1.0) * 1e9).astype(bf16)
    src_bias = ((src_mask.astype(f32) - 1.0) * 1e9).astype(bf16)

    def attn_params(tag):
        wq = pad2(params[f"wq{tag}"], Dp, Dp).astype(bf16)
        bq = pad2(params[f"bq{tag}"], 1, Dp).astype(f32)
        wkv = jnp.concatenate(                      # fused K|V projection
            [pad2(params[f"wk{tag}"], Dp, Dp), pad2(params[f"wv{tag}"], Dp, Dp)],
            axis=1).astype(bf16)                    # (Dp, 2*Dp)
        bkv = jnp.concatenate(
            [pad2(params[f"bk{tag}"], 1, Dp), pad2(params[f"bv{tag}"], 1, Dp)],
            axis=1).astype(f32)                     # (1, 2*Dp)
        wo = pad2(params[f"wo{tag}"], D, Dp).astype(bf16)   # rows stay real D
        bo = pad2(params[f"bo{tag}"], 1, Dp).astype(f32)
        return wq, bq, wkv, bkv, wo, bo

    a1 = attn_params("1")
    a2 = attn_params("2")
    gamma = pad2(params["gamma"], 1, Dp).astype(f32)
    beta = pad2(params["beta"], 1, Dp).astype(f32)
    wff1 = pad2(params["wff1"], Dp, Hp).astype(bf16)
    bff1 = pad2(params["bff1"], 1, Hp).astype(f32)
    wff2 = pad2(params["wff2"], Hp, Dp).astype(bf16)
    bff2 = pad2(params["bff2"], 1, Dp).astype(f32)

    # Two parallel grid axes: (batch, query-row tile).  Weights / full K,V
    # sequences are grid-invariant along the query-tile axis (no re-DMA).
    full_seq = pl.BlockSpec((1, S, Dp), lambda b, q: (b, 0, 0))
    q_rows = pl.BlockSpec((1, tq, Dp), lambda b, q: (b, q, 0))
    mask_rows = pl.BlockSpec((1, tq, S), lambda b, q: (b, q, 0))

    def const(shape):
        return pl.BlockSpec(shape, lambda b, q: (0, 0))

    attn_specs = [const((Dp, Dp)), const((1, Dp)),
                  const((Dp, 2 * Dp)), const((1, 2 * Dp)),
                  const((D, Dp)), const((1, Dp))]

    in_specs = ([full_seq, full_seq, q_rows, mask_rows, mask_rows]
                + attn_specs + attn_specs
                + [const((1, Dp)), const((1, Dp))]
                + [const((Dp, Hp)), const((1, Hp)),
                   const((Hp, Dp)), const((1, Dp))])

    args = (enc_p, dec_p, dec_p, trg_bias, src_bias,
            *a1, *a2, gamma, beta, wff1, bff1, wff2, bff2)

    out_p = pl.pallas_call(
        partial(decoder_layer_kernel, n_head=n_head, d_model=D),
        out_shape=jax.ShapeDtypeStruct((B, S, Dp), jnp.float32),
        grid_spec=pltpu.PrefetchScalarGridSpec(
            num_scalar_prefetch=0,
            grid=(B, n_qt),
            in_specs=in_specs,
            out_specs=pl.BlockSpec((1, tq, Dp), lambda b, q: (b, q, 0)),
        ),
        compiler_params=pltpu.CompilerParams(
            dimension_semantics=("parallel", "parallel"),
            vmem_limit_bytes=64 * 1024 * 1024,
        ),
    )(*args)

    return out_p[:, :, :D]     # drop lane padding


# --------------------------- pure-JAX reference --------------------------------

def _ref_layernorm(x, g, b, eps=1e-5):
    m = jnp.mean(x, axis=-1, keepdims=True)
    v = jnp.mean((x - m) ** 2, axis=-1, keepdims=True)
    return (x - m) / jnp.sqrt(v + eps) * g + b


def _ref_mha(q_in, k_in, v_in, mask, wq, bq, wk, bk, wv, bv, wo, bo, n_head, mm):
    B, S, D = q_in.shape
    dh = D // n_head

    def proj(x, w, b):
        return jnp.einsum("bsd,de->bse", x.astype(mm), w.astype(mm),
                          preferred_element_type=jnp.float32) + b

    q = proj(q_in, wq, bq).reshape(B, S, n_head, dh).transpose(0, 2, 1, 3)
    k = proj(k_in, wk, bk).reshape(B, S, n_head, dh).transpose(0, 2, 1, 3)
    v = proj(v_in, wv, bv).reshape(B, S, n_head, dh).transpose(0, 2, 1, 3)
    s = jnp.einsum("bhqd,bhkd->bhqk", q.astype(mm), k.astype(mm),
                   preferred_element_type=jnp.float32) / math.sqrt(dh)
    s = jnp.where(mask[:, None, :, :] == 0.0, -1e9, s)
    p = jax.nn.softmax(s, axis=-1)
    o = jnp.einsum("bhqk,bhkd->bhqd", p.astype(mm), v.astype(mm),
                   preferred_element_type=jnp.float32)
    o = o.transpose(0, 2, 1, 3).reshape(B, S, D)
    return jnp.einsum("bsd,de->bse", o.astype(mm), wo.astype(mm),
                      preferred_element_type=jnp.float32) + bo


def decoder_layer_ref(enc, dec, trg_mask, src_mask, p, n_head,
                      mm_dtype=jnp.float32):
    x = _ref_mha(dec, dec, dec, trg_mask, p["wq1"], p["bq1"], p["wk1"], p["bk1"],
                 p["wv1"], p["bv1"], p["wo1"], p["bo1"], n_head, mm_dtype)
    x = _ref_layernorm(x + dec, p["gamma"], p["beta"])
    r = x
    x = _ref_mha(x, enc, enc, src_mask, p["wq2"], p["bq2"], p["wk2"], p["bk2"],
                 p["wv2"], p["bv2"], p["wo2"], p["bo2"], n_head, mm_dtype)
    x = _ref_layernorm(x + r, p["gamma"], p["beta"])
    r = x
    h = jax.nn.relu(jnp.einsum("bsd,dh->bsh", x.astype(mm_dtype),
                               p["wff1"].astype(mm_dtype),
                               preferred_element_type=jnp.float32) + p["bff1"])
    x = jnp.einsum("bsh,hd->bsd", h.astype(mm_dtype), p["wff2"].astype(mm_dtype),
                   preferred_element_type=jnp.float32) + p["bff2"]
    return _ref_layernorm(x + r, p["gamma"], p["beta"])


# ----------------------------------- main --------------------------------------

if __name__ == "__main__":
    B, S, D, H, n_head = 2, 8, 32, 64, 4

    key = jax.random.PRNGKey(0)
    keys = jax.random.split(key, 32)
    ki = iter(keys)

    def mat(shape, scale):
        return jax.random.normal(next(ki), shape, jnp.float32) * scale

    params = {}
    for tag in ("1", "2"):
        for name in ("q", "k", "v", "o"):
            params[f"w{name}{tag}"] = mat((D, D), 1.0 / math.sqrt(D))
            params[f"b{name}{tag}"] = mat((1, D), 0.02)
    params["gamma"] = jnp.ones((1, D), jnp.float32)
    params["beta"] = jnp.zeros((1, D), jnp.float32)
    params["wff1"] = mat((D, H), 1.0 / math.sqrt(D))
    params["bff1"] = mat((1, H), 0.02)
    params["wff2"] = mat((H, D), 1.0 / math.sqrt(H))
    params["bff2"] = mat((1, D), 0.02)

    encoder_output = jax.random.normal(next(ki), (B, S, D), jnp.float32)
    decoder_input = jax.random.normal(next(ki), (B, S, D), jnp.float32)
    trg_mask = jnp.tril(jnp.ones((S, S), jnp.float32))[None].repeat(B, axis=0)
    src_mask = jnp.ones((B, S, S), jnp.float32)

    out = decoder_layer(encoder_output, decoder_input, trg_mask, src_mask,
                        params, n_head)
    out = jax.block_until_ready(out)
    assert out.shape == (B, S, D)

    # precision-matched reference (bf16 matmul operands, f32 accumulation)
    ref_bf16 = decoder_layer_ref(encoder_output, decoder_input, trg_mask,
                                 src_mask, params, n_head,
                                 mm_dtype=jnp.bfloat16)
    # pure-f32 reference (module semantics)
    ref_f32 = decoder_layer_ref(encoder_output, decoder_input, trg_mask,
                                src_mask, params, n_head,
                                mm_dtype=jnp.float32)

    assert jnp.allclose(out, ref_bf16, atol=3e-2, rtol=3e-2), (
        f"mismatch vs matched ref: {jnp.max(jnp.abs(out - ref_bf16))}")
    assert jnp.allclose(out, ref_f32, atol=2e-1, rtol=2e-1), (
        f"mismatch vs f32 ref: {jnp.max(jnp.abs(out - ref_f32))}")

    print("KERNEL_OK")
</pallas_src>

<mosaic_0001>
module attributes {stable_mosaic.version = 11 : i64} {
  func.func @decoder_layer_kernel(%arg0: i32, %arg1: i32, %arg2: memref<1x8x128xf32, #tpu.memory_space<vmem>>, %arg3: memref<1x8x128xf32, #tpu.memory_space<vmem>>, %arg4: memref<1x8x128xf32, #tpu.memory_space<vmem>>, %arg5: memref<1x8x8xbf16, #tpu.memory_space<vmem>>, %arg6: memref<1x8x8xbf16, #tpu.memory_space<vmem>>, %arg7: memref<128x128xbf16, #tpu.memory_space<vmem>>, %arg8: memref<1x128xf32, #tpu.memory_space<vmem>>, %arg9: memref<128x256xbf16, #tpu.memory_space<vmem>>, %arg10: memref<1x256xf32, #tpu.memory_space<vmem>>, %arg11: memref<32x128xbf16, #tpu.memory_space<vmem>>, %arg12: memref<1x128xf32, #tpu.memory_space<vmem>>, %arg13: memref<128x128xbf16, #tpu.memory_space<vmem>>, %arg14: memref<1x128xf32, #tpu.memory_space<vmem>>, %arg15: memref<128x256xbf16, #tpu.memory_space<vmem>>, %arg16: memref<1x256xf32, #tpu.memory_space<vmem>>, %arg17: memref<32x128xbf16, #tpu.memory_space<vmem>>, %arg18: memref<1x128xf32, #tpu.memory_space<vmem>>, %arg19: memref<1x128xf32, #tpu.memory_space<vmem>>, %arg20: memref<1x128xf32, #tpu.memory_space<vmem>>, %arg21: memref<128x128xbf16, #tpu.memory_space<vmem>>, %arg22: memref<1x128xf32, #tpu.memory_space<vmem>>, %arg23: memref<128x128xbf16, #tpu.memory_space<vmem>>, %arg24: memref<1x128xf32, #tpu.memory_space<vmem>>, %arg25: memref<1x8x128xf32, #tpu.memory_space<vmem>>) attributes {dimension_semantics = [#tpu.dimension_semantics<parallel>, #tpu.dimension_semantics<parallel>], iteration_bounds = array<i64: 2, 1>, scalar_prefetch = 0 : i64, scratch_operands = 0 : i64, tpu.core_type = #tpu.core_type<tc>, window_params = [{transform_indices = @transform_0, window_bounds = array<i64: 1, 8, 128>}, {transform_indices = @transform_1, window_bounds = array<i64: 1, 8, 128>}, {transform_indices = @transform_2, window_bounds = array<i64: 1, 8, 128>}, {transform_indices = @transform_3, window_bounds = array<i64: 1, 8, 8>}, {transform_indices = @transform_4, window_bounds = array<i64: 1, 8, 8>}, {pipeline_mode = #tpu.pipeline_mode<synchronous>, transform_indices = @transform_5, window_bounds = array<i64: 128, 128>}, {pipeline_mode = #tpu.pipeline_mode<synchronous>, transform_indices = @transform_6, window_bounds = array<i64: 1, 128>}, {pipeline_mode = #tpu.pipeline_mode<synchronous>, transform_indices = @transform_7, window_bounds = array<i64: 128, 256>}, {pipeline_mode = #tpu.pipeline_mode<synchronous>, transform_indices = @transform_8, window_bounds = array<i64: 1, 256>}, {pipeline_mode = #tpu.pipeline_mode<synchronous>, transform_indices = @transform_9, window_bounds = array<i64: 32, 128>}, {pipeline_mode = #tpu.pipeline_mode<synchronous>, transform_indices = @transform_10, window_bounds = array<i64: 1, 128>}, {pipeline_mode = #tpu.pipeline_mode<synchronous>, transform_indices = @transform_11, window_bounds = array<i64: 128, 128>}, {pipeline_mode = #tpu.pipeline_mode<synchronous>, transform_indices = @transform_12, window_bounds = array<i64: 1, 128>}, {pipeline_mode = #tpu.pipeline_mode<synchronous>, transform_indices = @transform_13, window_bounds = array<i64: 128, 256>}, {pipeline_mode = #tpu.pipeline_mode<synchronous>, transform_indices = @transform_14, window_bounds = array<i64: 1, 256>}, {pipeline_mode = #tpu.pipeline_mode<synchronous>, transform_indices = @transform_15, window_bounds = array<i64: 32, 128>}, {pipeline_mode = #tpu.pipeline_mode<synchronous>, transform_indices = @transform_16, window_bounds = array<i64: 1, 128>}, {pipeline_mode = #tpu.pipeline_mode<synchronous>, transform_indices = @transform_17, window_bounds = array<i64: 1, 128>}, {pipeline_mode = #tpu.pipeline_mode<synchronous>, transform_indices = @transform_18, window_bounds = array<i64: 1, 128>}, {pipeline_mode = #tpu.pipeline_mode<synchronous>, transform_indices = @transform_19, window_bounds = array<i64: 128, 128>}, {pipeline_mode = #tpu.pipeline_mode<synchronous>, transform_indices = @transform_20, window_bounds = array<i64: 1, 128>}, {pipeline_mode = #tpu.pipeline_mode<synchronous>, transform_indices = @transform_21, window_bounds = array<i64: 128, 128>}, {pipeline_mode = #tpu.pipeline_mode<synchronous>, transform_indices = @transform_22, window_bounds = array<i64: 1, 128>}, {transform_indices = @transform_23, window_bounds = array<i64: 1, 8, 128>}]} {
    %c0 = arith.constant 0 : index
    %c0_0 = arith.constant 0 : index
    %c0_1 = arith.constant 0 : index
    %0 = vector.load %arg2[%c0, %c0_0, %c0_1] : memref<1x8x128xf32, #tpu.memory_space<vmem>>, vector<1x8x128xf32>
    %1 = vector.shape_cast %0 : vector<1x8x128xf32> to vector<8x128xf32>
    %c0_2 = arith.constant 0 : index
    %c0_3 = arith.constant 0 : index
    %c0_4 = arith.constant 0 : index
    %2 = vector.load %arg3[%c0_2, %c0_3, %c0_4] : memref<1x8x128xf32, #tpu.memory_space<vmem>>, vector<1x8x128xf32>
    %3 = vector.shape_cast %2 : vector<1x8x128xf32> to vector<8x128xf32>
    %c0_5 = arith.constant 0 : index
    %c0_6 = arith.constant 0 : index
    %c0_7 = arith.constant 0 : index
    %4 = vector.load %arg4[%c0_5, %c0_6, %c0_7] : memref<1x8x128xf32, #tpu.memory_space<vmem>>, vector<1x8x128xf32>
    %5 = vector.shape_cast %4 : vector<1x8x128xf32> to vector<8x128xf32>
    %c0_8 = arith.constant 0 : index
    %c0_9 = arith.constant 0 : index
    %c0_10 = arith.constant 0 : index
    %6 = vector.load %arg5[%c0_8, %c0_9, %c0_10] : memref<1x8x8xbf16, #tpu.memory_space<vmem>>, vector<1x8x8xbf16>
    %7 = vector.shape_cast %6 : vector<1x8x8xbf16> to vector<8x8xbf16>
    %c0_11 = arith.constant 0 : index
    %c0_12 = arith.constant 0 : index
    %c0_13 = arith.constant 0 : index
    %8 = vector.load %arg6[%c0_11, %c0_12, %c0_13] : memref<1x8x8xbf16, #tpu.memory_space<vmem>>, vector<1x8x8xbf16>
    %9 = vector.shape_cast %8 : vector<1x8x8xbf16> to vector<8x8xbf16>
    %c0_14 = arith.constant 0 : index
    %c0_15 = arith.constant 0 : index
    %10 = vector.load %arg19[%c0_14, %c0_15] : memref<1x128xf32, #tpu.memory_space<vmem>>, vector<1x128xf32>
    %c0_16 = arith.constant 0 : index
    %c0_17 = arith.constant 0 : index
    %11 = vector.load %arg20[%c0_16, %c0_17] : memref<1x128xf32, #tpu.memory_space<vmem>>, vector<1x128xf32>
    %c0_18 = arith.constant 0 : index
    %c0_19 = arith.constant 0 : index
    %12 = vector.load %arg7[%c0_18, %c0_19] : memref<128x128xbf16, #tpu.memory_space<vmem>>, vector<128x128xbf16>
    %c0_20 = arith.constant 0 : index
    %c0_21 = arith.constant 0 : index
    %13 = vector.load %arg8[%c0_20, %c0_21] : memref<1x128xf32, #tpu.memory_space<vmem>>, vector<1x128xf32>
    %c0_22 = arith.constant 0 : index
    %c0_23 = arith.constant 0 : index
    %14 = vector.load %arg9[%c0_22, %c0_23] : memref<128x256xbf16, #tpu.memory_space<vmem>>, vector<128x256xbf16>
    %c0_24 = arith.constant 0 : index
    %c0_25 = arith.constant 0 : index
    %15 = vector.load %arg10[%c0_24, %c0_25] : memref<1x256xf32, #tpu.memory_space<vmem>>, vector<1x256xf32>
    %c0_26 = arith.constant 0 : index
    %c0_27 = arith.constant 0 : index
    %16 = vector.load %arg11[%c0_26, %c0_27] : memref<32x128xbf16, #tpu.memory_space<vmem>>, vector<32x128xbf16>
    %c0_28 = arith.constant 0 : index
    %c0_29 = arith.constant 0 : index
    %17 = vector.load %arg12[%c0_28, %c0_29] : memref<1x128xf32, #tpu.memory_space<vmem>>, vector<1x128xf32>
    %18 = arith.truncf %5 : vector<8x128xf32> to vector<8x128xbf16>
    %cst = arith.constant dense<0.000000e+00> : vector<8x128xf32>
    %19 = tpu.matmul %18, %12, %cst {dimension_numbers = #tpu.dot_dimension_numbers<[1], [0], [0], [1], [0, 0, 1, 1], [], []>} : vector<8x128xbf16>, vector<128x128xbf16>, vector<8x128xf32> -> vector<8x128xf32>
    %20 = vector.broadcast %13 : vector<1x128xf32> to vector<8x128xf32>
    %21 = arith.addf %19, %20 : vector<8x128xf32>
    %22 = arith.truncf %3 : vector<8x128xf32> to vector<8x128xbf16>
    %cst_30 = arith.constant dense<0.000000e+00> : vector<8x256xf32>
    %23 = tpu.matmul %22, %14, %cst_30 {dimension_numbers = #tpu.dot_dimension_numbers<[1], [0], [0], [1], [0, 0, 1, 1], [], []>} : vector<8x128xbf16>, vector<128x256xbf16>, vector<8x256xf32> -> vector<8x256xf32>
    %24 = vector.broadcast %15 : vector<1x256xf32> to vector<8x256xf32>
    %25 = arith.addf %23, %24 : vector<8x256xf32>
    %cst_31 = arith.constant 0.353553385 : f32
    %26 = vector.broadcast %cst_31 : f32 to vector<8x128xf32>
    %27 = arith.mulf %21, %26 : vector<8x128xf32>
    %28 = arith.truncf %27 : vector<8x128xf32> to vector<8x128xbf16>
    %29 = vector.extract_strided_slice %25 {offsets = [0, 0], sizes = [8, 128], strides = [1, 1]} : vector<8x256xf32> to vector<8x128xf32>
    %30 = arith.truncf %29 : vector<8x128xf32> to vector<8x128xbf16>
    %31 = vector.extract_strided_slice %25 {offsets = [0, 128], sizes = [8, 128], strides = [1, 1]} : vector<8x256xf32> to vector<8x128xf32>
    %32 = arith.truncf %31 : vector<8x128xf32> to vector<8x128xbf16>
    %33 = arith.extf %7 : vector<8x8xbf16> to vector<8x8xf32>
    %34 = vector.extract_strided_slice %28 {offsets = [0, 0], sizes = [8, 8], strides = [1, 1]} : vector<8x128xbf16> to vector<8x8xbf16>
    %35 = vector.extract_strided_slice %30 {offsets = [0, 0], sizes = [8, 8], strides = [1, 1]} : vector<8x128xbf16> to vector<8x8xbf16>
    %36 = vector.extract_strided_slice %32 {offsets = [0, 0], sizes = [8, 8], strides = [1, 1]} : vector<8x128xbf16> to vector<8x8xbf16>
    "tpu.trace_start"() <{level = 10 : i32, message = "qd,kd->qk"}> : () -> ()
    %cst_32 = arith.constant dense<0.000000e+00> : vector<8x8xf32>
    %37 = tpu.matmul %34, %35, %cst_32 {dimension_numbers = #tpu.dot_dimension_numbers<[1], [1], [0], [0], [0, 0, 1, 0], [], []>} : vector<8x8xbf16>, vector<8x8xbf16>, vector<8x8xf32> -> vector<8x8xf32>
    "tpu.trace_stop"() : () -> ()
    %38 = arith.addf %37, %33 : vector<8x8xf32>
    %cst_33 = arith.constant dense<0xFF800000> : vector<8xf32>
    %39 = vector.multi_reduction <maximumf>, %38, %cst_33 [1] : vector<8x8xf32> to vector<8xf32>
    %40 = vector.shape_cast %39 : vector<8xf32> to vector<8x1xf32>
    %41 = vector.broadcast %40 : vector<8x1xf32> to vector<8x8xf32>
    %42 = arith.subf %38, %41 : vector<8x8xf32>
    %43 = math.exp %42 : vector<8x8xf32>
    %cst_34 = arith.constant dense<0.000000e+00> : vector<8xf32>
    %44 = vector.multi_reduction <add>, %43, %cst_34 [1] : vector<8x8xf32> to vector<8xf32>
    %45 = vector.shape_cast %44 : vector<8xf32> to vector<8x1xf32>
    %46 = tpu.reciprocal %45 {approx = true} : vector<8x1xf32> -> vector<8x1xf32>
    %47 = vector.broadcast %46 : vector<8x1xf32> to vector<8x8xf32>
    %48 = arith.mulf %43, %47 : vector<8x8xf32>
    %49 = arith.truncf %48 : vector<8x8xf32> to vector<8x8xbf16>
    %cst_35 = arith.constant dense<0.000000e+00> : vector<8x8xf32>
    %50 = tpu.matmul %49, %36, %cst_35 {dimension_numbers = #tpu.dot_dimension_numbers<[1], [0], [0], [1], [0, 0, 1, 1], [], []>} : vector<8x8xbf16>, vector<8x8xbf16>, vector<8x8xf32> -> vector<8x8xf32>
    %51 = vector.extract_strided_slice %28 {offsets = [0, 8], sizes = [8, 8], strides = [1, 1]} : vector<8x128xbf16> to vector<8x8xbf16>
    %52 = vector.extract_strided_slice %30 {offsets = [0, 8], sizes = [8, 8], strides = [1, 1]} : vector<8x128xbf16> to vector<8x8xbf16>
    %53 = vector.extract_strided_slice %32 {offsets = [0, 8], sizes = [8, 8], strides = [1, 1]} : vector<8x128xbf16> to vector<8x8xbf16>
    "tpu.trace_start"() <{level = 10 : i32, message = "qd,kd->qk"}> : () -> ()
    %cst_36 = arith.constant dense<0.000000e+00> : vector<8x8xf32>
    %54 = tpu.matmul %51, %52, %cst_36 {dimension_numbers = #tpu.dot_dimension_numbers<[1], [1], [0], [0], [0, 0, 1, 0], [], []>} : vector<8x8xbf16>, vector<8x8xbf16>, vector<8x8xf32> -> vector<8x8xf32>
    "tpu.trace_stop"() : () -> ()
    %55 = arith.addf %54, %33 : vector<8x8xf32>
    %cst_37 = arith.constant dense<0xFF800000> : vector<8xf32>
    %56 = vector.multi_reduction <maximumf>, %55, %cst_37 [1] : vector<8x8xf32> to vector<8xf32>
    %57 = vector.shape_cast %56 : vector<8xf32> to vector<8x1xf32>
    %58 = vector.broadcast %57 : vector<8x1xf32> to vector<8x8xf32>
    %59 = arith.subf %55, %58 : vector<8x8xf32>
    %60 = math.exp %59 : vector<8x8xf32>
    %cst_38 = arith.constant dense<0.000000e+00> : vector<8xf32>
    %61 = vector.multi_reduction <add>, %60, %cst_38 [1] : vector<8x8xf32> to vector<8xf32>
    %62 = vector.shape_cast %61 : vector<8xf32> to vector<8x1xf32>
    %63 = tpu.reciprocal %62 {approx = true} : vector<8x1xf32> -> vector<8x1xf32>
    %64 = vector.broadcast %63 : vector<8x1xf32> to vector<8x8xf32>
    %65 = arith.mulf %60, %64 : vector<8x8xf32>
    %66 = arith.truncf %65 : vector<8x8xf32> to vector<8x8xbf16>
    %cst_39 = arith.constant dense<0.000000e+00> : vector<8x8xf32>
    %67 = tpu.matmul %66, %53, %cst_39 {dimension_numbers = #tpu.dot_dimension_numbers<[1], [0], [0], [1], [0, 0, 1, 1], [], []>} : vector<8x8xbf16>, vector<8x8xbf16>, vector<8x8xf32> -> vector<8x8xf32>
    %68 = vector.extract_strided_slice %28 {offsets = [0, 16], sizes = [8, 8], strides = [1, 1]} : vector<8x128xbf16> to vector<8x8xbf16>
    %69 = vector.extract_strided_slice %30 {offsets = [0, 16], sizes = [8, 8], strides = [1, 1]} : vector<8x128xbf16> to vector<8x8xbf16>
    %70 = vector.extract_strided_slice %32 {offsets = [0, 16], sizes = [8, 8], strides = [1, 1]} : vector<8x128xbf16> to vector<8x8xbf16>
    "tpu.trace_start"() <{level = 10 : i32, message = "qd,kd->qk"}> : () -> ()
    %cst_40 = arith.constant dense<0.000000e+00> : vector<8x8xf32>
    %71 = tpu.matmul %68, %69, %cst_40 {dimension_numbers = #tpu.dot_dimension_numbers<[1], [1], [0], [0], [0, 0, 1, 0], [], []>} : vector<8x8xbf16>, vector<8x8xbf16>, vector<8x8xf32> -> vector<8x8xf32>
    "tpu.trace_stop"() : () -> ()
    %72 = arith.addf %71, %33 : vector<8x8xf32>
    %cst_41 = arith.constant dense<0xFF800000> : vector<8xf32>
    %73 = vector.multi_reduction <maximumf>, %72, %cst_41 [1] : vector<8x8xf32> to vector<8xf32>
    %74 = vector.shape_cast %73 : vector<8xf32> to vector<8x1xf32>
    %75 = vector.broadcast %74 : vector<8x1xf32> to vector<8x8xf32>
    %76 = arith.subf %72, %75 : vector<8x8xf32>
    %77 = math.exp %76 : vector<8x8xf32>
    %cst_42 = arith.constant dense<0.000000e+00> : vector<8xf32>
    %78 = vector.multi_reduction <add>, %77, %cst_42 [1] : vector<8x8xf32> to vector<8xf32>
    %79 = vector.shape_cast %78 : vector<8xf32> to vector<8x1xf32>
    %80 = tpu.reciprocal %79 {approx = true} : vector<8x1xf32> -> vector<8x1xf32>
    %81 = vector.broadcast %80 : vector<8x1xf32> to vector<8x8xf32>
    %82 = arith.mulf %77, %81 : vector<8x8xf32>
    %83 = arith.truncf %82 : vector<8x8xf32> to vector<8x8xbf16>
    %cst_43 = arith.constant dense<0.000000e+00> : vector<8x8xf32>
    %84 = tpu.matmul %83, %70, %cst_43 {dimension_numbers = #tpu.dot_dimension_numbers<[1], [0], [0], [1], [0, 0, 1, 1], [], []>} : vector<8x8xbf16>, vector<8x8xbf16>, vector<8x8xf32> -> vector<8x8xf32>
    %85 = vector.extract_strided_slice %28 {offsets = [0, 24], sizes = [8, 8], strides = [1, 1]} : vector<8x128xbf16> to vector<8x8xbf16>
    %86 = vector.extract_strided_slice %30 {offsets = [0, 24], sizes = [8, 8], strides = [1, 1]} : vector<8x128xbf16> to vector<8x8xbf16>
    %87 = vector.extract_strided_slice %32 {offsets = [0, 24], sizes = [8, 8], strides = [1, 1]} : vector<8x128xbf16> to vector<8x8xbf16>
    "tpu.trace_start"() <{level = 10 : i32, message = "qd,kd->qk"}> : () -> ()
    %cst_44 = arith.constant dense<0.000000e+00> : vector<8x8xf32>
    %88 = tpu.matmul %85, %86, %cst_44 {dimension_numbers = #tpu.dot_dimension_numbers<[1], [1], [0], [0], [0, 0, 1, 0], [], []>} : vector<8x8xbf16>, vector<8x8xbf16>, vector<8x8xf32> -> vector<8x8xf32>
    "tpu.trace_stop"() : () -> ()
    %89 = arith.addf %88, %33 : vector<8x8xf32>
    %cst_45 = arith.constant dense<0xFF800000> : vector<8xf32>
    %90 = vector.multi_reduction <maximumf>, %89, %cst_45 [1] : vector<8x8xf32> to vector<8xf32>
    %91 = vector.shape_cast %90 : vector<8xf32> to vector<8x1xf32>
    %92 = vector.broadcast %91 : vector<8x1xf32> to vector<8x8xf32>
    %93 = arith.subf %89, %92 : vector<8x8xf32>
    %94 = math.exp %93 : vector<8x8xf32>
    %cst_46 = arith.constant dense<0.000000e+00> : vector<8xf32>
    %95 = vector.multi_reduction <add>, %94, %cst_46 [1] : vector<8x8xf32> to vector<8xf32>
    %96 = vector.shape_cast %95 : vector<8xf32> to vector<8x1xf32>
    %97 = tpu.reciprocal %96 {approx = true} : vector<8x1xf32> -> vector<8x1xf32>
    %98 = vector.broadcast %97 : vector<8x1xf32> to vector<8x8xf32>
    %99 = arith.mulf %94, %98 : vector<8x8xf32>
    %100 = arith.truncf %99 : vector<8x8xf32> to vector<8x8xbf16>
    %cst_47 = arith.constant dense<0.000000e+00> : vector<8x8xf32>
    %101 = tpu.matmul %100, %87, %cst_47 {dimension_numbers = #tpu.dot_dimension_numbers<[1], [0], [0], [1], [0, 0, 1, 1], [], []>} : vector<8x8xbf16>, vector<8x8xbf16>, vector<8x8xf32> -> vector<8x8xf32>
    %102 = tpu.concatenate %50, %67, %84, %101 in 1 : vector<8x8xf32>, vector<8x8xf32>, vector<8x8xf32>, vector<8x8xf32> -> vector<8x32xf32>
    %103 = arith.truncf %102 : vector<8x32xf32> to vector<8x32xbf16>
    %cst_48 = arith.constant dense<0.000000e+00> : vector<8x128xf32>
    %104 = tpu.matmul %103, %16, %cst_48 {dimension_numbers = #tpu.dot_dimension_numbers<[1], [0], [0], [1], [0, 0, 1, 1], [], []>} : vector<8x32xbf16>, vector<32x128xbf16>, vector<8x128xf32> -> vector<8x128xf32>
    %105 = vector.broadcast %17 : vector<1x128xf32> to vector<8x128xf32>
    %106 = arith.addf %104, %105 : vector<8x128xf32>
    %107 = arith.addf %106, %5 : vector<8x128xf32>
    %cst_49 = arith.constant dense<0.000000e+00> : vector<8xf32>
    %108 = vector.multi_reduction <add>, %107, %cst_49 [1] : vector<8x128xf32> to vector<8xf32>
    %109 = vector.shape_cast %108 : vector<8xf32> to vector<8x1xf32>
    %cst_50 = arith.constant 3.125000e-02 : f32
    %110 = vector.broadcast %cst_50 : f32 to vector<8x1xf32>
    %111 = arith.mulf %109, %110 : vector<8x1xf32>
    %112 = arith.mulf %107, %107 : vector<8x128xf32>
    %cst_51 = arith.constant dense<0.000000e+00> : vector<8xf32>
    %113 = vector.multi_reduction <add>, %112, %cst_51 [1] : vector<8x128xf32> to vector<8xf32>
    %114 = vector.shape_cast %113 : vector<8xf32> to vector<8x1xf32>
    %cst_52 = arith.constant 3.125000e-02 : f32
    %115 = vector.broadcast %cst_52 : f32 to vector<8x1xf32>
    %116 = arith.mulf %114, %115 : vector<8x1xf32>
    %117 = arith.mulf %111, %111 : vector<8x1xf32>
    %118 = arith.subf %116, %117 : vector<8x1xf32>
    %119 = vector.broadcast %111 : vector<8x1xf32> to vector<8x128xf32>
    %120 = arith.subf %107, %119 : vector<8x128xf32>
    %cst_53 = arith.constant 9.99999974E-6 : f32
    %121 = vector.broadcast %cst_53 : f32 to vector<8x1xf32>
    %122 = arith.addf %118, %121 : vector<8x1xf32>
    %123 = math.rsqrt %122 : vector<8x1xf32>
    %124 = vector.broadcast %123 : vector<8x1xf32> to vector<8x128xf32>
    %125 = arith.mulf %120, %124 : vector<8x128xf32>
    %126 = vector.broadcast %10 : vector<1x128xf32> to vector<8x128xf32>
    %127 = arith.mulf %125, %126 : vector<8x128xf32>
    %128 = vector.broadcast %11 : vector<1x128xf32> to vector<8x128xf32>
    %129 = arith.addf %127, %128 : vector<8x128xf32>
    %c0_54 = arith.constant 0 : index
    %c0_55 = arith.constant 0 : index
    %130 = vector.load %arg13[%c0_54, %c0_55] : memref<128x128xbf16, #tpu.memory_space<vmem>>, vector<128x128xbf16>
    %c0_56 = arith.constant 0 : index
    %c0_57 = arith.constant 0 : index
    %131 = vector.load %arg14[%c0_56, %c0_57] : memref<1x128xf32, #tpu.memory_space<vmem>>, vector<1x128xf32>
    %c0_58 = arith.constant 0 : index
    %c0_59 = arith.constant 0 : index
    %132 = vector.load %arg15[%c0_58, %c0_59] : memref<128x256xbf16, #tpu.memory_space<vmem>>, vector<128x256xbf16>
    %c0_60 = arith.constant 0 : index
    %c0_61 = arith.constant 0 : index
    %133 = vector.load %arg16[%c0_60, %c0_61] : memref<1x256xf32, #tpu.memory_space<vmem>>, vector<1x256xf32>
    %c0_62 = arith.constant 0 : index
    %c0_63 = arith.constant 0 : index
    %134 = vector.load %arg17[%c0_62, %c0_63] : memref<32x128xbf16, #tpu.memory_space<vmem>>, vector<32x128xbf16>
    %c0_64 = arith.constant 0 : index
    %c0_65 = arith.constant 0 : index
    %135 = vector.load %arg18[%c0_64, %c0_65] : memref<1x128xf32, #tpu.memory_space<vmem>>, vector<1x128xf32>
    %136 = arith.truncf %129 : vector<8x128xf32> to vector<8x128xbf16>
    %cst_66 = arith.constant dense<0.000000e+00> : vector<8x128xf32>
    %137 = tpu.matmul %136, %130, %cst_66 {dimension_numbers = #tpu.dot_dimension_numbers<[1], [0], [0], [1], [0, 0, 1, 1], [], []>} : vector<8x128xbf16>, vector<128x128xbf16>, vector<8x128xf32> -> vector<8x128xf32>
    %138 = vector.broadcast %131 : vector<1x128xf32> to vector<8x128xf32>
    %139 = arith.addf %137, %138 : vector<8x128xf32>
    %140 = arith.truncf %1 : vector<8x128xf32> to vector<8x128xbf16>
    %cst_67 = arith.constant dense<0.000000e+00> : vector<8x256xf32>
    %141 = tpu.matmul %140, %132, %cst_67 {dimension_numbers = #tpu.dot_dimension_numbers<[1], [0], [0], [1], [0, 0, 1, 1], [], []>} : vector<8x128xbf16>, vector<128x256xbf16>, vector<8x256xf32> -> vector<8x256xf32>
    %142 = vector.broadcast %133 : vector<1x256xf32> to vector<8x256xf32>
    %143 = arith.addf %141, %142 : vector<8x256xf32>
    %cst_68 = arith.constant 0.353553385 : f32
    %144 = vector.broadcast %cst_68 : f32 to vector<8x128xf32>
    %145 = arith.mulf %139, %144 : vector<8x128xf32>
    %146 = arith.truncf %145 : vector<8x128xf32> to vector<8x128xbf16>
    %147 = vector.extract_strided_slice %143 {offsets = [0, 0], sizes = [8, 128], strides = [1, 1]} : vector<8x256xf32> to vector<8x128xf32>
    %148 = arith.truncf %147 : vector<8x128xf32> to vector<8x128xbf16>
    %149 = vector.extract_strided_slice %143 {offsets = [0, 128], sizes = [8, 128], strides = [1, 1]} : vector<8x256xf32> to vector<8x128xf32>
    %150 = arith.truncf %149 : vector<8x128xf32> to vector<8x128xbf16>
    %151 = arith.extf %9 : vector<8x8xbf16> to vector<8x8xf32>
    %152 = vector.extract_strided_slice %146 {offsets = [0, 0], sizes = [8, 8], strides = [1, 1]} : vector<8x128xbf16> to vector<8x8xbf16>
    %153 = vector.extract_strided_slice %148 {offsets = [0, 0], sizes = [8, 8], strides = [1, 1]} : vector<8x128xbf16> to vector<8x8xbf16>
    %154 = vector.extract_strided_slice %150 {offsets = [0, 0], sizes = [8, 8], strides = [1, 1]} : vector<8x128xbf16> to vector<8x8xbf16>
    "tpu.trace_start"() <{level = 10 : i32, message = "qd,kd->qk"}> : () -> ()
    %cst_69 = arith.constant dense<0.000000e+00> : vector<8x8xf32>
    %155 = tpu.matmul %152, %153, %cst_69 {dimension_numbers = #tpu.dot_dimension_numbers<[1], [1], [0], [0], [0, 0, 1, 0], [], []>} : vector<8x8xbf16>, vector<8x8xbf16>, vector<8x8xf32> -> vector<8x8xf32>
    "tpu.trace_stop"() : () -> ()
    %156 = arith.addf %155, %151 : vector<8x8xf32>
    %cst_70 = arith.constant dense<0xFF800000> : vector<8xf32>
    %157 = vector.multi_reduction <maximumf>, %156, %cst_70 [1] : vector<8x8xf32> to vector<8xf32>
    %158 = vector.shape_cast %157 : vector<8xf32> to vector<8x1xf32>
    %159 = vector.broadcast %158 : vector<8x1xf32> to vector<8x8xf32>
    %160 = arith.subf %156, %159 : vector<8x8xf32>
    %161 = math.exp %160 : vector<8x8xf32>
    %cst_71 = arith.constant dense<0.000000e+00> : vector<8xf32>
    %162 = vector.multi_reduction <add>, %161, %cst_71 [1] : vector<8x8xf32> to vector<8xf32>
    %163 = vector.shape_cast %162 : vector<8xf32> to vector<8x1xf32>
    %164 = tpu.reciprocal %163 {approx = true} : vector<8x1xf32> -> vector<8x1xf32>
    %165 = vector.broadcast %164 : vector<8x1xf32> to vector<8x8xf32>
    %166 = arith.mulf %161, %165 : vector<8x8xf32>
    %167 = arith.truncf %166 : vector<8x8xf32> to vector<8x8xbf16>
    %cst_72 = arith.constant dense<0.000000e+00> : vector<8x8xf32>
    %168 = tpu.matmul %167, %154, %cst_72 {dimension_numbers = #tpu.dot_dimension_numbers<[1], [0], [0], [1], [0, 0, 1, 1], [], []>} : vector<8x8xbf16>, vector<8x8xbf16>, vector<8x8xf32> -> vector<8x8xf32>
    %169 = vector.extract_strided_slice %146 {offsets = [0, 8], sizes = [8, 8], strides = [1, 1]} : vector<8x128xbf16> to vector<8x8xbf16>
    %170 = vector.extract_strided_slice %148 {offsets = [0, 8], sizes = [8, 8], strides = [1, 1]} : vector<8x128xbf16> to vector<8x8xbf16>
    %171 = vector.extract_strided_slice %150 {offsets = [0, 8], sizes = [8, 8], strides = [1, 1]} : vector<8x128xbf16> to vector<8x8xbf16>
    "tpu.trace_start"() <{level = 10 : i32, message = "qd,kd->qk"}> : () -> ()
    %cst_73 = arith.constant dense<0.000000e+00> : vector<8x8xf32>
    %172 = tpu.matmul %169, %170, %cst_73 {dimension_numbers = #tpu.dot_dimension_numbers<[1], [1], [0], [0], [0, 0, 1, 0], [], []>} : vector<8x8xbf16>, vector<8x8xbf16>, vector<8x8xf32> -> vector<8x8xf32>
    "tpu.trace_stop"() : () -> ()
    %173 = arith.addf %172, %151 : vector<8x8xf32>
    %cst_74 = arith.constant dense<0xFF800000> : vector<8xf32>
    %174 = vector.multi_reduction <maximumf>, %173, %cst_74 [1] : vector<8x8xf32> to vector<8xf32>
    %175 = vector.shape_cast %174 : vector<8xf32> to vector<8x1xf32>
    %176 = vector.broadcast %175 : vector<8x1xf32> to vector<8x8xf32>
    %177 = arith.subf %173, %176 : vector<8x8xf32>
    %178 = math.exp %177 : vector<8x8xf32>
    %cst_75 = arith.constant dense<0.000000e+00> : vector<8xf32>
    %179 = vector.multi_reduction <add>, %178, %cst_75 [1] : vector<8x8xf32> to vector<8xf32>
    %180 = vector.shape_cast %179 : vector<8xf32> to vector<8x1xf32>
    %181 = tpu.reciprocal %180 {approx = true} : vector<8x1xf32> -> vector<8x1xf32>
    %182 = vector.broadcast %181 : vector<8x1xf32> to vector<8x8xf32>
    %183 = arith.mulf %178, %182 : vector<8x8xf32>
    %184 = arith.truncf %183 : vector<8x8xf32> to vector<8x8xbf16>
    %cst_76 = arith.constant dense<0.000000e+00> : vector<8x8xf32>
    %185 = tpu.matmul %184, %171, %cst_76 {dimension_numbers = #tpu.dot_dimension_numbers<[1], [0], [0], [1], [0, 0, 1, 1], [], []>} : vector<8x8xbf16>, vector<8x8xbf16>, vector<8x8xf32> -> vector<8x8xf32>
    %186 = vector.extract_strided_slice %146 {offsets = [0, 16], sizes = [8, 8], strides = [1, 1]} : vector<8x128xbf16> to vector<8x8xbf16>
    %187 = vector.extract_strided_slice %148 {offsets = [0, 16], sizes = [8, 8], strides = [1, 1]} : vector<8x128xbf16> to vector<8x8xbf16>
    %188 = vector.extract_strided_slice %150 {offsets = [0, 16], sizes = [8, 8], strides = [1, 1]} : vector<8x128xbf16> to vector<8x8xbf16>
    "tpu.trace_start"() <{level = 10 : i32, message = "qd,kd->qk"}> : () -> ()
    %cst_77 = arith.constant dense<0.000000e+00> : vector<8x8xf32>
    %189 = tpu.matmul %186, %187, %cst_77 {dimension_numbers = #tpu.dot_dimension_numbers<[1], [1], [0], [0], [0, 0, 1, 0], [], []>} : vector<8x8xbf16>, vector<8x8xbf16>, vector<8x8xf32> -> vector<8x8xf32>
    "tpu.trace_stop"() : () -> ()
    %190 = arith.addf %189, %151 : vector<8x8xf32>
    %cst_78 = arith.constant dense<0xFF800000> : vector<8xf32>
    %191 = vector.multi_reduction <maximumf>, %190, %cst_78 [1] : vector<8x8xf32> to vector<8xf32>
    %192 = vector.shape_cast %191 : vector<8xf32> to vector<8x1xf32>
    %193 = vector.broadcast %192 : vector<8x1xf32> to vector<8x8xf32>
    %194 = arith.subf %190, %193 : vector<8x8xf32>
    %195 = math.exp %194 : vector<8x8xf32>
    %cst_79 = arith.constant dense<0.000000e+00> : vector<8xf32>
    %196 = vector.multi_reduction <add>, %195, %cst_79 [1] : vector<8x8xf32> to vector<8xf32>
    %197 = vector.shape_cast %196 : vector<8xf32> to vector<8x1xf32>
    %198 = tpu.reciprocal %197 {approx = true} : vector<8x1xf32> -> vector<8x1xf32>
    %199 = vector.broadcast %198 : vector<8x1xf32> to vector<8x8xf32>
    %200 = arith.mulf %195, %199 : vector<8x8xf32>
    %201 = arith.truncf %200 : vector<8x8xf32> to vector<8x8xbf16>
    %cst_80 = arith.constant dense<0.000000e+00> : vector<8x8xf32>
    %202 = tpu.matmul %201, %188, %cst_80 {dimension_numbers = #tpu.dot_dimension_numbers<[1], [0], [0], [1], [0, 0, 1, 1], [], []>} : vector<8x8xbf16>, vector<8x8xbf16>, vector<8x8xf32> -> vector<8x8xf32>
    %203 = vector.extract_strided_slice %146 {offsets = [0, 24], sizes = [8, 8], strides = [1, 1]} : vector<8x128xbf16> to vector<8x8xbf16>
    %204 = vector.extract_strided_slice %148 {offsets = [0, 24], sizes = [8, 8], strides = [1, 1]} : vector<8x128xbf16> to vector<8x8xbf16>
    %205 = vector.extract_strided_slice %150 {offsets = [0, 24], sizes = [8, 8], strides = [1, 1]} : vector<8x128xbf16> to vector<8x8xbf16>
    "tpu.trace_start"() <{level = 10 : i32, message = "qd,kd->qk"}> : () -> ()
    %cst_81 = arith.constant dense<0.000000e+00> : vector<8x8xf32>
    %206 = tpu.matmul %203, %204, %cst_81 {dimension_numbers = #tpu.dot_dimension_numbers<[1], [1], [0], [0], [0, 0, 1, 0], [], []>} : vector<8x8xbf16>, vector<8x8xbf16>, vector<8x8xf32> -> vector<8x8xf32>
    "tpu.trace_stop"() : () -> ()
    %207 = arith.addf %206, %151 : vector<8x8xf32>
    %cst_82 = arith.constant dense<0xFF800000> : vector<8xf32>
    %208 = vector.multi_reduction <maximumf>, %207, %cst_82 [1] : vector<8x8xf32> to vector<8xf32>
    %209 = vector.shape_cast %208 : vector<8xf32> to vector<8x1xf32>
    %210 = vector.broadcast %209 : vector<8x1xf32> to vector<8x8xf32>
    %211 = arith.subf %207, %210 : vector<8x8xf32>
    %212 = math.exp %211 : vector<8x8xf32>
    %cst_83 = arith.constant dense<0.000000e+00> : vector<8xf32>
    %213 = vector.multi_reduction <add>, %212, %cst_83 [1] : vector<8x8xf32> to vector<8xf32>
    %214 = vector.shape_cast %213 : vector<8xf32> to vector<8x1xf32>
    %215 = tpu.reciprocal %214 {approx = true} : vector<8x1xf32> -> vector<8x1xf32>
    %216 = vector.broadcast %215 : vector<8x1xf32> to vector<8x8xf32>
    %217 = arith.mulf %212, %216 : vector<8x8xf32>
    %218 = arith.truncf %217 : vector<8x8xf32> to vector<8x8xbf16>
    %cst_84 = arith.constant dense<0.000000e+00> : vector<8x8xf32>
    %219 = tpu.matmul %218, %205, %cst_84 {dimension_numbers = #tpu.dot_dimension_numbers<[1], [0], [0], [1], [0, 0, 1, 1], [], []>} : vector<8x8xbf16>, vector<8x8xbf16>, vector<8x8xf32> -> vector<8x8xf32>
    %220 = tpu.concatenate %168, %185, %202, %219 in 1 : vector<8x8xf32>, vector<8x8xf32>, vector<8x8xf32>, vector<8x8xf32> -> vector<8x32xf32>
    %221 = arith.truncf %220 : vector<8x32xf32> to vector<8x32xbf16>
    %cst_85 = arith.constant dense<0.000000e+00> : vector<8x128xf32>
    %222 = tpu.matmul %221, %134, %cst_85 {dimension_numbers = #tpu.dot_dimension_numbers<[1], [0], [0], [1], [0, 0, 1, 1], [], []>} : vector<8x32xbf16>, vector<32x128xbf16>, vector<8x128xf32> -> vector<8x128xf32>
    %223 = vector.broadcast %135 : vector<1x128xf32> to vector<8x128xf32>
    %224 = arith.addf %222, %223 : vector<8x128xf32>
    %225 = arith.addf %224, %129 : vector<8x128xf32>
    %cst_86 = arith.constant dense<0.000000e+00> : vector<8xf32>
    %226 = vector.multi_reduction <add>, %225, %cst_86 [1] : vector<8x128xf32> to vector<8xf32>
    %227 = vector.shape_cast %226 : vector<8xf32> to vector<8x1xf32>
    %cst_87 = arith.constant 3.125000e-02 : f32
    %228 = vector.broadcast %cst_87 : f32 to vector<8x1xf32>
    %229 = arith.mulf %227, %228 : vector<8x1xf32>
    %230 = arith.mulf %225, %225 : vector<8x128xf32>
    %cst_88 = arith.constant dense<0.000000e+00> : vector<8xf32>
    %231 = vector.multi_reduction <add>, %230, %cst_88 [1] : vector<8x128xf32> to vector<8xf32>
    %232 = vector.shape_cast %231 : vector<8xf32> to vector<8x1xf32>
    %cst_89 = arith.constant 3.125000e-02 : f32
    %233 = vector.broadcast %cst_89 : f32 to vector<8x1xf32>
    %234 = arith.mulf %232, %233 : vector<8x1xf32>
    %235 = arith.mulf %229, %229 : vector<8x1xf32>
    %236 = arith.subf %234, %235 : vector<8x1xf32>
    %237 = vector.broadcast %229 : vector<8x1xf32> to vector<8x128xf32>
    %238 = arith.subf %225, %237 : vector<8x128xf32>
    %cst_90 = arith.constant 9.99999974E-6 : f32
    %239 = vector.broadcast %cst_90 : f32 to vector<8x1xf32>
    %240 = arith.addf %236, %239 : vector<8x1xf32>
    %241 = math.rsqrt %240 : vector<8x1xf32>
    %242 = vector.broadcast %241 : vector<8x1xf32> to vector<8x128xf32>
    %243 = arith.mulf %238, %242 : vector<8x128xf32>
    %244 = vector.broadcast %10 : vector<1x128xf32> to vector<8x128xf32>
    %245 = arith.mulf %243, %244 : vector<8x128xf32>
    %246 = vector.broadcast %11 : vector<1x128xf32> to vector<8x128xf32>
    %247 = arith.addf %245, %246 : vector<8x128xf32>
    %248 = arith.truncf %247 : vector<8x128xf32> to vector<8x128xbf16>
    %c0_91 = arith.constant 0 : index
    %c0_92 = arith.constant 0 : index
    %249 = vector.load %arg21[%c0_91, %c0_92] : memref<128x128xbf16, #tpu.memory_space<vmem>>, vector<128x128xbf16>
    %cst_93 = arith.constant dense<0.000000e+00> : vector<8x128xf32>
    %250 = tpu.matmul %248, %249, %cst_93 {dimension_numbers = #tpu.dot_dimension_numbers<[1], [0], [0], [1], [0, 0, 1, 1], [], []>} : vector<8x128xbf16>, vector<128x128xbf16>, vector<8x128xf32> -> vector<8x128xf32>
    %c0_94 = arith.constant 0 : index
    %c0_95 = arith.constant 0 : index
    %251 = vector.load %arg22[%c0_94, %c0_95] : memref<1x128xf32, #tpu.memory_space<vmem>>, vector<1x128xf32>
    %252 = vector.broadcast %251 : vector<1x128xf32> to vector<8x128xf32>
    %253 = arith.addf %250, %252 : vector<8x128xf32>
    %cst_96 = arith.constant 0.000000e+00 : f32
    %254 = vector.broadcast %cst_96 : f32 to vector<8x128xf32>
    %255 = arith.maximumf %253, %254 : vector<8x128xf32>
    %256 = arith.truncf %255 : vector<8x128xf32> to vector<8x128xbf16>
    %c0_97 = arith.constant 0 : index
    %c0_98 = arith.constant 0 : index
    %257 = vector.load %arg23[%c0_97, %c0_98] : memref<128x128xbf16, #tpu.memory_space<vmem>>, vector<128x128xbf16>
    %cst_99 = arith.constant dense<0.000000e+00> : vector<8x128xf32>
    %258 = tpu.matmul %256, %257, %cst_99 {dimension_numbers = #tpu.dot_dimension_numbers<[1], [0], [0], [1], [0, 0, 1, 1], [], []>} : vector<8x128xbf16>, vector<128x128xbf16>, vector<8x128xf32> -> vector<8x128xf32>
    %c0_100 = arith.constant 0 : index
    %c0_101 = arith.constant 0 : index
    %259 = vector.load %arg24[%c0_100, %c0_101] : memref<1x128xf32, #tpu.memory_space<vmem>>, vector<1x128xf32>
    %260 = vector.broadcast %259 : vector<1x128xf32> to vector<8x128xf32>
    %261 = arith.addf %258, %260 : vector<8x128xf32>
    %262 = arith.addf %261, %247 : vector<8x128xf32>
    %cst_102 = arith.constant dense<0.000000e+00> : vector<8xf32>
    %263 = vector.multi_reduction <add>, %262, %cst_102 [1] : vector<8x128xf32> to vector<8xf32>
    %264 = vector.shape_cast %263 : vector<8xf32> to vector<8x1xf32>
    %cst_103 = arith.constant 3.125000e-02 : f32
    %265 = vector.broadcast %cst_103 : f32 to vector<8x1xf32>
    %266 = arith.mulf %264, %265 : vector<8x1xf32>
    %267 = arith.mulf %262, %262 : vector<8x128xf32>
    %cst_104 = arith.constant dense<0.000000e+00> : vector<8xf32>
    %268 = vector.multi_reduction <add>, %267, %cst_104 [1] : vector<8x128xf32> to vector<8xf32>
    %269 = vector.shape_cast %268 : vector<8xf32> to vector<8x1xf32>
    %cst_105 = arith.constant 3.125000e-02 : f32
    %270 = vector.broadcast %cst_105 : f32 to vector<8x1xf32>
    %271 = arith.mulf %269, %270 : vector<8x1xf32>
    %272 = arith.mulf %266, %266 : vector<8x1xf32>
    %273 = arith.subf %271, %272 : vector<8x1xf32>
    %274 = vector.broadcast %266 : vector<8x1xf32> to vector<8x128xf32>
    %275 = arith.subf %262, %274 : vector<8x128xf32>
    %cst_106 = arith.constant 9.99999974E-6 : f32
    %276 = vector.broadcast %cst_106 : f32 to vector<8x1xf32>
    %277 = arith.addf %273, %276 : vector<8x1xf32>
    %278 = math.rsqrt %277 : vector<8x1xf32>
    %279 = vector.broadcast %278 : vector<8x1xf32> to vector<8x128xf32>
    %280 = arith.mulf %275, %279 : vector<8x128xf32>
    %281 = vector.broadcast %10 : vector<1x128xf32> to vector<8x128xf32>
    %282 = arith.mulf %280, %281 : vector<8x128xf32>
    %283 = vector.broadcast %11 : vector<1x128xf32> to vector<8x128xf32>
    %284 = arith.addf %282, %283 : vector<8x128xf32>
    %c0_107 = arith.constant 0 : index
    %c0_108 = arith.constant 0 : index
    %c0_109 = arith.constant 0 : index
    %285 = vector.load %arg25[%c0_107, %c0_108, %c0_109] : memref<1x8x128xf32, #tpu.memory_space<vmem>>, vector<1x8x128xf32>
    %286 = vector.shape_cast %285 : vector<1x8x128xf32> to vector<8x128xf32>
    %287 = vector.shape_cast %284 : vector<8x128xf32> to vector<1x8x128xf32>
    tpu.vector_store %arg25[%c0_107, %c0_108, %c0_109], %287 {strides = array<i32>} : memref<1x8x128xf32, #tpu.memory_space<vmem>>, vector<1x8x128xf32>,
    return
  }
  func.func @transform_0(%arg0: i32, %arg1: i32) -> (i32, i32, i32) {
    %c0_i32 = arith.constant 0 : i32
    %c0_i32_0 = arith.constant 0 : i32
    %c0_i32_1 = arith.constant 0 : i32
    return %arg0, %c0_i32, %c0_i32_0 : i32, i32, i32
  }
  func.func @transform_1(%arg0: i32, %arg1: i32) -> (i32, i32, i32) {
    %c0_i32 = arith.constant 0 : i32
    %c0_i32_0 = arith.constant 0 : i32
    %c0_i32_1 = arith.constant 0 : i32
    return %arg0, %c0_i32, %c0_i32_0 : i32, i32, i32
  }
  func.func @transform_2(%arg0: i32, %arg1: i32) -> (i32, i32, i32) {
    %c0_i32 = arith.constant 0 : i32
    %c0_i32_0 = arith.constant 0 : i32
    return %arg0, %arg1, %c0_i32 : i32, i32, i32
  }
  func.func @transform_3(%arg0: i32, %arg1: i32) -> (i32, i32, i32) {
    %c0_i32 = arith.constant 0 : i32
    %c0_i32_0 = arith.constant 0 : i32
    return %arg0, %arg1, %c0_i32 : i32, i32, i32
  }
  func.func @transform_4(%arg0: i32, %arg1: i32) -> (i32, i32, i32) {
    %c0_i32 = arith.constant 0 : i32
    %c0_i32_0 = arith.constant 0 : i32
    return %arg0, %arg1, %c0_i32 : i32, i32, i32
  }
  func.func @transform_5(%arg0: i32, %arg1: i32) -> (i32, i32) {
    %c0_i32 = arith.constant 0 : i32
    %c0_i32_0 = arith.constant 0 : i32
    %c0_i32_1 = arith.constant 0 : i32
    return %c0_i32, %c0_i32_0 : i32, i32
  }
  func.func @transform_6(%arg0: i32, %arg1: i32) -> (i32, i32) {
    %c0_i32 = arith.constant 0 : i32
    %c0_i32_0 = arith.constant 0 : i32
    %c0_i32_1 = arith.constant 0 : i32
    return %c0_i32, %c0_i32_0 : i32, i32
  }
  func.func @transform_7(%arg0: i32, %arg1: i32) -> (i32, i32) {
    %c0_i32 = arith.constant 0 : i32
    %c0_i32_0 = arith.constant 0 : i32
    %c0_i32_1 = arith.constant 0 : i32
    return %c0_i32, %c0_i32_0 : i32, i32
  }
  func.func @transform_8(%arg0: i32, %arg1: i32) -> (i32, i32) {
    %c0_i32 = arith.constant 0 : i32
    %c0_i32_0 = arith.constant 0 : i32
    %c0_i32_1 = arith.constant 0 : i32
    return %c0_i32, %c0_i32_0 : i32, i32
  }
  func.func @transform_9(%arg0: i32, %arg1: i32) -> (i32, i32) {
    %c0_i32 = arith.constant 0 : i32
    %c0_i32_0 = arith.constant 0 : i32
    %c0_i32_1 = arith.constant 0 : i32
    return %c0_i32, %c0_i32_0 : i32, i32
  }
  func.func @transform_10(%arg0: i32, %arg1: i32) -> (i32, i32) {
    %c0_i32 = arith.constant 0 : i32
    %c0_i32_0 = arith.constant 0 : i32
    %c0_i32_1 = arith.constant 0 : i32
    return %c0_i32, %c0_i32_0 : i32, i32
  }
  func.func @transform_11(%arg0: i32, %arg1: i32) -> (i32, i32) {
    %c0_i32 = arith.constant 0 : i32
    %c0_i32_0 = arith.constant 0 : i32
    %c0_i32_1 = arith.constant 0 : i32
    return %c0_i32, %c0_i32_0 : i32, i32
  }
  func.func @transform_12(%arg0: i32, %arg1: i32) -> (i32, i32) {
    %c0_i32 = arith.constant 0 : i32
    %c0_i32_0 = arith.constant 0 : i32
    %c0_i32_1 = arith.constant 0 : i32
    return %c0_i32, %c0_i32_0 : i32, i32
  }
  func.func @transform_13(%arg0: i32, %arg1: i32) -> (i32, i32) {
    %c0_i32 = arith.constant 0 : i32
    %c0_i32_0 = arith.constant 0 : i32
    %c0_i32_1 = arith.constant 0 : i32
    return %c0_i32, %c0_i32_0 : i32, i32
  }
  func.func @transform_14(%arg0: i32, %arg1: i32) -> (i32, i32) {
    %c0_i32 = arith.constant 0 : i32
    %c0_i32_0 = arith.constant 0 : i32
    %c0_i32_1 = arith.constant 0 : i32
    return %c0_i32, %c0_i32_0 : i32, i32
  }
  func.func @transform_15(%arg0: i32, %arg1: i32) -> (i32, i32) {
    %c0_i32 = arith.constant 0 : i32
    %c0_i32_0 = arith.constant 0 : i32
    %c0_i32_1 = arith.constant 0 : i32
    return %c0_i32, %c0_i32_0 : i32, i32
  }
  func.func @transform_16(%arg0: i32, %arg1: i32) -> (i32, i32) {
    %c0_i32 = arith.constant 0 : i32
    %c0_i32_0 = arith.constant 0 : i32
    %c0_i32_1 = arith.constant 0 : i32
    return %c0_i32, %c0_i32_0 : i32, i32
  }
  func.func @transform_17(%arg0: i32, %arg1: i32) -> (i32, i32) {
    %c0_i32 = arith.constant 0 : i32
    %c0_i32_0 = arith.constant 0 : i32
    %c0_i32_1 = arith.constant 0 : i32
    return %c0_i32, %c0_i32_0 : i32, i32
  }
  func.func @transform_18(%arg0: i32, %arg1: i32) -> (i32, i32) {
    %c0_i32 = arith.constant 0 : i32
    %c0_i32_0 = arith.constant 0 : i32
    %c0_i32_1 = arith.constant 0 : i32
    return %c0_i32, %c0_i32_0 : i32, i32
  }
  func.func @transform_19(%arg0: i32, %arg1: i32) -> (i32, i32) {
    %c0_i32 = arith.constant 0 : i32
    %c0_i32_0 = arith.constant 0 : i32
    %c0_i32_1 = arith.constant 0 : i32
    return %c0_i32, %c0_i32_0 : i32, i32
  }
  func.func @transform_20(%arg0: i32, %arg1: i32) -> (i32, i32) {
    %c0_i32 = arith.constant 0 : i32
    %c0_i32_0 = arith.constant 0 : i32
    %c0_i32_1 = arith.constant 0 : i32
    return %c0_i32, %c0_i32_0 : i32, i32
  }
  func.func @transform_21(%arg0: i32, %arg1: i32) -> (i32, i32) {
    %c0_i32 = arith.constant 0 : i32
    %c0_i32_0 = arith.constant 0 : i32
    %c0_i32_1 = arith.constant 0 : i32
    return %c0_i32, %c0_i32_0 : i32, i32
  }
  func.func @transform_22(%arg0: i32, %arg1: i32) -> (i32, i32) {
    %c0_i32 = arith.constant 0 : i32
    %c0_i32_0 = arith.constant 0 : i32
    %c0_i32_1 = arith.constant 0 : i32
    return %c0_i32, %c0_i32_0 : i32, i32
  }
  func.func @transform_23(%arg0: i32, %arg1: i32) -> (i32, i32, i32) {
    %c0_i32 = arith.constant 0 : i32
    %c0_i32_0 = arith.constant 0 : i32
    return %arg0, %arg1, %c0_i32 : i32, i32, i32
  }
}

</mosaic_0001>

<llo_original>
// kernel: tpu_custom_call.1
$region0: #{tpu_custom_call.1}
  #allocation0 [shape = 'u32[]', space=smem, size = 0x4, offset = 0x4, fixed_abs, tag = 'smem constant byte address 0x4 - core index']
  #allocation1 [shape = 'u32[144,128]{1,0:T(1,128)}', space=vmem, size = 0x12000, scoped, tag = 'internal scratch']
  %s0 = inlined_call_operand.hbm [shape: f32[2,8,128], index: 0, kind: input, shape index: {}]
  %s1 = inlined_call_operand.hbm [shape: f32[2,8,128], index: 1, kind: input, shape index: {}]
  %s2 = inlined_call_operand.hbm [shape: f32[2,8,128], index: 2, kind: input, shape index: {}]
  %s3 = inlined_call_operand.hbm [shape: bf16[2,8,8], index: 3, kind: input, shape index: {}]
  %s4 = inlined_call_operand.hbm [shape: bf16[2,8,8], index: 4, kind: input, shape index: {}]
  %s5 = inlined_call_operand.hbm [shape: bf16[128,128], index: 5, kind: input, shape index: {}]
  %s6 = inlined_call_operand.hbm [shape: f32[1,128], index: 6, kind: input, shape index: {}]
  %s7 = inlined_call_operand.hbm [shape: bf16[128,256], index: 7, kind: input, shape index: {}]
  %s8 = inlined_call_operand.hbm [shape: f32[1,256], index: 8, kind: input, shape index: {}]
  %s9 = inlined_call_operand.hbm [shape: bf16[32,128], index: 9, kind: input, shape index: {}]
  %s10 = inlined_call_operand.hbm [shape: f32[1,128], index: 10, kind: input, shape index: {}]
  %s11 = inlined_call_operand.hbm [shape: bf16[128,128], index: 11, kind: input, shape index: {}]
  %s12 = inlined_call_operand.hbm [shape: f32[1,128], index: 12, kind: input, shape index: {}]
  %s13 = inlined_call_operand.hbm [shape: bf16[128,256], index: 13, kind: input, shape index: {}]
  %s14 = inlined_call_operand.hbm [shape: f32[1,256], index: 14, kind: input, shape index: {}]
  %s15 = inlined_call_operand.hbm [shape: bf16[32,128], index: 15, kind: input, shape index: {}]
  %s16 = inlined_call_operand.hbm [shape: f32[1,128], index: 16, kind: input, shape index: {}]
  %s17 = inlined_call_operand.hbm [shape: f32[1,128], index: 17, kind: input, shape index: {}]
  %s18 = inlined_call_operand.hbm [shape: f32[1,128], index: 18, kind: input, shape index: {}]
  %s19 = inlined_call_operand.hbm [shape: bf16[128,128], index: 19, kind: input, shape index: {}]
  %s20 = inlined_call_operand.hbm [shape: f32[1,128], index: 20, kind: input, shape index: {}]
  %s21 = inlined_call_operand.hbm [shape: bf16[128,128], index: 21, kind: input, shape index: {}]
  %s22 = inlined_call_operand.hbm [shape: f32[1,128], index: 22, kind: input, shape index: {}]
  %s23 = inlined_call_operand.hbm [shape: f32[2,8,128], index: 23, kind: output, shape index: {}]
  %s24 = sld [smem:[#allocation0]]
  $region217: #{tpu_custom_call.1} parent=0
    _
  %s26 = ssub.s32 1, %s24
  %s27 = scalar_select 0, %s26, %s24
  $region1: #{tpu_custom_call.1} parent=0
    #allocation2 [shape = 'u8[8192]{0}', space=vmem, size = 0x2000, scoped, tag = 'input window, operand 0']
    #allocation3 [shape = 's32[2]{0}', space=sflag, size = 0x8, scoped, tag = 'scoped memory for tpu_custom_call.1']
    #allocation4 [shape = 's32[2]{0}', space=sflag, size = 0x8, scoped, tag = 'scoped memory for tpu_custom_call.1']
    #allocation5 [shape = 'u8[8192]{0}', space=vmem, size = 0x2000, scoped, tag = 'input window, operand 1']
    #allocation6 [shape = 's32[2]{0}', space=sflag, size = 0x8, scoped, tag = 'scoped memory for tpu_custom_call.1']
    #allocation7 [shape = 'u8[8192]{0}', space=vmem, size = 0x2000, scoped, tag = 'input window, operand 2']
    #allocation8 [shape = 'u8[4096]{0}', space=vmem, size = 0x1000, scoped, tag = 'input window, operand 3']
    #allocation9 [shape = 's32[2]{0}', space=sflag, size = 0x8, scoped, tag = 'scoped memory for tpu_custom_call.1']
    #allocation10 [shape = 'u8[4096]{0}', space=vmem, size = 0x1000, scoped, tag = 'input window, operand 4']
    #allocation11 [shape = 'u8[32768]{0}', space=vmem, size = 0x8000, scoped, tag = 'input window, operand 5, single buffered']
    #allocation12 [shape = 's32[1]{0}', space=sflag, size = 0x4, scoped, tag = 'scoped memory for tpu_custom_call.1']
    #allocation13 [shape = 'u8[512]{0}', space=vmem, size = 0x400, scoped, tag = 'input window, operand 6, single buffered']
    #allocation14 [shape = 'u8[65536]{0}', space=vmem, size = 0x10000, scoped, tag = 'input window, operand 7, single buffered']
    #allocation15 [shape = 's32[1]{0}', space=sflag, size = 0x4, scoped, tag = 'scoped memory for tpu_custom_call.1']
    #allocation16 [shape = 'u8[1024]{0}', space=vmem, size = 0x400, scoped, tag = 'input window, operand 8, single buffered']
    #allocation17 [shape = 'u8[8192]{0}', space=vmem, size = 0x2000, scoped, tag = 'input window, operand 9, single buffered']
    #allocation18 [shape = 's32[1]{0}', space=sflag, size = 0x4, scoped, tag = 'scoped memory for tpu_custom_call.1']
    #allocation19 [shape = 'u8[512]{0}', space=vmem, size = 0x400, scoped, tag = 'input window, operand 10, single buffered']
    #allocation20 [shape = 'u8[32768]{0}', space=vmem, size = 0x8000, scoped, tag = 'input window, operand 11, single buffered']
    #allocation21 [shape = 's32[1]{0}', space=sflag, size = 0x4, scoped, tag = 'scoped memory for tpu_custom_call.1']
    #allocation22 [shape = 'u8[512]{0}', space=vmem, size = 0x400, scoped, tag = 'input window, operand 12, single buffered']
    #allocation23 [shape = 'u8[65536]{0}', space=vmem, size = 0x10000, scoped, tag = 'input window, operand 13, single buffered']
    #allocation24 [shape = 's32[1]{0}', space=sflag, size = 0x4, scoped, tag = 'scoped memory for tpu_custom_call.1']
    #allocation25 [shape = 'u8[1024]{0}', space=vmem, size = 0x400, scoped, tag = 'input window, operand 14, single buffered']
    #allocation26 [shape = 'u8[8192]{0}', space=vmem, size = 0x2000, scoped, tag = 'input window, operand 15, single buffered']
    #allocation27 [shape = 's32[1]{0}', space=sflag, size = 0x4, scoped, tag = 'scoped memory for tpu_custom_call.1']
    #allocation28 [shape = 'u8[512]{0}', space=vmem, size = 0x400, scoped, tag = 'input window, operand 16, single buffered']
    #allocation29 [shape = 'u8[512]{0}', space=vmem, size = 0x400, scoped, tag = 'input window, operand 17, single buffered']
    #allocation30 [shape = 's32[1]{0}', space=sflag, size = 0x4, scoped, tag = 'scoped memory for tpu_custom_call.1']
    #allocation31 [shape = 'u8[512]{0}', space=vmem, size = 0x400, scoped, tag = 'input window, operand 18, single buffered']
    #allocation32 [shape = 'u8[32768]{0}', space=vmem, size = 0x8000, scoped, tag = 'input window, operand 19, single buffered']
    #allocation33 [shape = 's32[1]{0}', space=sflag, size = 0x4, scoped, tag = 'scoped memory for tpu_custom_call.1']
    #allocation34 [shape = 'u8[512]{0}', space=vmem, size = 0x400, scoped, tag = 'input window, operand 20, single buffered']
    #allocation35 [shape = 'u8[32768]{0}', space=vmem, size = 0x8000, scoped, tag = 'input window, operand 21, single buffered']
    #allocation36 [shape = 's32[1]{0}', space=sflag, size = 0x4, scoped, tag = 'scoped memory for tpu_custom_call.1']
    #allocation37 [shape = 'u8[512]{0}', space=vmem, size = 0x400, scoped, tag = 'input window, operand 22, single buffered']
    #allocation38 [shape = 'u8[8192]{0}', space=vmem, size = 0x2000, scoped, tag = 'output window, operand 0']
    %28 = vsyncpa [#allocation3], 0
    %s29 = scalar_lea.sflag [#allocation3], 1
    %30 = vsyncpa %s29, 0
    %31 = vsyncpa [#allocation6], 0
    %s32 = scalar_lea.sflag [#allocation6], 1
    %33 = vsyncpa %s32, 0
    %34 = vsyncpa [#allocation9], 0
    %s35 = scalar_lea.sflag [#allocation9], 1
    %36 = vsyncpa %s35, 0
    %37 = vsyncpa [#allocation12], 0
    %38 = vsyncpa [#allocation15], 0
    %39 = vsyncpa [#allocation18], 0
    %40 = vsyncpa [#allocation21], 0
    %41 = vsyncpa [#allocation24], 0
    %42 = vsyncpa [#allocation27], 0
    %43 = vsyncpa [#allocation30], 0
    %44 = vsyncpa [#allocation33], 0
    %45 = vsyncpa [#allocation36], 0
    %46 = vsyncpa [#allocation4], 0
    %s47 = scalar_lea.sflag [#allocation4], 1
    %48 = vsyncpa %s47, 0
    loop: start=0, step=1, limit=4
    $region2: #{tpu_custom_call.1} parent=1 // loop_pre_header
      _
    $region3: #{tpu_custom_call.1} parent=1 // loop_header
      %s50 = sphi 0, %s54
      %p51 = scmp.ge.s32.totalorder %s50, 4
      %s57 = sphi 0, %s69
      %s58 = sphi 0, %s65
      %s59 = sphi 0, %s57
      %s60 = sphi 0, %s58
      %s61 = sphi 0, %s59
      %s62 = sphi 0, %s60
      %s72 = sphi 0, %s74
      %s75 = sphi 0, %s72
      %s76 = sphi 0, %s75
      %s92 = sphi 0, %s76
      %s98 = sphi 0, %s100
      %s101 = sphi 0, %s98
      %s102 = sphi 0, %s101
      %s118 = sphi 0, %s102
      %s126 = sphi 0, %s128
      %s129 = sphi 0, %s126
      %s130 = sphi 0, %s129
      %s146 = sphi 0, %s130
      %s154 = sphi 0, %s156
      %s157 = sphi 0, %s154
      %s158 = sphi 0, %s157
      %s174 = sphi 0, %s158
      %s182 = sphi 0, %s184
      %s185 = sphi 0, %s182
      %s186 = sphi 0, %s185
      %s202 = sphi 0, %s186
      %s206 = sphi 0, %s206
      %s208 = sphi 0, %s206
      %s209 = sphi 0, %s208
      %s223 = sphi 0, %s209
      %s227 = sphi 0, %s227
      %s229 = sphi 0, %s227
      %s230 = sphi 0, %s229
      %s244 = sphi 0, %s230
      %s248 = sphi 0, %s248
      %s250 = sphi 0, %s248
      %s251 = sphi 0, %s250
      %s265 = sphi 0, %s251
      %s269 = sphi 0, %s269
      %s271 = sphi 0, %s269
      %s272 = sphi 0, %s271
      %s286 = sphi 0, %s272
      %s290 = sphi 0, %s290
      %s292 = sphi 0, %s290
      %s293 = sphi 0, %s292
      %s307 = sphi 0, %s293
      %s311 = sphi 0, %s311
      %s313 = sphi 0, %s311
      %s314 = sphi 0, %s313
      %s328 = sphi 0, %s314
      %s332 = sphi 0, %s332
      %s334 = sphi 0, %s332
      %s335 = sphi 0, %s334
      %s349 = sphi 0, %s335
      %s353 = sphi 0, %s353
      %s355 = sphi 0, %s353
      %s356 = sphi 0, %s355
      %s370 = sphi 0, %s356
      %s374 = sphi 0, %s374
      %s376 = sphi 0, %s374
      %s377 = sphi 0, %s376
      %s391 = sphi 0, %s377
      %s395 = sphi 0, %s395
      %s397 = sphi 0, %s395
      %s398 = sphi 0, %s397
      %s412 = sphi 0, %s398
      %s416 = sphi 0, %s416
      %s418 = sphi 0, %s416
      %s419 = sphi 0, %s418
      %s433 = sphi 0, %s419
      %s437 = sphi 0, %s437
      %s439 = sphi 0, %s437
      %s440 = sphi 0, %s439
      %s454 = sphi 0, %s440
      %s458 = sphi 0, %s458
      %s460 = sphi 0, %s458
      %s461 = sphi 0, %s460
      %s475 = sphi 0, %s461
      %s479 = sphi 0, %s479
      %s481 = sphi 0, %s479
      %s482 = sphi 0, %s481
      %s496 = sphi 0, %s482
      %s500 = sphi 0, %s500
      %s502 = sphi 0, %s500
      %s503 = sphi 0, %s502
      %s517 = sphi 0, %s503
      %s521 = sphi 0, %s521
      %s523 = sphi 0, %s521
      %s524 = sphi 0, %s523
      %s538 = sphi 0, %s524
      %s542 = sphi 0, %s542
      %s544 = sphi 0, %s542
      %s545 = sphi 0, %s544
      %s559 = sphi 0, %s545
      %s563 = sphi 0, %s563
      %s565 = sphi 0, %s563
      %s566 = sphi 0, %s565
      %s580 = sphi 0, %s566
      %s588 = sphi 0, %s590
      %s591 = sphi 0, %s588
      %s592 = sphi 0, %s591
      %s608 = sphi 0, %s592
    $region4: #{tpu_custom_call.1} parent=1 // loop_header_branch
      %53 = sbr.rel (%p51) target = $region8
    $region5: #{tpu_custom_call.1} parent=1 // loop_body
      %s55 = ssub.s32 %s50, 1
      %s56 = ssub.s32 %s50, 2
      %s63 = sadd.s32 1, %s58
      %p64 = scmp.ge.s32.totalorder %s63, 1
      %s65 = scalar_select %p64, 0, %s63
      %s66 = sadd.s32 1, %s57
      %s67 = scalar_select %p64, %s66, %s57
      %p68 = scmp.ge.s32.totalorder %s67, 2
      %s69 = scalar_select %p68, 0, %s67
      %s70 = ssub.s32 %s57, %s69
      %p71 = scmp.eq.s32.totalorder %s70, 0
      %s73 = sadd.s32 %s72, 1
      %s74 = scalar_select %p71, %s72, %s73
      %p77 = pneg %p71
      %p78 = scmp.eq.s32.totalorder %s50, 1
      %p79 = por %p77, %p78
      %p80 = scmp.ne.s32.totalorder %s72, %s75
      %p81 = scmp.eq.s32.totalorder %s50, 0
      %p82 = por %p80, %p81
      %p83 = scmp.ne.s32.totalorder %s72, %s75
      %p84 = scmp.eq.s32.totalorder %s55, 1
      %p85 = por %p83, %p84
      %p86 = scmp.ne.s32.totalorder %s75, %s76
      %p87 = scmp.eq.s32.totalorder %s55, 0
      %p88 = por %p86, %p87
      %p89 = scmp.ne.s32.totalorder %s75, %s76
      %p90 = scmp.eq.s32.totalorder %s56, 1
      %p91 = por %p89, %p90
      %p93 = scmp.ne.s32.totalorder %s76, %s92
      %p94 = scmp.eq.s32.totalorder %s56, 0
      %p95 = por %p93, %p94
      %s96 = ssub.s32 %s57, %s69
      %p97 = scmp.eq.s32.totalorder %s96, 0
      %s99 = sadd.s32 %s98, 1
      %s100 = scalar_select %p97, %s98, %s99
      %p103 = pneg %p97
      %p104 = scmp.eq.s32.totalorder %s50, 1
      %p105 = por %p103, %p104
      %p106 = scmp.ne.s32.totalorder %s98, %s101
      %p107 = scmp.eq.s32.totalorder %s50, 0
      %p108 = por %p106, %p107
      %p109 = scmp.ne.s32.totalorder %s98, %s101
      %p110 = scmp.eq.s32.totalorder %s55, 1
      %p111 = por %p109, %p110
      %p112 = scmp.ne.s32.totalorder %s101, %s102
      %p113 = scmp.eq.s32.totalorder %s55, 0
      %p114 = por %p112, %p113
      %p115 = scmp.ne.s32.totalorder %s101, %s102
      %p116 = scmp.eq.s32.totalorder %s56, 1
      %p117 = por %p115, %p116
      %p119 = scmp.ne.s32.totalorder %s102, %s118
      %p120 = scmp.eq.s32.totalorder %s56, 0
      %p121 = por %p119, %p120
      %s122 = ssub.s32 %s57, %s69
      %s123 = ssub.s32 %s58, %s65
      %s124 = sor.u32 %s122, %s123
      %p125 = scmp.eq.s32.totalorder %s124, 0
      %s127 = sadd.s32 %s126, 1
      %s128 = scalar_select %p125, %s126, %s127
      %p131 = pneg %p125
      %p132 = scmp.eq.s32.totalorder %s50, 1
      %p133 = por %p131, %p132
      %p134 = scmp.ne.s32.totalorder %s126, %s129
      %p135 = scmp.eq.s32.totalorder %s50, 0
      %p136 = por %p134, %p135
      %p137 = scmp.ne.s32.totalorder %s126, %s129
      %p138 = scmp.eq.s32.totalorder %s55, 1
      %p139 = por %p137, %p138
      %p140 = scmp.ne.s32.totalorder %s129, %s130
      %p141 = scmp.eq.s32.totalorder %s55, 0
      %p142 = por %p140, %p141
      %p143 = scmp.ne.s32.totalorder %s129, %s130
      %p144 = scmp.eq.s32.totalorder %s56, 1
      %p145 = por %p143, %p144
      %p147 = scmp.ne.s32.totalorder %s130, %s146
      %p148 = scmp.eq.s32.totalorder %s56, 0
      %p149 = por %p147, %p148
      %s150 = ssub.s32 %s57, %s69
      %s151 = ssub.s32 %s58, %s65
      %s152 = sor.u32 %s150, %s151
      %p153 = scmp.eq.s32.totalorder %s152, 0
      %s155 = sadd.s32 %s154, 1
      %s156 = scalar_select %p153, %s154, %s155
      %p159 = pneg %p153
      %p160 = scmp.eq.s32.totalorder %s50, 1
      %p161 = por %p159, %p160
      %p162 = scmp.ne.s32.totalorder %s154, %s157
      %p163 = scmp.eq.s32.totalorder %s50, 0
      %p164 = por %p162, %p163
      %p165 = scmp.ne.s32.totalorder %s154, %s157
      %p166 = scmp.eq.s32.totalorder %s55, 1
      %p167 = por %p165, %p166
      %p168 = scmp.ne.s32.totalorder %s157, %s158
      %p169 = scmp.eq.s32.totalorder %s55, 0
      %p170 = por %p168, %p169
      %p171 = scmp.ne.s32.totalorder %s157, %s158
      %p172 = scmp.eq.s32.totalorder %s56, 1
      %p173 = por %p171, %p172
      %p175 = scmp.ne.s32.totalorder %s158, %s174
      %p176 = scmp.eq.s32.totalorder %s56, 0
      %p177 = por %p175, %p176
      %s178 = ssub.s32 %s57, %s69
      %s179 = ssub.s32 %s58, %s65
      %s180 = sor.u32 %s178, %s179
      %p181 = scmp.eq.s32.totalorder %s180, 0
      %s183 = sadd.s32 %s182, 1
      %s184 = scalar_select %p181, %s182, %s183
      %p187 = pneg %p181
      %p188 = scmp.eq.s32.totalorder %s50, 1
      %p189 = por %p187, %p188
      %p190 = scmp.ne.s32.totalorder %s182, %s185
      %p191 = scmp.eq.s32.totalorder %s50, 0
      %p192 = por %p190, %p191
      %p193 = scmp.ne.s32.totalorder %s182, %s185
      %p194 = scmp.eq.s32.totalorder %s55, 1
      %p195 = por %p193, %p194
      %p196 = scmp.ne.s32.totalorder %s185, %s186
      %p197 = scmp.eq.s32.totalorder %s55, 0
      %p198 = por %p196, %p197
      %p199 = scmp.ne.s32.totalorder %s185, %s186
      %p200 = scmp.eq.s32.totalorder %s56, 1
      %p201 = por %p199, %p200
      %p203 = scmp.ne.s32.totalorder %s186, %s202
      %p204 = scmp.eq.s32.totalorder %s56, 0
      %p205 = por %p203, %p204
      %s207 = sadd.s32 %s206, 1
      %p210 = scmp.eq.s32.totalorder %s50, 1
      %p211 = scmp.ne.s32.totalorder %s206, %s208
      %p212 = scmp.eq.s32.totalorder %s50, 0
      %p213 = por %p211, %p212
      %p214 = scmp.ne.s32.totalorder %s206, %s208
      %p215 = scmp.eq.s32.totalorder %s55, 1
      %p216 = por %p214, %p215
      %p217 = scmp.ne.s32.totalorder %s208, %s209
      %p218 = scmp.eq.s32.totalorder %s55, 0
      %p219 = por %p217, %p218
      %p220 = scmp.ne.s32.totalorder %s208, %s209
      %p221 = scmp.eq.s32.totalorder %s56, 1
      %p222 = por %p220, %p221
      %p224 = scmp.ne.s32.totalorder %s209, %s223
      %p225 = scmp.eq.s32.totalorder %s56, 0
      %p226 = por %p224, %p225
      %s228 = sadd.s32 %s227, 1
      %p231 = scmp.eq.s32.totalorder %s50, 1
      %p232 = scmp.ne.s32.totalorder %s227, %s229
      %p233 = scmp.eq.s32.totalorder %s50, 0
      %p234 = por %p232, %p233
      %p235 = scmp.ne.s32.totalorder %s227, %s229
      %p236 = scmp.eq.s32.totalorder %s55, 1
      %p237 = por %p235, %p236
      %p238 = scmp.ne.s32.totalorder %s229, %s230
      %p239 = scmp.eq.s32.totalorder %s55, 0
      %p240 = por %p238, %p239
      %p241 = scmp.ne.s32.totalorder %s229, %s230
      %p242 = scmp.eq.s32.totalorder %s56, 1
      %p243 = por %p241, %p242
      %p245 = scmp.ne.s32.totalorder %s230, %s244
      %p246 = scmp.eq.s32.totalorder %s56, 0
      %p247 = por %p245, %p246
      %s249 = sadd.s32 %s248, 1
      %p252 = scmp.eq.s32.totalorder %s50, 1
      %p253 = scmp.ne.s32.totalorder %s248, %s250
      %p254 = scmp.eq.s32.totalorder %s50, 0
      %p255 = por %p253, %p254
      %p256 = scmp.ne.s32.totalorder %s248, %s250
      %p257 = scmp.eq.s32.totalorder %s55, 1
      %p258 = por %p256, %p257
      %p259 = scmp.ne.s32.totalorder %s250, %s251
      %p260 = scmp.eq.s32.totalorder %s55, 0
      %p261 = por %p259, %p260
      %p262 = scmp.ne.s32.totalorder %s250, %s251
      %p263 = scmp.eq.s32.totalorder %s56, 1
      %p264 = por %p262, %p263
      %p266 = scmp.ne.s32.totalorder %s251, %s265
      %p267 = scmp.eq.s32.totalorder %s56, 0
      %p268 = por %p266, %p267
      %s270 = sadd.s32 %s269, 1
      %p273 = scmp.eq.s32.totalorder %s50, 1
      %p274 = scmp.ne.s32.totalorder %s269, %s271
      %p275 = scmp.eq.s32.totalorder %s50, 0
      %p276 = por %p274, %p275
      %p277 = scmp.ne.s32.totalorder %s269, %s271
      %p278 = scmp.eq.s32.totalorder %s55, 1
      %p279 = por %p277, %p278
      %p280 = scmp.ne.s32.totalorder %s271, %s272
      %p281 = scmp.eq.s32.totalorder %s55, 0
      %p282 = por %p280, %p281
      %p283 = scmp.ne.s32.totalorder %s271, %s272
      %p284 = scmp.eq.s32.totalorder %s56, 1
      %p285 = por %p283, %p284
      %p287 = scmp.ne.s32.totalorder %s272, %s286
      %p288 = scmp.eq.s32.totalorder %s56, 0
      %p289 = por %p287, %p288
      %s291 = sadd.s32 %s290, 1
      %p294 = scmp.eq.s32.totalorder %s50, 1
      %p295 = scmp.ne.s32.totalorder %s290, %s292
      %p296 = scmp.eq.s32.totalorder %s50, 0
      %p297 = por %p295, %p296
      %p298 = scmp.ne.s32.totalorder %s290, %s292
      %p299 = scmp.eq.s32.totalorder %s55, 1
      %p300 = por %p298, %p299
      %p301 = scmp.ne.s32.totalorder %s292, %s293
      %p302 = scmp.eq.s32.totalorder %s55, 0
      %p303 = por %p301, %p302
      %p304 = scmp.ne.s32.totalorder %s292, %s293
      %p305 = scmp.eq.s32.totalorder %s56, 1
      %p306 = por %p304, %p305
      %p308 = scmp.ne.s32.totalorder %s293, %s307
      %p309 = scmp.eq.s32.totalorder %s56, 0
      %p310 = por %p308, %p309
      %s312 = sadd.s32 %s311, 1
      %p315 = scmp.eq.s32.totalorder %s50, 1
      %p316 = scmp.ne.s32.totalorder %s311, %s313
      %p317 = scmp.eq.s32.totalorder %s50, 0
      %p318 = por %p316, %p317
      %p319 = scmp.ne.s32.totalorder %s311, %s313
      %p320 = scmp.eq.s32.totalorder %s55, 1
      %p321 = por %p319, %p320
      %p322 = scmp.ne.s32.totalorder %s313, %s314
      %p323 = scmp.eq.s32.totalorder %s55, 0
      %p324 = por %p322, %p323
      %p325 = scmp.ne.s32.totalorder %s313, %s314
      %p326 = scmp.eq.s32.totalorder %s56, 1
      %p327 = por %p325, %p326
      %p329 = scmp.ne.s32.totalorder %s314, %s328
      %p330 = scmp.eq.s32.totalorder %s56, 0
      %p331 = por %p329, %p330
      %s333 = sadd.s32 %s332, 1
      %p336 = scmp.eq.s32.totalorder %s50, 1
      %p337 = scmp.ne.s32.totalorder %s332, %s334
      %p338 = scmp.eq.s32.totalorder %s50, 0
      %p339 = por %p337, %p338
      %p340 = scmp.ne.s32.totalorder %s332, %s334
      %p341 = scmp.eq.s32.totalorder %s55, 1
      %p342 = por %p340, %p341
      %p343 = scmp.ne.s32.totalorder %s334, %s335
      %p344 = scmp.eq.s32.totalorder %s55, 0
      %p345 = por %p343, %p344
      %p346 = scmp.ne.s32.totalorder %s334, %s335
      %p347 = scmp.eq.s32.totalorder %s56, 1
      %p348 = por %p346, %p347
      %p350 = scmp.ne.s32.totalorder %s335, %s349
      %p351 = scmp.eq.s32.totalorder %s56, 0
      %p352 = por %p350, %p351
      %s354 = sadd.s32 %s353, 1
      %p357 = scmp.eq.s32.totalorder %s50, 1
      %p358 = scmp.ne.s32.totalorder %s353, %s355
      %p359 = scmp.eq.s32.totalorder %s50, 0
      %p360 = por %p358, %p359
      %p361 = scmp.ne.s32.totalorder %s353, %s355
      %p362 = scmp.eq.s32.totalorder %s55, 1
      %p363 = por %p361, %p362
      %p364 = scmp.ne.s32.totalorder %s355, %s356
      %p365 = scmp.eq.s32.totalorder %s55, 0
      %p366 = por %p364, %p365
      %p367 = scmp.ne.s32.totalorder %s355, %s356
      %p368 = scmp.eq.s32.totalorder %s56, 1
      %p369 = por %p367, %p368
      %p371 = scmp.ne.s32.totalorder %s356, %s370
      %p372 = scmp.eq.s32.totalorder %s56, 0
      %p373 = por %p371, %p372
      %s375 = sadd.s32 %s374, 1
      %p378 = scmp.eq.s32.totalorder %s50, 1
      %p379 = scmp.ne.s32.totalorder %s374, %s376
      %p380 = scmp.eq.s32.totalorder %s50, 0
      %p381 = por %p379, %p380
      %p382 = scmp.ne.s32.totalorder %s374, %s376
      %p383 = scmp.eq.s32.totalorder %s55, 1
      %p384 = por %p382, %p383
      %p385 = scmp.ne.s32.totalorder %s376, %s377
      %p386 = scmp.eq.s32.totalorder %s55, 0
      %p387 = por %p385, %p386
      %p388 = scmp.ne.s32.totalorder %s376, %s377
      %p389 = scmp.eq.s32.totalorder %s56, 1
      %p390 = por %p388, %p389
      %p392 = scmp.ne.s32.totalorder %s377, %s391
      %p393 = scmp.eq.s32.totalorder %s56, 0
      %p394 = por %p392, %p393
      %s396 = sadd.s32 %s395, 1
      %p399 = scmp.eq.s32.totalorder %s50, 1
      %p400 = scmp.ne.s32.totalorder %s395, %s397
      %p401 = scmp.eq.s32.totalorder %s50, 0
      %p402 = por %p400, %p401
      %p403 = scmp.ne.s32.totalorder %s395, %s397
      %p404 = scmp.eq.s32.totalorder %s55, 1
      %p405 = por %p403, %p404
      %p406 = scmp.ne.s32.totalorder %s397, %s398
      %p407 = scmp.eq.s32.totalorder %s55, 0
      %p408 = por %p406, %p407
      %p409 = scmp.ne.s32.totalorder %s397, %s398
      %p410 = scmp.eq.s32.totalorder %s56, 1
      %p411 = por %p409, %p410
      %p413 = scmp.ne.s32.totalorder %s398, %s412
      %p414 = scmp.eq.s32.totalorder %s56, 0
      %p415 = por %p413, %p414
      %s417 = sadd.s32 %s416, 1
      %p420 = scmp.eq.s32.totalorder %s50, 1
      %p421 = scmp.ne.s32.totalorder %s416, %s418
      %p422 = scmp.eq.s32.totalorder %s50, 0
      %p423 = por %p421, %p422
      %p424 = scmp.ne.s32.totalorder %s416, %s418
      %p425 = scmp.eq.s32.totalorder %s55, 1
      %p426 = por %p424, %p425
      %p427 = scmp.ne.s32.totalorder %s418, %s419
      %p428 = scmp.eq.s32.totalorder %s55, 0
      %p429 = por %p427, %p428
      %p430 = scmp.ne.s32.totalorder %s418, %s419
      %p431 = scmp.eq.s32.totalorder %s56, 1
      %p432 = por %p430, %p431
      %p434 = scmp.ne.s32.totalorder %s419, %s433
      %p435 = scmp.eq.s32.totalorder %s56, 0
      %p436 = por %p434, %p435
      %s438 = sadd.s32 %s437, 1
      %p441 = scmp.eq.s32.totalorder %s50, 1
      %p442 = scmp.ne.s32.totalorder %s437, %s439
      %p443 = scmp.eq.s32.totalorder %s50, 0
      %p444 = por %p442, %p443
      %p445 = scmp.ne.s32.totalorder %s437, %s439
      %p446 = scmp.eq.s32.totalorder %s55, 1
      %p447 = por %p445, %p446
      %p448 = scmp.ne.s32.totalorder %s439, %s440
      %p449 = scmp.eq.s32.totalorder %s55, 0
      %p450 = por %p448, %p449
      %p451 = scmp.ne.s32.totalorder %s439, %s440
      %p452 = scmp.eq.s32.totalorder %s56, 1
      %p453 = por %p451, %p452
      %p455 = scmp.ne.s32.totalorder %s440, %s454
      %p456 = scmp.eq.s32.totalorder %s56, 0
      %p457 = por %p455, %p456
      %s459 = sadd.s32 %s458, 1
      %p462 = scmp.eq.s32.totalorder %s50, 1
      %p463 = scmp.ne.s32.totalorder %s458, %s460
      %p464 = scmp.eq.s32.totalorder %s50, 0
      %p465 = por %p463, %p464
      %p466 = scmp.ne.s32.totalorder %s458, %s460
      %p467 = scmp.eq.s32.totalorder %s55, 1
      %p468 = por %p466, %p467
      %p469 = scmp.ne.s32.totalorder %s460, %s461
      %p470 = scmp.eq.s32.totalorder %s55, 0
      %p471 = por %p469, %p470
      %p472 = scmp.ne.s32.totalorder %s460, %s461
      %p473 = scmp.eq.s32.totalorder %s56, 1
      %p474 = por %p472, %p473
      %p476 = scmp.ne.s32.totalorder %s461, %s475
      %p477 = scmp.eq.s32.totalorder %s56, 0
      %p478 = por %p476, %p477
      %s480 = sadd.s32 %s479, 1
      %p483 = scmp.eq.s32.totalorder %s50, 1
      %p484 = scmp.ne.s32.totalorder %s479, %s481
      %p485 = scmp.eq.s32.totalorder %s50, 0
      %p486 = por %p484, %p485
      %p487 = scmp.ne.s32.totalorder %s479, %s481
      %p488 = scmp.eq.s32.totalorder %s55, 1
      %p489 = por %p487, %p488
      %p490 = scmp.ne.s32.totalorder %s481, %s482
      %p491 = scmp.eq.s32.totalorder %s55, 0
      %p492 = por %p490, %p491
      %p493 = scmp.ne.s32.totalorder %s481, %s482
      %p494 = scmp.eq.s32.totalorder %s56, 1
      %p495 = por %p493, %p494
      %p497 = scmp.ne.s32.totalorder %s482, %s496
      %p498 = scmp.eq.s32.totalorder %s56, 0
      %p499 = por %p497, %p498
      %s501 = sadd.s32 %s500, 1
      %p504 = scmp.eq.s32.totalorder %s50, 1
      %p505 = scmp.ne.s32.totalorder %s500, %s502
      %p506 = scmp.eq.s32.totalorder %s50, 0
      %p507 = por %p505, %p506
      %p508 = scmp.ne.s32.totalorder %s500, %s502
      %p509 = scmp.eq.s32.totalorder %s55, 1
      %p510 = por %p508, %p509
      %p511 = scmp.ne.s32.totalorder %s502, %s503
      %p512 = scmp.eq.s32.totalorder %s55, 0
      %p513 = por %p511, %p512
      %p514 = scmp.ne.s32.totalorder %s502, %s503
      %p515 = scmp.eq.s32.totalorder %s56, 1
      %p516 = por %p514, %p515
      %p518 = scmp.ne.s32.totalorder %s503, %s517
      %p519 = scmp.eq.s32.totalorder %s56, 0
      %p520 = por %p518, %p519
      %s522 = sadd.s32 %s521, 1
      %p525 = scmp.eq.s32.totalorder %s50, 1
      %p526 = scmp.ne.s32.totalorder %s521, %s523
      %p527 = scmp.eq.s32.totalorder %s50, 0
      %p528 = por %p526, %p527
      %p529 = scmp.ne.s32.totalorder %s521, %s523
      %p530 = scmp.eq.s32.totalorder %s55, 1
      %p531 = por %p529, %p530
      %p532 = scmp.ne.s32.totalorder %s523, %s524
      %p533 = scmp.eq.s32.totalorder %s55, 0
      %p534 = por %p532, %p533
      %p535 = scmp.ne.s32.totalorder %s523, %s524
      %p536 = scmp.eq.s32.totalorder %s56, 1
      %p537 = por %p535, %p536
      %p539 = scmp.ne.s32.totalorder %s524, %s538
      %p540 = scmp.eq.s32.totalorder %s56, 0
      %p541 = por %p539, %p540
      %s543 = sadd.s32 %s542, 1
      %p546 = scmp.eq.s32.totalorder %s50, 1
      %p547 = scmp.ne.s32.totalorder %s542, %s544
      %p548 = scmp.eq.s32.totalorder %s50, 0
      %p549 = por %p547, %p548
      %p550 = scmp.ne.s32.totalorder %s542, %s544
      %p551 = scmp.eq.s32.totalorder %s55, 1
      %p552 = por %p550, %p551
      %p553 = scmp.ne.s32.totalorder %s544, %s545
      %p554 = scmp.eq.s32.totalorder %s55, 0
      %p555 = por %p553, %p554
      %p556 = scmp.ne.s32.totalorder %s544, %s545
      %p557 = scmp.eq.s32.totalorder %s56, 1
      %p558 = por %p556, %p557
      %p560 = scmp.ne.s32.totalorder %s545, %s559
      %p561 = scmp.eq.s32.totalorder %s56, 0
      %p562 = por %p560, %p561
      %s564 = sadd.s32 %s563, 1
      %p567 = scmp.eq.s32.totalorder %s50, 1
      %p568 = scmp.ne.s32.totalorder %s563, %s565
      %p569 = scmp.eq.s32.totalorder %s50, 0
      %p570 = por %p568, %p569
      %p571 = scmp.ne.s32.totalorder %s563, %s565
      %p572 = scmp.eq.s32.totalorder %s55, 1
      %p573 = por %p571, %p572
      %p574 = scmp.ne.s32.totalorder %s565, %s566
      %p575 = scmp.eq.s32.totalorder %s55, 0
      %p576 = por %p574, %p575
      %p577 = scmp.ne.s32.totalorder %s565, %s566
      %p578 = scmp.eq.s32.totalorder %s56, 1
      %p579 = por %p577, %p578
      %p581 = scmp.ne.s32.totalorder %s566, %s580
      %p582 = scmp.eq.s32.totalorder %s56, 0
      %p583 = por %p581, %p582
      %s584 = ssub.s32 %s57, %s69
      %s585 = ssub.s32 %s58, %s65
      %s586 = sor.u32 %s584, %s585
      %p587 = scmp.eq.s32.totalorder %s586, 0
      %s589 = sadd.s32 %s588, 1
      %s590 = scalar_select %p587, %s588, %s589
      %p593 = pneg %p587
      %p594 = scmp.eq.s32.totalorder %s50, 1
      %p595 = por %p593, %p594
      %p596 = scmp.ne.s32.totalorder %s588, %s591
      %p597 = scmp.eq.s32.totalorder %s50, 0
      %p598 = por %p596, %p597
      %p599 = scmp.ne.s32.totalorder %s588, %s591
      %p600 = scmp.eq.s32.totalorder %s55, 1
      %p601 = por %p599, %p600
      %p602 = scmp.ne.s32.totalorder %s591, %s592
      %p603 = scmp.eq.s32.totalorder %s55, 0
      %p604 = por %p602, %p603
      %p605 = scmp.ne.s32.totalorder %s591, %s592
      %p606 = scmp.eq.s32.totalorder %s56, 1
      %p607 = por %p605, %p606
      %p609 = scmp.ne.s32.totalorder %s592, %s608
      %p610 = scmp.eq.s32.totalorder %s56, 0
      %p611 = por %p609, %p610
      %p612 = scmp.le.s32.totalorder 1, %s50
      %p613 = scmp.lt.s32.totalorder %s50, 3
      %p614 = pnand %p612, %p613
      %p615 = pneg %p614
      // Predicated region
      $region9: #{tpu_custom_call.1} parent=5 // pred_check
        _
      $region10: #{tpu_custom_call.1} parent=5 // pred_check_branch
        %617 = sbr.rel (%p614) target = $region12
      $region11: #{tpu_custom_call.1} parent=5 // pred_region
        %s618 = ssub.s32 %s50, 1
        // Predicated region
        $region13: #{tpu_custom_call.1} parent=11 // pred_check
          %p619 = pneg %p219
        $region14: #{tpu_custom_call.1} parent=11 // pred_check_branch
          %621 = sbr.rel (%p619) target = $region16
        $region15: #{tpu_custom_call.1} parent=11 // pred_region
          %s623 = ssub.s32 1024, 1024
          %624 = vsyncadd [#allocation12], %s623
          %s625 = sshll.u32 [#allocation11], 4
          %s626 = int_to_ptr.vmem [resolvable:$true] %s625
          %631 = dma.hbm_to_vmem [thread:$0]  %s5, 1024, %s626, [#allocation12], 64, 64, 4
        $region16: #{tpu_custom_call.1} parent=11 // pred_fallthru
          _
        // Predicated region
        $region17: #{tpu_custom_call.1} parent=11 // pred_check
          %p632 = pneg %p240
        $region18: #{tpu_custom_call.1} parent=11 // pred_check_branch
          %634 = sbr.rel (%p632) target = $region20
        $region19: #{tpu_custom_call.1} parent=11 // pred_region
          %s636 = ssub.s32 16, 16
          %637 = vsyncadd [#allocation12], %s636
          %s639 = sshll.u32 [#allocation13], 4
          %s640 = int_to_ptr.vmem [resolvable:$true] %s639
          %642 = dma.hbm_to_vmem [thread:$0]  %s6, 16, %s640, [#allocation12]
        $region20: #{tpu_custom_call.1} parent=11 // pred_fallthru
          _
        // Predicated region
        $region21: #{tpu_custom_call.1} parent=11 // pred_check
          %p643 = pneg %p261
        $region22: #{tpu_custom_call.1} parent=11 // pred_check_branch
          %645 = sbr.rel (%p643) target = $region24
        $region23: #{tpu_custom_call.1} parent=11 // pred_region
          %s647 = ssub.s32 2048, 2048
          %648 = vsyncadd [#allocation15], %s647
          %s649 = sshll.u32 [#allocation14], 4
          %s650 = int_to_ptr.vmem [resolvable:$true] %s649
          %655 = dma.hbm_to_vmem [thread:$0]  %s7, 2048, %s650, [#allocation15], 128, 128, 8
        $region24: #{tpu_custom_call.1} parent=11 // pred_fallthru
          _
        // Predicated region
        $region25: #{tpu_custom_call.1} parent=11 // pred_check
          %p656 = pneg %p282
        $region26: #{tpu_custom_call.1} parent=11 // pred_check_branch
          %658 = sbr.rel (%p656) target = $region28
        $region27: #{tpu_custom_call.1} parent=11 // pred_region
          %s660 = ssub.s32 32, 32
          %661 = vsyncadd [#allocation15], %s660
          %s663 = sshll.u32 [#allocation16], 4
          %s664 = int_to_ptr.vmem [resolvable:$true] %s663
          %666 = dma.hbm_to_vmem [thread:$0]  %s8, 32, %s664, [#allocation15]
        $region28: #{tpu_custom_call.1} parent=11 // pred_fallthru
          _
        // Predicated region
        $region29: #{tpu_custom_call.1} parent=11 // pred_check
          %p667 = pneg %p303
        $region30: #{tpu_custom_call.1} parent=11 // pred_check_branch
          %669 = sbr.rel (%p667) target = $region32
        $region31: #{tpu_custom_call.1} parent=11 // pred_region
          %s671 = ssub.s32 256, 256
          %672 = vsyncadd [#allocation18], %s671
          %s673 = sshll.u32 [#allocation17], 4
          %s674 = int_to_ptr.vmem [resolvable:$true] %s673
          %679 = dma.hbm_to_vmem [thread:$0]  %s9, 256, %s674, [#allocation18], 64, 64, 4
        $region32: #{tpu_custom_call.1} parent=11 // pred_fallthru
          _
        // Predicated region
        $region33: #{tpu_custom_call.1} parent=11 // pred_check
          %p680 = pneg %p324
        $region34: #{tpu_custom_call.1} parent=11 // pred_check_branch
          %682 = sbr.rel (%p680) target = $region36
        $region35: #{tpu_custom_call.1} parent=11 // pred_region
          %s684 = ssub.s32 16, 16
          %685 = vsyncadd [#allocation18], %s684
          %s687 = sshll.u32 [#allocation19], 4
          %s688 = int_to_ptr.vmem [resolvable:$true] %s687
          %690 = dma.hbm_to_vmem [thread:$0]  %s10, 16, %s688, [#allocation18]
        $region36: #{tpu_custom_call.1} parent=11 // pred_fallthru
          _
        // Predicated region
        $region37: #{tpu_custom_call.1} parent=11 // pred_check
          %p691 = pneg %p345
        $region38: #{tpu_custom_call.1} parent=11 // pred_check_branch
          %693 = sbr.rel (%p691) target = $region40
        $region39: #{tpu_custom_call.1} parent=11 // pred_region
          %s695 = ssub.s32 1024, 1024
          %696 = vsyncadd [#allocation21], %s695
          %s697 = sshll.u32 [#allocation20], 4
          %s698 = int_to_ptr.vmem [resolvable:$true] %s697
          %703 = dma.hbm_to_vmem [thread:$0]  %s11, 1024, %s698, [#allocation21], 64, 64, 4
        $region40: #{tpu_custom_call.1} parent=11 // pred_fallthru
          _
        // Predicated region
        $region41: #{tpu_custom_call.1} parent=11 // pred_check
          %p704 = pneg %p366
        $region42: #{tpu_custom_call.1} parent=11 // pred_check_branch
          %706 = sbr.rel (%p704) target = $region44
        $region43: #{tpu_custom_call.1} parent=11 // pred_region
          %s708 = ssub.s32 16, 16
          %709 = vsyncadd [#allocation21], %s708
          %s711 = sshll.u32 [#allocation22], 4
          %s712 = int_to_ptr.vmem [resolvable:$true] %s711
          %714 = dma.hbm_to_vmem [thread:$0]  %s12, 16, %s712, [#allocation21]
        $region44: #{tpu_custom_call.1} parent=11 // pred_fallthru
          _
        // Predicated region
        $region45: #{tpu_custom_call.1} parent=11 // pred_check
          %p715 = pneg %p387
        $region46: #{tpu_custom_call.1} parent=11 // pred_check_branch
          %717 = sbr.rel (%p715) target = $region48
        $region47: #{tpu_custom_call.1} parent=11 // pred_region
          %s719 = ssub.s32 2048, 2048
          %720 = vsyncadd [#allocation24], %s719
          %s721 = sshll.u32 [#allocation23], 4
          %s722 = int_to_ptr.vmem [resolvable:$true] %s721
          %727 = dma.hbm_to_vmem [thread:$0]  %s13, 2048, %s722, [#allocation24], 128, 128, 8
        $region48: #{tpu_custom_call.1} parent=11 // pred_fallthru
          _
        // Predicated region
        $region49: #{tpu_custom_call.1} parent=11 // pred_check
          %p728 = pneg %p408
        $region50: #{tpu_custom_call.1} parent=11 // pred_check_branch
          %730 = sbr.rel (%p728) target = $region52
        $region51: #{tpu_custom_call.1} parent=11 // pred_region
          %s732 = ssub.s32 32, 32
          %733 = vsyncadd [#allocation24], %s732
          %s735 = sshll.u32 [#allocation25], 4
          %s736 = int_to_ptr.vmem [resolvable:$true] %s735
          %738 = dma.hbm_to_vmem [thread:$0]  %s14, 32, %s736, [#allocation24]
        $region52: #{tpu_custom_call.1} parent=11 // pred_fallthru
          _
        // Predicated region
        $region53: #{tpu_custom_call.1} parent=11 // pred_check
          %p739 = pneg %p429
        $region54: #{tpu_custom_call.1} parent=11 // pred_check_branch
          %741 = sbr.rel (%p739) target = $region56
        $region55: #{tpu_custom_call.1} parent=11 // pred_region
          %s743 = ssub.s32 256, 256
          %744 = vsyncadd [#allocation27], %s743
          %s745 = sshll.u32 [#allocation26], 4
          %s746 = int_to_ptr.vmem [resolvable:$true] %s745
          %751 = dma.hbm_to_vmem [thread:$0]  %s15, 256, %s746, [#allocation27], 64, 64, 4
        $region56: #{tpu_custom_call.1} parent=11 // pred_fallthru
          _
        // Predicated region
        $region57: #{tpu_custom_call.1} parent=11 // pred_check
          %p752 = pneg %p450
        $region58: #{tpu_custom_call.1} parent=11 // pred_check_branch
          %754 = sbr.rel (%p752) target = $region60
        $region59: #{tpu_custom_call.1} parent=11 // pred_region
          %s756 = ssub.s32 16, 16
          %757 = vsyncadd [#allocation27], %s756
          %s759 = sshll.u32 [#allocation28], 4
          %s760 = int_to_ptr.vmem [resolvable:$true] %s759
          %762 = dma.hbm_to_vmem [thread:$0]  %s16, 16, %s760, [#allocation27]
        $region60: #{tpu_custom_call.1} parent=11 // pred_fallthru
          _
        // Predicated region
        $region61: #{tpu_custom_call.1} parent=11 // pred_check
          %p763 = pneg %p471
        $region62: #{tpu_custom_call.1} parent=11 // pred_check_branch
          %765 = sbr.rel (%p763) target = $region64
        $region63: #{tpu_custom_call.1} parent=11 // pred_region
          %s767 = ssub.s32 16, 16
          %768 = vsyncadd [#allocation30], %s767
          %s770 = sshll.u32 [#allocation29], 4
          %s771 = int_to_ptr.vmem [resolvable:$true] %s770
          %773 = dma.hbm_to_vmem [thread:$0]  %s17, 16, %s771, [#allocation30]
        $region64: #{tpu_custom_call.1} parent=11 // pred_fallthru
          _
        // Predicated region
        $region65: #{tpu_custom_call.1} parent=11 // pred_check
          %p774 = pneg %p492
        $region66: #{tpu_custom_call.1} parent=11 // pred_check_branch
          %776 = sbr.rel (%p774) target = $region68
        $region67: #{tpu_custom_call.1} parent=11 // pred_region
          %s778 = ssub.s32 16, 16
          %779 = vsyncadd [#allocation30], %s778
          %s781 = sshll.u32 [#allocation31], 4
          %s782 = int_to_ptr.vmem [resolvable:$true] %s781
          %784 = dma.hbm_to_vmem [thread:$0]  %s18, 16, %s782, [#allocation30]
        $region68: #{tpu_custom_call.1} parent=11 // pred_fallthru
          _
        // Predicated region
        $region69: #{tpu_custom_call.1} parent=11 // pred_check
          %p785 = pneg %p513
        $region70: #{tpu_custom_call.1} parent=11 // pred_check_branch
          %787 = sbr.rel (%p785) target = $region72
        $region71: #{tpu_custom_call.1} parent=11 // pred_region
          %s789 = ssub.s32 1024, 1024
          %790 = vsyncadd [#allocation33], %s789
          %s791 = sshll.u32 [#allocation32], 4
          %s792 = int_to_ptr.vmem [resolvable:$true] %s791
          %797 = dma.hbm_to_vmem [thread:$0]  %s19, 1024, %s792, [#allocation33], 64, 64, 4
        $region72: #{tpu_custom_call.1} parent=11 // pred_fallthru
          _
        // Predicated region
        $region73: #{tpu_custom_call.1} parent=11 // pred_check
          %p798 = pneg %p534
        $region74: #{tpu_custom_call.1} parent=11 // pred_check_branch
          %800 = sbr.rel (%p798) target = $region76
        $region75: #{tpu_custom_call.1} parent=11 // pred_region
          %s802 = ssub.s32 16, 16
          %803 = vsyncadd [#allocation33], %s802
          %s805 = sshll.u32 [#allocation34], 4
          %s806 = int_to_ptr.vmem [resolvable:$true] %s805
          %808 = dma.hbm_to_vmem [thread:$0]  %s20, 16, %s806, [#allocation33]
        $region76: #{tpu_custom_call.1} parent=11 // pred_fallthru
          _
        // Predicated region
        $region77: #{tpu_custom_call.1} parent=11 // pred_check
          %p809 = pneg %p555
        $region78: #{tpu_custom_call.1} parent=11 // pred_check_branch
          %811 = sbr.rel (%p809) target = $region80
        $region79: #{tpu_custom_call.1} parent=11 // pred_region
          %s813 = ssub.s32 1024, 1024
          %814 = vsyncadd [#allocation36], %s813
          %s815 = sshll.u32 [#allocation35], 4
          %s816 = int_to_ptr.vmem [resolvable:$true] %s815
          %821 = dma.hbm_to_vmem [thread:$0]  %s21, 1024, %s816, [#allocation36], 64, 64, 4
        $region80: #{tpu_custom_call.1} parent=11 // pred_fallthru
          _
        // Predicated region
        $region81: #{tpu_custom_call.1} parent=11 // pred_check
          %p822 = pneg %p576
        $region82: #{tpu_custom_call.1} parent=11 // pred_check_branch
          %824 = sbr.rel (%p822) target = $region84
        $region83: #{tpu_custom_call.1} parent=11 // pred_region
          %s826 = ssub.s32 16, 16
          %827 = vsyncadd [#allocation36], %s826
          %s829 = sshll.u32 [#allocation37], 4
          %s830 = int_to_ptr.vmem [resolvable:$true] %s829
          %832 = dma.hbm_to_vmem [thread:$0]  %s22, 16, %s830, [#allocation36]
        $region84: #{tpu_custom_call.1} parent=11 // pred_fallthru
          _
      $region12: #{tpu_custom_call.1} parent=5 // pred_fallthru
        _
      %p833 = scmp.lt.s32.totalorder %s50, 2
      // Predicated region
      $region85: #{tpu_custom_call.1} parent=5 // pred_check
        %p834 = pneg %p833
      $region86: #{tpu_custom_call.1} parent=5 // pred_check_branch
        %836 = sbr.rel (%p834) target = $region88
      $region87: #{tpu_custom_call.1} parent=5 // pred_region
        // Predicated region
        $region89: #{tpu_custom_call.1} parent=87 // pred_check
          %p837 = pneg %p82
        $region90: #{tpu_custom_call.1} parent=87 // pred_check_branch
          %839 = sbr.rel (%p837) target = $region92
        $region91: #{tpu_custom_call.1} parent=87 // pred_region
          %s840 = sand.u32 %s72, 1
          %s841 = scalar_lea.sflag [#allocation3], %s840
          %s842 = sand.u32 %s72, 1
          %s843 = smul.addr %s842, 8
          %s844 = scalar_lea.vmem [#allocation2], %s843
          %s846 = ssub.s32 128, 128
          %847 = vsyncadd %s841, %s846
          %s848 = smul.addr %s57, 128
          %s849 = scalar_lea.hbm %s0, %s848
          %s851 = sshll.u32 %s844, 4
          %s852 = int_to_ptr.vmem [resolvable:$true] %s851
          %854 = dma.hbm_to_vmem [thread:$0]  %s849, 128, %s852, %s841
        $region92: #{tpu_custom_call.1} parent=87 // pred_fallthru
          _
        // Predicated region
        $region93: #{tpu_custom_call.1} parent=87 // pred_check
          %p855 = pneg %p108
        $region94: #{tpu_custom_call.1} parent=87 // pred_check_branch
          %857 = sbr.rel (%p855) target = $region96
        $region95: #{tpu_custom_call.1} parent=87 // pred_region
          %s858 = sand.u32 %s50, 1
          %s859 = scalar_lea.sflag [#allocation6], %s858
          %s860 = sand.u32 %s98, 1
          %s861 = smul.addr %s860, 8
          %s862 = scalar_lea.vmem [#allocation5], %s861
          %s864 = ssub.s32 128, 128
          %865 = vsyncadd %s859, %s864
          %s866 = smul.addr %s57, 128
          %s867 = scalar_lea.hbm %s1, %s866
          %s869 = sshll.u32 %s862, 4
          %s870 = int_to_ptr.vmem [resolvable:$true] %s869
          %872 = dma.hbm_to_vmem [thread:$0]  %s867, 128, %s870, %s859
        $region96: #{tpu_custom_call.1} parent=87 // pred_fallthru
          _
        // Predicated region
        $region97: #{tpu_custom_call.1} parent=87 // pred_check
          %p873 = pneg %p136
        $region98: #{tpu_custom_call.1} parent=87 // pred_check_branch
          %875 = sbr.rel (%p873) target = $region100
        $region99: #{tpu_custom_call.1} parent=87 // pred_region
          %s876 = sand.u32 %s50, 1
          %s877 = scalar_lea.sflag [#allocation6], %s876
          %s878 = sand.u32 %s126, 1
          %s879 = smul.addr %s878, 8
          %s880 = scalar_lea.vmem [#allocation7], %s879
          %s882 = ssub.s32 128, 128
          %883 = vsyncadd %s877, %s882
          %s884 = sadd.s32 %s58, %s57
          %s885 = smul.addr %s884, 128
          %s886 = scalar_lea.hbm %s2, %s885
          %s888 = sshll.u32 %s880, 4
          %s889 = int_to_ptr.vmem [resolvable:$true] %s888
          %891 = dma.hbm_to_vmem [thread:$0]  %s886, 128, %s889, %s877
        $region100: #{tpu_custom_call.1} parent=87 // pred_fallthru
          _
        // Predicated region
        $region101: #{tpu_custom_call.1} parent=87 // pred_check
          %p892 = pneg %p164
        $region102: #{tpu_custom_call.1} parent=87 // pred_check_branch
          %894 = sbr.rel (%p892) target = $region104
        $region103: #{tpu_custom_call.1} parent=87 // pred_region
          %s895 = sand.u32 %s50, 1
          %s896 = scalar_lea.sflag [#allocation9], %s895
          %s897 = sand.u32 %s154, 1
          %s898 = smul.addr %s897, 4
          %s899 = scalar_lea.vmem [#allocation8], %s898
          %s901 = ssub.s32 64, 64
          %902 = vsyncadd %s896, %s901
          %s903 = sadd.s32 %s58, %s57
          %s904 = smul.addr %s903, 64
          %s905 = scalar_lea.hbm %s3, %s904
          %s907 = sshll.u32 %s899, 4
          %s908 = int_to_ptr.vmem [resolvable:$true] %s907
          %910 = dma.hbm_to_vmem [thread:$0]  %s905, 64, %s908, %s896
        $region104: #{tpu_custom_call.1} parent=87 // pred_fallthru
          _
        // Predicated region
        $region105: #{tpu_custom_call.1} parent=87 // pred_check
          %p911 = pneg %p192
        $region106: #{tpu_custom_call.1} parent=87 // pred_check_branch
          %913 = sbr.rel (%p911) target = $region108
        $region107: #{tpu_custom_call.1} parent=87 // pred_region
          %s914 = sand.u32 %s50, 1
          %s915 = scalar_lea.sflag [#allocation9], %s914
          %s916 = sand.u32 %s182, 1
          %s917 = smul.addr %s916, 4
          %s918 = scalar_lea.vmem [#allocation10], %s917
          %s920 = ssub.s32 64, 64
          %921 = vsyncadd %s915, %s920
          %s922 = sadd.s32 %s58, %s57
          %s923 = smul.addr %s922, 64
          %s924 = scalar_lea.hbm %s4, %s923
          %s926 = sshll.u32 %s918, 4
          %s927 = int_to_ptr.vmem [resolvable:$true] %s926
          %929 = dma.hbm_to_vmem [thread:$0]  %s924, 64, %s927, %s915
        $region108: #{tpu_custom_call.1} parent=87 // pred_fallthru
          _
      $region88: #{tpu_custom_call.1} parent=5 // pred_fallthru
        _
      %p930 = scmp.le.s32.totalorder 1, %s50
      %p931 = scmp.lt.s32.totalorder %s50, 3
      %p932 = pnand %p930, %p931
      %p933 = pneg %p932
      // Predicated region
      $region109: #{tpu_custom_call.1} parent=5 // pred_check
        _
      $region110: #{tpu_custom_call.1} parent=5 // pred_check_branch
        %935 = sbr.rel (%p932) target = $region112
      $region111: #{tpu_custom_call.1} parent=5 // pred_region
        %s936 = ssub.s32 %s50, 1
        %s937 = sand.u32 %s75, 1
        %s938 = scalar_lea.sflag [#allocation3], %s937
        %s939 = sand.u32 %s75, 1
        %s940 = smul.addr %s939, 8
        %s941 = scalar_lea.vmem [#allocation2], %s940
        // Predicated region
        $region113: #{tpu_custom_call.1} parent=111 // pred_check
          %p942 = pneg %p88
        $region114: #{tpu_custom_call.1} parent=111 // pred_check_branch
          %944 = sbr.rel (%p942) target = $region116
        $region115: #{tpu_custom_call.1} parent=111 // pred_region
          %945 = dma.done %s938, 128
        $region116: #{tpu_custom_call.1} parent=111 // pred_fallthru
          _
        %s946 = sand.u32 %s55, 1
        %s947 = scalar_lea.sflag [#allocation6], %s946
        %s948 = sand.u32 %s101, 1
        %s949 = smul.addr %s948, 8
        %s950 = scalar_lea.vmem [#allocation5], %s949
        // Predicated region
        $region117: #{tpu_custom_call.1} parent=111 // pred_check
          %p951 = pneg %p114
        $region118: #{tpu_custom_call.1} parent=111 // pred_check_branch
          %953 = sbr.rel (%p951) target = $region120
        $region119: #{tpu_custom_call.1} parent=111 // pred_region
          %954 = dma.done %s947, 128
        $region120: #{tpu_custom_call.1} parent=111 // pred_fallthru
          _
        %s955 = sand.u32 %s55, 1
        %s956 = scalar_lea.sflag [#allocation6], %s955
        %s957 = sand.u32 %s129, 1
        %s958 = smul.addr %s957, 8
        %s959 = scalar_lea.vmem [#allocation7], %s958
        // Predicated region
        $region121: #{tpu_custom_call.1} parent=111 // pred_check
          %p960 = pneg %p142
        $region122: #{tpu_custom_call.1} parent=111 // pred_check_branch
          %962 = sbr.rel (%p960) target = $region124
        $region123: #{tpu_custom_call.1} parent=111 // pred_region
          %963 = dma.done %s956, 128
        $region124: #{tpu_custom_call.1} parent=111 // pred_fallthru
          _
        %s964 = sand.u32 %s55, 1
        %s965 = scalar_lea.sflag [#allocation9], %s964
        %s966 = sand.u32 %s157, 1
        %s967 = smul.addr %s966, 4
        %s968 = scalar_lea.vmem [#allocation8], %s967
        // Predicated region
        $region125: #{tpu_custom_call.1} parent=111 // pred_check
          %p969 = pneg %p170
        $region126: #{tpu_custom_call.1} parent=111 // pred_check_branch
          %971 = sbr.rel (%p969) target = $region128
        $region127: #{tpu_custom_call.1} parent=111 // pred_region
          %972 = dma.done %s965, 64
        $region128: #{tpu_custom_call.1} parent=111 // pred_fallthru
          _
        %s973 = sand.u32 %s55, 1
        %s974 = scalar_lea.sflag [#allocation9], %s973
        %s975 = sand.u32 %s185, 1
        %s976 = smul.addr %s975, 4
        %s977 = scalar_lea.vmem [#allocation10], %s976
        // Predicated region
        $region129: #{tpu_custom_call.1} parent=111 // pred_check
          %p978 = pneg %p198
        $region130: #{tpu_custom_call.1} parent=111 // pred_check_branch
          %980 = sbr.rel (%p978) target = $region132
        $region131: #{tpu_custom_call.1} parent=111 // pred_region
          %981 = dma.done %s974, 64
        $region132: #{tpu_custom_call.1} parent=111 // pred_fallthru
          _
        // Predicated region
        $region133: #{tpu_custom_call.1} parent=111 // pred_check
          %p982 = pneg %p219
        $region134: #{tpu_custom_call.1} parent=111 // pred_check_branch
          %984 = sbr.rel (%p982) target = $region136
        $region135: #{tpu_custom_call.1} parent=111 // pred_region
          %985 = dma.done [#allocation12], 1024
        $region136: #{tpu_custom_call.1} parent=111 // pred_fallthru
          _
        // Predicated region
        $region137: #{tpu_custom_call.1} parent=111 // pred_check
          %p986 = pneg %p240
        $region138: #{tpu_custom_call.1} parent=111 // pred_check_branch
          %988 = sbr.rel (%p986) target = $region140
        $region139: #{tpu_custom_call.1} parent=111 // pred_region
          %989 = dma.done [#allocation12], 16
        $region140: #{tpu_custom_call.1} parent=111 // pred_fallthru
          _
        // Predicated region
        $region141: #{tpu_custom_call.1} parent=111 // pred_check
          %p990 = pneg %p261
        $region142: #{tpu_custom_call.1} parent=111 // pred_check_branch
          %992 = sbr.rel (%p990) target = $region144
        $region143: #{tpu_custom_call.1} parent=111 // pred_region
          %993 = dma.done [#allocation15], 2048
        $region144: #{tpu_custom_call.1} parent=111 // pred_fallthru
          _
        // Predicated region
        $region145: #{tpu_custom_call.1} parent=111 // pred_check
          %p994 = pneg %p282
        $region146: #{tpu_custom_call.1} parent=111 // pred_check_branch
          %996 = sbr.rel (%p994) target = $region148
        $region147: #{tpu_custom_call.1} parent=111 // pred_region
          %997 = dma.done [#allocation15], 32
        $region148: #{tpu_custom_call.1} parent=111 // pred_fallthru
          _
        // Predicated region
        $region149: #{tpu_custom_call.1} parent=111 // pred_check
          %p998 = pneg %p303
        $region150: #{tpu_custom_call.1} parent=111 // pred_check_branch
          %1000 = sbr.rel (%p998) target = $region152
        $region151: #{tpu_custom_call.1} parent=111 // pred_region
          %1001 = dma.done [#allocation18], 256
        $region152: #{tpu_custom_call.1} parent=111 // pred_fallthru
          _
        // Predicated region
        $region153: #{tpu_custom_call.1} parent=111 // pred_check
          %p1002 = pneg %p324
        $region154: #{tpu_custom_call.1} parent=111 // pred_check_branch
          %1004 = sbr.rel (%p1002) target = $region156
        $region155: #{tpu_custom_call.1} parent=111 // pred_region
          %1005 = dma.done [#allocation18], 16
        $region156: #{tpu_custom_call.1} parent=111 // pred_fallthru
          _
        // Predicated region
        $region157: #{tpu_custom_call.1} parent=111 // pred_check
          %p1006 = pneg %p345
        $region158: #{tpu_custom_call.1} parent=111 // pred_check_branch
          %1008 = sbr.rel (%p1006) target = $region160
        $region159: #{tpu_custom_call.1} parent=111 // pred_region
          %1009 = dma.done [#allocation21], 1024
        $region160: #{tpu_custom_call.1} parent=111 // pred_fallthru
          _
        // Predicated region
        $region161: #{tpu_custom_call.1} parent=111 // pred_check
          %p1010 = pneg %p366
        $region162: #{tpu_custom_call.1} parent=111 // pred_check_branch
          %1012 = sbr.rel (%p1010) target = $region164
        $region163: #{tpu_custom_call.1} parent=111 // pred_region
          %1013 = dma.done [#allocation21], 16
        $region164: #{tpu_custom_call.1} parent=111 // pred_fallthru
          _
        // Predicated region
        $region165: #{tpu_custom_call.1} parent=111 // pred_check
          %p1014 = pneg %p387
        $region166: #{tpu_custom_call.1} parent=111 // pred_check_branch
          %1016 = sbr.rel (%p1014) target = $region168
        $region167: #{tpu_custom_call.1} parent=111 // pred_region
          %1017 = dma.done [#allocation24], 2048
        $region168: #{tpu_custom_call.1} parent=111 // pred_fallthru
          _
        // Predicated region
        $region169: #{tpu_custom_call.1} parent=111 // pred_check
          %p1018 = pneg %p408
        $region170: #{tpu_custom_call.1} parent=111 // pred_check_branch
          %1020 = sbr.rel (%p1018) target = $region172
        $region171: #{tpu_custom_call.1} parent=111 // pred_region
          %1021 = dma.done [#allocation24], 32
        $region172: #{tpu_custom_call.1} parent=111 // pred_fallthru
          _
        // Predicated region
        $region173: #{tpu_custom_call.1} parent=111 // pred_check
          %p1022 = pneg %p429
        $region174: #{tpu_custom_call.1} parent=111 // pred_check_branch
          %1024 = sbr.rel (%p1022) target = $region176
        $region175: #{tpu_custom_call.1} parent=111 // pred_region
          %1025 = dma.done [#allocation27], 256
        $region176: #{tpu_custom_call.1} parent=111 // pred_fallthru
          _
        // Predicated region
        $region177: #{tpu_custom_call.1} parent=111 // pred_check
          %p1026 = pneg %p450
        $region178: #{tpu_custom_call.1} parent=111 // pred_check_branch
          %1028 = sbr.rel (%p1026) target = $region180
        $region179: #{tpu_custom_call.1} parent=111 // pred_region
          %1029 = dma.done [#allocation27], 16
        $region180: #{tpu_custom_call.1} parent=111 // pred_fallthru
          _
        // Predicated region
        $region181: #{tpu_custom_call.1} parent=111 // pred_check
          %p1030 = pneg %p471
        $region182: #{tpu_custom_call.1} parent=111 // pred_check_branch
          %1032 = sbr.rel (%p1030) target = $region184
        $region183: #{tpu_custom_call.1} parent=111 // pred_region
          %1033 = dma.done [#allocation30], 16
        $region184: #{tpu_custom_call.1} parent=111 // pred_fallthru
          _
        // Predicated region
        $region185: #{tpu_custom_call.1} parent=111 // pred_check
          %p1034 = pneg %p492
        $region186: #{tpu_custom_call.1} parent=111 // pred_check_branch
          %1036 = sbr.rel (%p1034) target = $region188
        $region187: #{tpu_custom_call.1} parent=111 // pred_region
          %1037 = dma.done [#allocation30], 16
        $region188: #{tpu_custom_call.1} parent=111 // pred_fallthru
          _
        // Predicated region
        $region189: #{tpu_custom_call.1} parent=111 // pred_check
          %p1038 = pneg %p513
        $region190: #{tpu_custom_call.1} parent=111 // pred_check_branch
          %1040 = sbr.rel (%p1038) target = $region192
        $region191: #{tpu_custom_call.1} parent=111 // pred_region
          %1041 = dma.done [#allocation33], 1024
        $region192: #{tpu_custom_call.1} parent=111 // pred_fallthru
          _
        // Predicated region
        $region193: #{tpu_custom_call.1} parent=111 // pred_check
          %p1042 = pneg %p534
        $region194: #{tpu_custom_call.1} parent=111 // pred_check_branch
          %1044 = sbr.rel (%p1042) target = $region196
        $region195: #{tpu_custom_call.1} parent=111 // pred_region
          %1045 = dma.done [#allocation33], 16
        $region196: #{tpu_custom_call.1} parent=111 // pred_fallthru
          _
        // Predicated region
        $region197: #{tpu_custom_call.1} parent=111 // pred_check
          %p1046 = pneg %p555
        $region198: #{tpu_custom_call.1} parent=111 // pred_check_branch
          %1048 = sbr.rel (%p1046) target = $region200
        $region199: #{tpu_custom_call.1} parent=111 // pred_region
          %1049 = dma.done [#allocation36], 1024
        $region200: #{tpu_custom_call.1} parent=111 // pred_fallthru
          _
        // Predicated region
        $region201: #{tpu_custom_call.1} parent=111 // pred_check
          %p1050 = pneg %p576
        $region202: #{tpu_custom_call.1} parent=111 // pred_check_branch
          %1052 = sbr.rel (%p1050) target = $region204
        $region203: #{tpu_custom_call.1} parent=111 // pred_region
          %1053 = dma.done [#allocation36], 16
        $region204: #{tpu_custom_call.1} parent=111 // pred_fallthru
          _
        %s1054 = sand.u32 %s75, 1
        %s1055 = scalar_lea.sflag [#allocation3], %s1054
        %s1056 = sand.u32 %s75, 1
        %s1057 = smul.addr %s1056, 8
        %s1058 = scalar_lea.vmem [#allocation2], %s1057
        %p1059 = pneg %p88
        %p1060 = pneg %p85
        %s1061 = sand.u32 %s55, 1
        %s1062 = scalar_lea.sflag [#allocation6], %s1061
        %s1063 = sand.u32 %s101, 1
        %s1064 = smul.addr %s1063, 8
        %s1065 = scalar_lea.vmem [#allocation5], %s1064
        %p1066 = pneg %p114
        %p1067 = pneg %p111
        %s1068 = sand.u32 %s55, 1
        %s1069 = scalar_lea.sflag [#allocation6], %s1068
        %s1070 = sand.u32 %s129, 1
        %s1071 = smul.addr %s1070, 8
        %s1072 = scalar_lea.vmem [#allocation7], %s1071
        %p1073 = pneg %p142
        %p1074 = pneg %p139
        %s1075 = sand.u32 %s55, 1
        %s1076 = scalar_lea.sflag [#allocation9], %s1075
        %s1077 = sand.u32 %s157, 1
        %s1078 = smul.addr %s1077, 4
        %s1079 = scalar_lea.vmem [#allocation8], %s1078
        %p1080 = pneg %p170
        %p1081 = pneg %p167
        %s1082 = sand.u32 %s55, 1
        %s1083 = scalar_lea.sflag [#allocation9], %s1082
        %s1084 = sand.u32 %s185, 1
        %s1085 = smul.addr %s1084, 4
        %s1086 = scalar_lea.vmem [#allocation10], %s1085
        %p1087 = pneg %p198
        %p1088 = pneg %p195
        %p1089 = pneg %p219
        %p1090 = pneg %p216
        %p1091 = pneg %p240
        %p1092 = pneg %p237
        %p1093 = pneg %p261
        %p1094 = pneg %p258
        %p1095 = pneg %p282
        %p1096 = pneg %p279
        %p1097 = pneg %p303
        %p1098 = pneg %p300
        %p1099 = pneg %p324
        %p1100 = pneg %p321
        %p1101 = pneg %p345
        %p1102 = pneg %p342
        %p1103 = pneg %p366
        %p1104 = pneg %p363
        %p1105 = pneg %p387
        %p1106 = pneg %p384
        %p1107 = pneg %p408
        %p1108 = pneg %p405
        %p1109 = pneg %p429
        %p1110 = pneg %p426
        %p1111 = pneg %p450
        %p1112 = pneg %p447
        %p1113 = pneg %p471
        %p1114 = pneg %p468
        %p1115 = pneg %p492
        %p1116 = pneg %p489
        %p1117 = pneg %p513
        %p1118 = pneg %p510
        %p1119 = pneg %p534
        %p1120 = pneg %p531
        %p1121 = pneg %p555
        %p1122 = pneg %p552
        %p1123 = pneg %p576
        %p1124 = pneg %p573
        %p1125 = pneg %p604
        %p1126 = pneg %p601
        %s1127 = sand.u32 %s591, 1
        %s1128 = scalar_lea.sflag [#allocation4], %s1127
        %s1129 = sand.u32 %s591, 1
        %s1130 = smul.addr %s1129, 8
        %s1131 = scalar_lea.vmem [#allocation38], %s1130
        %v1133 = vld [vmem:[%s941] sm:$0xff]
        %v1134 = vld [vmem:[%s950] sm:$0xff]
        %v1135 = vld [vmem:[%s959] sm:$0xff]
        %v1136 = vld [vmem:[%s968] sm:$0xf]
        %v1137 = vld [vmem:[%s977] sm:$0xf]
        %v1138 = vld [vmem:[#allocation29] sm:$0x1]
        %v1139 = vld [vmem:[#allocation31] sm:$0x1]
        %v1140 = vld [vmem:[#allocation11] sm:$0xf]
        %v1141 = vld [vmem:[#allocation11 + $0x4] sm:$0xf]
        %v1142 = vld [vmem:[#allocation11 + $0x8] sm:$0xf]
        %v1143 = vld [vmem:[#allocation11 + $0xc] sm:$0xf]
        %v1144 = vld [vmem:[#allocation11 + $0x10] sm:$0xf]
        %v1145 = vld [vmem:[#allocation11 + $0x14] sm:$0xf]
        %v1146 = vld [vmem:[#allocation11 + $0x18] sm:$0xf]
        %v1147 = vld [vmem:[#allocation11 + $0x1c] sm:$0xf]
        %v1148 = vld [vmem:[#allocation11 + $0x20] sm:$0xf]
        %v1149 = vld [vmem:[#allocation11 + $0x24] sm:$0xf]
        %v1150 = vld [vmem:[#allocation11 + $0x28] sm:$0xf]
        %v1151 = vld [vmem:[#allocation11 + $0x2c] sm:$0xf]
        %v1152 = vld [vmem:[#allocation11 + $0x30] sm:$0xf]
        %v1153 = vld [vmem:[#allocation11 + $0x34] sm:$0xf]
        %v1154 = vld [vmem:[#allocation11 + $0x38] sm:$0xf]
        %v1155 = vld [vmem:[#allocation11 + $0x3c] sm:$0xf]
        %v1156 = vld [vmem:[#allocation13] sm:$0x1]
        %v1157 = vld [vmem:[#allocation14] sm:$0xff]
        %v1158 = vld [vmem:[#allocation14 + $0x8] sm:$0xff]
        %v1159 = vld [vmem:[#allocation14 + $0x10] sm:$0xff]
        %v1160 = vld [vmem:[#allocation14 + $0x18] sm:$0xff]
        %v1161 = vld [vmem:[#allocation14 + $0x20] sm:$0xff]
        %v1162 = vld [vmem:[#allocation14 + $0x28] sm:$0xff]
        %v1163 = vld [vmem:[#allocation14 + $0x30] sm:$0xff]
        %v1164 = vld [vmem:[#allocation14 + $0x38] sm:$0xff]
        %v1165 = vld [vmem:[#allocation14 + $0x40] sm:$0xff]
        %v1166 = vld [vmem:[#allocation14 + $0x48] sm:$0xff]
        %v1167 = vld [vmem:[#allocation14 + $0x50] sm:$0xff]
        %v1168 = vld [vmem:[#allocation14 + $0x58] sm:$0xff]
        %v1169 = vld [vmem:[#allocation14 + $0x60] sm:$0xff]
        %v1170 = vld [vmem:[#allocation14 + $0x68] sm:$0xff]
        %v1171 = vld [vmem:[#allocation14 + $0x70] sm:$0xff]
        %v1172 = vld [vmem:[#allocation14 + $0x78] sm:$0xff]
        %v1173 = vld [vmem:[#allocation16] sm:$0x3]
        %v1174 = vld [vmem:[#allocation17] sm:$0xf]
        %v1175 = vld [vmem:[#allocation17 + $0x4] sm:$0xf]
        %v1176 = vld [vmem:[#allocation17 + $0x8] sm:$0xf]
        %v1177 = vld [vmem:[#allocation17 + $0xc] sm:$0xf]
        %v1178 = vld [vmem:[#allocation19] sm:$0x1]
        %v1179 = vpack.c.bf16 %v1135, %v1135
        %v1181 = vlaneseq
        %v1182 = vshrl.u32 %v1181, 7
        %v1183 = vsub.s32 0, %v1182
        %v1184 = vrot.slane %v1156, %v1183
        %v1202 = vunpack.c.l.b16 %v1140
        %v1203 = vunpack.c.l.b16 %v1141
        %v1204 = vunpack.c.l.b16 %v1142
        %v1205 = vunpack.c.l.b16 %v1143
        %v1206 = vunpack.c.l.b16 %v1144
        %v1207 = vunpack.c.l.b16 %v1145
        %v1208 = vunpack.c.l.b16 %v1146
        %v1209 = vunpack.c.l.b16 %v1147
        %v1210 = vunpack.c.l.b16 %v1148
        %v1211 = vunpack.c.l.b16 %v1149
        %v1212 = vunpack.c.l.b16 %v1150
        %v1213 = vunpack.c.l.b16 %v1151
        %v1214 = vunpack.c.l.b16 %v1152
        %v1215 = vunpack.c.l.b16 %v1153
        %v1216 = vunpack.c.l.b16 %v1154
        %v1217 = vunpack.c.l.b16 %v1155
        %v1218 = vpack.c.b16 %v1203, %v1202
        %v1219 = vpack.c.b16 %v1205, %v1204
        %v1220 = vpack.c.b16 %v1207, %v1206
        %v1221 = vpack.c.b16 %v1209, %v1208
        %v1222 = vpack.c.b16 %v1211, %v1210
        %v1223 = vpack.c.b16 %v1213, %v1212
        %v1224 = vpack.c.b16 %v1215, %v1214
        %v1225 = vpack.c.b16 %v1217, %v1216
        %1234 = vmatprep.subr.bf16.mxu0 0
        %1235 = vmatpush1.bf16.msra.mxu0 %v1218
        %1236 = vmatprep.subr.bf16.mxu0 0
        %1237 = vmatpush1.bf16.msra.mxu0 %v1219
        %1238 = vmatprep.subr.bf16.mxu0 0
        %1239 = vmatpush1.bf16.msra.mxu0 %v1220
        %1240 = vmatprep.subr.bf16.mxu0 0
        %1241 = vmatpush1.bf16.msra.mxu0 %v1221
        %1242 = vmatprep.subr.bf16.mxu0 0
        %1243 = vmatpush1.bf16.msra.mxu0 %v1222
        %1244 = vmatprep.subr.bf16.mxu0 0
        %1245 = vmatpush1.bf16.msra.mxu0 %v1223
        %1246 = vmatprep.subr.bf16.mxu0 0
        %1247 = vmatpush1.bf16.msra.mxu0 %v1224
        %1248 = vmatprep.subr.bf16.mxu0 0
        %1249 = vmatpush1.bf16.msra.mxu0 %v1225
        %1250 = vmatprep.subr.bf16.mxu0 0
        %1251 = vmatpush1.bf16.msra.mxu0 0
        %1252 = vmatprep.subr.bf16.mxu0 0
        %1253 = vmatpush1.bf16.msra.mxu0 0
        %1254 = vmatprep.subr.bf16.mxu0 0
        %1255 = vmatpush1.bf16.msra.mxu0 0
        %1256 = vmatprep.subr.bf16.mxu0 0
        %1257 = vmatpush1.bf16.msra.mxu0 0
        %1258 = vmatprep.subr.bf16.mxu0 0
        %1259 = vmatpush1.bf16.msra.mxu0 0
        %1260 = vmatprep.subr.bf16.mxu0 0
        %1261 = vmatpush1.bf16.msra.mxu0 0
        %1262 = vmatprep.subr.bf16.mxu0 0
        %1263 = vmatpush1.bf16.msra.mxu0 0
        %1264 = vmatprep.subr.bf16.mxu0 0
        %1265 = vmatpush1.bf16.msra.mxu0 0
        %1266 = vmatprep.mubr.bf16.mxu0 0
        %1267 = vmatmul.mubr.bf16.gmra.mrb[0].mxu0 %v1179
        %v1268 = vpop.f32.mrb[0].mxu0
        %v1269 = vadd.f32 %v1184, %v1268
        %v1270 = vpop.f32.mrb[0].mxu0
        %v1271 = vpop.f32.mrb[0].mxu0
        %v1272 = vpop.f32.mrb[0].mxu0
        %1273 = vdwg.mxu0
        %v1274 = vpack.c.bf16 %v1134, %v1134
        %v1276 = vlaneseq
        %v1277 = vshrl.u32 %v1276, 7
        %v1278 = vsub.s32 0, %v1277
        %v1279 = vrot.slane %v1173, %v1278
        %v1280 = vlaneseq
        %v1281 = vshrl.u32 %v1280, 7
        %v1282 = vsub.s32 1, %v1281
        %v1283 = vrot.slane %v1173, %v1282
        %v1302 = vunpack.c.l.b16 %v1157
        %v1303 = vunpack.c.h.b16 %v1157
        %v1304 = vunpack.c.l.b16 %v1158
        %v1305 = vunpack.c.h.b16 %v1158
        %v1306 = vunpack.c.l.b16 %v1159
        %v1307 = vunpack.c.h.b16 %v1159
        %v1308 = vunpack.c.l.b16 %v1160
        %v1309 = vunpack.c.h.b16 %v1160
        %v1310 = vunpack.c.l.b16 %v1161
        %v1311 = vunpack.c.h.b16 %v1161
        %v1312 = vunpack.c.l.b16 %v1162
        %v1313 = vunpack.c.h.b16 %v1162
        %v1314 = vunpack.c.l.b16 %v1163
        %v1315 = vunpack.c.h.b16 %v1163
        %v1316 = vunpack.c.l.b16 %v1164
        %v1317 = vunpack.c.h.b16 %v1164
        %v1318 = vunpack.c.l.b16 %v1165
        %v1319 = vunpack.c.h.b16 %v1165
        %v1320 = vunpack.c.l.b16 %v1166
        %v1321 = vunpack.c.h.b16 %v1166
        %v1322 = vunpack.c.l.b16 %v1167
        %v1323 = vunpack.c.h.b16 %v1167
        %v1324 = vunpack.c.l.b16 %v1168
        %v1325 = vunpack.c.h.b16 %v1168
        %v1326 = vunpack.c.l.b16 %v1169
        %v1327 = vunpack.c.h.b16 %v1169
        %v1328 = vunpack.c.l.b16 %v1170
        %v1329 = vunpack.c.h.b16 %v1170
        %v1330 = vunpack.c.l.b16 %v1171
        %v1331 = vunpack.c.h.b16 %v1171
        %v1332 = vunpack.c.l.b16 %v1172
        %v1333 = vunpack.c.h.b16 %v1172
        %v1334 = vpack.c.b16 %v1304, %v1302
        %v1335 = vpack.c.b16 %v1305, %v1303
        %v1336 = vpack.c.b16 %v1308, %v1306
        %v1337 = vpack.c.b16 %v1309, %v1307
        %v1338 = vpack.c.b16 %v1312, %v1310
        %v1339 = vpack.c.b16 %v1313, %v1311
        %v1340 = vpack.c.b16 %v1316, %v1314
        %v1341 = vpack.c.b16 %v1317, %v1315
        %v1342 = vpack.c.b16 %v1320, %v1318
        %v1343 = vpack.c.b16 %v1321, %v1319
        %v1344 = vpack.c.b16 %v1324, %v1322
        %v1345 = vpack.c.b16 %v1325, %v1323
        %v1346 = vpack.c.b16 %v1328, %v1326
        %v1347 = vpack.c.b16 %v1329, %v1327
        %v1348 = vpack.c.b16 %v1332, %v1330
        %v1349 = vpack.c.b16 %v1333, %v1331
        %1366 = vmatprep.subr.bf16.mxu0 %v1335
        %1367 = vmatpush1.bf16.msra.mxu0 %v1334
        %1368 = vmatprep.subr.bf16.mxu0 %v1337
        %1369 = vmatpush1.bf16.msra.mxu0 %v1336
        %1370 = vmatprep.subr.bf16.mxu0 %v1339
        %1371 = vmatpush1.bf16.msra.mxu0 %v1338
        %1372 = vmatprep.subr.bf16.mxu0 %v1341
        %1373 = vmatpush1.bf16.msra.mxu0 %v1340
        %1374 = vmatprep.subr.bf16.mxu0 %v1343
        %1375 = vmatpush1.bf16.msra.mxu0 %v1342
        %1376 = vmatprep.subr.bf16.mxu0 %v1345
        %1377 = vmatpush1.bf16.msra.mxu0 %v1344
        %1378 = vmatprep.subr.bf16.mxu0 %v1347
        %1379 = vmatpush1.bf16.msra.mxu0 %v1346
        %1380 = vmatprep.subr.bf16.mxu0 %v1349
        %1381 = vmatpush1.bf16.msra.mxu0 %v1348
        %1382 = vmatprep.subr.bf16.mxu0 0
        %1383 = vmatpush1.bf16.msra.mxu0 0
        %1384 = vmatprep.subr.bf16.mxu0 0
        %1385 = vmatpush1.bf16.msra.mxu0 0
        %1386 = vmatprep.subr.bf16.mxu0 0
        %1387 = vmatpush1.bf16.msra.mxu0 0
        %1388 = vmatprep.subr.bf16.mxu0 0
        %1389 = vmatpush1.bf16.msra.mxu0 0
        %1390 = vmatprep.subr.bf16.mxu0 0
        %1391 = vmatpush1.bf16.msra.mxu0 0
        %1392 = vmatprep.subr.bf16.mxu0 0
        %1393 = vmatpush1.bf16.msra.mxu0 0
        %1394 = vmatprep.subr.bf16.mxu0 0
        %1395 = vmatpush1.bf16.msra.mxu0 0
        %1396 = vmatprep.subr.bf16.mxu0 0
        %1397 = vmatpush1.bf16.msra.mxu0 0
        %1398 = vmatprep.mubr.bf16.mxu0 0
        %1399 = vmatmul.mubr.bf16.gmra.mrb[0].mxu0 %v1274
        %v1400 = vpop.f32.mrb[0].mxu0
        %v1401 = vadd.f32 %v1279, %v1400
        %v1402 = vpop.f32.mrb[0].mxu0
        %v1403 = vadd.f32 %v1283, %v1402
        %v1404 = vpop.f32.mrb[0].mxu0
        %v1405 = vpop.f32.mrb[0].mxu0
        %1406 = vdwg.mxu0
        %v1407 = vmul.f32 %v1269, 0.35355338
        %v1408 = vpack.c.bf16 %v1407, %v1407
        %v1409 = vpack.c.bf16 %v1401, %v1401
        %v1410 = vpack.c.bf16 %v1403, %v1403
        %v1411 = vunpack.c.l.bf16 %v1136
        %vm1412 = vcmask 64512
        %v1414 = vsel %vm1412, %v1408, 0
        %v1417 = vsel %vm1412, %v1409, 0
        %1419 = vmatprep.subr.bf16.mxu0 0
        %1420 = vmatpush1.bf16.xpose.msra.mxu0 %v1417
        %1421 = vmatprep.subr.bf16.mxu0 0
        %1422 = vmatpush1.bf16.xpose.msra.mxu0 0
        %1423 = vmatprep.subr.bf16.mxu0 0
        %1424 = vmatpush1.bf16.xpose.msra.mxu0 0
        %1425 = vmatprep.subr.bf16.mxu0 0
        %1426 = vmatpush1.bf16.xpose.msra.mxu0 0
        %1427 = vmatprep.subr.bf16.mxu0 0
        %1428 = vmatpush1.bf16.xpose.msra.mxu0 0
        %1429 = vmatprep.subr.bf16.mxu0 0
        %1430 = vmatpush1.bf16.xpose.msra.mxu0 0
        %1431 = vmatprep.subr.bf16.mxu0 0
        %1432 = vmatpush1.bf16.xpose.msra.mxu0 0
        %1433 = vmatprep.subr.bf16.mxu0 0
        %1434 = vmatpush1.bf16.xpose.msra.mxu0 0
        %1435 = vmatprep.subr.bf16.mxu0 0
        %1436 = vmatpush1.bf16.xpose.msra.mxu0 0
        %1437 = vmatprep.subr.bf16.mxu0 0
        %1438 = vmatpush1.bf16.xpose.msra.mxu0 0
        %1439 = vmatprep.subr.bf16.mxu0 0
        %1440 = vmatpush1.bf16.xpose.msra.mxu0 0
        %1441 = vmatprep.subr.bf16.mxu0 0
        %1442 = vmatpush1.bf16.xpose.msra.mxu0 0
        %1443 = vmatprep.subr.bf16.mxu0 0
        %1444 = vmatpush1.bf16.xpose.msra.mxu0 0
        %1445 = vmatprep.subr.bf16.mxu0 0
        %1446 = vmatpush1.bf16.xpose.msra.mxu0 0
        %1447 = vmatprep.subr.bf16.mxu0 0
        %1448 = vmatpush1.bf16.xpose.msra.mxu0 0
        %1449 = vmatprep.subr.bf16.mxu0 0
        %1450 = vmatpush1.bf16.xpose.msra.mxu0 0
        %1451 = vmatprep.mubr.bf16.mxu0 0
        %1452 = vmatmul.mubr.bf16.gmra.mrb[0].mxu0 %v1414
        %v1453 = vpop.f32.mrb[0].mxu0
        %v1454 = vadd.f32 %v1411, %v1453
        %v1455 = vpop.f32.mrb[0].mxu0
        %v1456 = vpop.f32.mrb[0].mxu0
        %v1457 = vpop.f32.mrb[0].mxu0
        %1458 = vdwg.mxu0
        %v1459 = vsel %vm1412, %v1454, -inf
        %1460 = vmax.xlane.f32.xlu0 %v1459
        %v1461 = vpop.xlane.xlu0 %1460
        %v1462 = vsub.f32 %v1454, %v1461
        %v1463 = vmul.f32 %v1462, 1.442695
        %v1464 = vpow.pop %v1463
        %v1465 = vsel %vm1412, %v1464, 0.0
        %1466 = vadd.xlane.f32.xlu0 %v1465
        %v1467 = vpop.xlane.xlu0 %1466
        %v1468 = vrcp.pop %v1467
        %v1469 = vmul.f32 %v1464, %v1468
        %v1470 = vpack.c.bf16 %v1469, %v1469
        %v1472 = vsel %vm1412, %v1470, 0
        %vm1474 = vcmask 1043456
        %v1476 = vsel %vm1474, %v1410, 0
        %1478 = vmatprep.subr.bf16.mxu0 0
        %1479 = vmatpush1.bf16.msra.mxu0 %v1476
        %1480 = vmatprep.subr.bf16.mxu0 0
        %1481 = vmatpush1.bf16.msra.mxu0 0
        %1482 = vmatprep.subr.bf16.mxu0 0
        %1483 = vmatpush1.bf16.msra.mxu0 0
        %1484 = vmatprep.subr.bf16.mxu0 0
        %1485 = vmatpush1.bf16.msra.mxu0 0
        %1486 = vmatprep.subr.bf16.mxu0 0
        %1487 = vmatpush1.bf16.msra.mxu0 0
        %1488 = vmatprep.subr.bf16.mxu0 0
        %1489 = vmatpush1.bf16.msra.mxu0 0
        %1490 = vmatprep.subr.bf16.mxu0 0
        %1491 = vmatpush1.bf16.msra.mxu0 0
        %1492 = vmatprep.subr.bf16.mxu0 0
        %1493 = vmatpush1.bf16.msra.mxu0 0
        %1494 = vmatprep.subr.bf16.mxu0 0
        %1495 = vmatpush1.bf16.msra.mxu0 0
        %1496 = vmatprep.subr.bf16.mxu0 0
        %1497 = vmatpush1.bf16.msra.mxu0 0
        %1498 = vmatprep.subr.bf16.mxu0 0
        %1499 = vmatpush1.bf16.msra.mxu0 0
        %1500 = vmatprep.subr.bf16.mxu0 0
        %1501 = vmatpush1.bf16.msra.mxu0 0
        %1502 = vmatprep.subr.bf16.mxu0 0
        %1503 = vmatpush1.bf16.msra.mxu0 0
        %1504 = vmatprep.subr.bf16.mxu0 0
        %1505 = vmatpush1.bf16.msra.mxu0 0
        %1506 = vmatprep.subr.bf16.mxu0 0
        %1507 = vmatpush1.bf16.msra.mxu0 0
        %1508 = vmatprep.subr.bf16.mxu0 0
        %1509 = vmatpush1.bf16.msra.mxu0 0
        %1510 = vmatprep.mubr.bf16.mxu0 0
        %1511 = vmatmul.mubr.bf16.gmra.mrb[0].mxu0 %v1472
        %v1512 = vpop.f32.mrb[0].mxu0
        %v1513 = vadd.f32 0.0, %v1512
        %v1514 = vpop.f32.mrb[0].mxu0
        %v1515 = vpop.f32.mrb[0].mxu0
        %v1516 = vpop.f32.mrb[0].mxu0
        %1517 = vdwg.mxu0
        %1519 = vrot.lane.b32.xlu0 %v1408, 120
        %v1520 = vpop.permute.xlu0 %1519
        %1522 = vrot.lane.b32.xlu0 %v1409, 120
        %v1523 = vpop.permute.xlu0 %1522
        %v1525 = vsel %vm1412, %v1520, 0
        %v1528 = vsel %vm1412, %v1523, 0
        %1530 = vmatprep.subr.bf16.mxu0 0
        %1531 = vmatpush1.bf16.xpose.msra.mxu0 %v1528
        %1532 = vmatprep.subr.bf16.mxu0 0
        %1533 = vmatpush1.bf16.xpose.msra.mxu0 0
        %1534 = vmatprep.subr.bf16.mxu0 0
        %1535 = vmatpush1.bf16.xpose.msra.mxu0 0
        %1536 = vmatprep.subr.bf16.mxu0 0
        %1537 = vmatpush1.bf16.xpose.msra.mxu0 0
        %1538 = vmatprep.subr.bf16.mxu0 0
        %1539 = vmatpush1.bf16.xpose.msra.mxu0 0
        %1540 = vmatprep.subr.bf16.mxu0 0
        %1541 = vmatpush1.bf16.xpose.msra.mxu0 0
        %1542 = vmatprep.subr.bf16.mxu0 0
        %1543 = vmatpush1.bf16.xpose.msra.mxu0 0
        %1544 = vmatprep.subr.bf16.mxu0 0
        %1545 = vmatpush1.bf16.xpose.msra.mxu0 0
        %1546 = vmatprep.subr.bf16.mxu0 0
        %1547 = vmatpush1.bf16.xpose.msra.mxu0 0
        %1548 = vmatprep.subr.bf16.mxu0 0
        %1549 = vmatpush1.bf16.xpose.msra.mxu0 0
        %1550 = vmatprep.subr.bf16.mxu0 0
        %1551 = vmatpush1.bf16.xpose.msra.mxu0 0
        %1552 = vmatprep.subr.bf16.mxu0 0
        %1553 = vmatpush1.bf16.xpose.msra.mxu0 0
        %1554 = vmatprep.subr.bf16.mxu0 0
        %1555 = vmatpush1.bf16.xpose.msra.mxu0 0
        %1556 = vmatprep.subr.bf16.mxu0 0
        %1557 = vmatpush1.bf16.xpose.msra.mxu0 0
        %1558 = vmatprep.subr.bf16.mxu0 0
        %1559 = vmatpush1.bf16.xpose.msra.mxu0 0
        %1560 = vmatprep.subr.bf16.mxu0 0
        %1561 = vmatpush1.bf16.xpose.msra.mxu0 0
        %1562 = vmatprep.mubr.bf16.mxu0 0
        %1563 = vmatmul.mubr.bf16.gmra.mrb[0].mxu0 %v1525
        %v1564 = vpop.f32.mrb[0].mxu0
        %v1565 = vadd.f32 %v1411, %v1564
        %v1566 = vpop.f32.mrb[0].mxu0
        %v1567 = vpop.f32.mrb[0].mxu0
        %v1568 = vpop.f32.mrb[0].mxu0
        %1569 = vdwg.mxu0
        %v1570 = vsel %vm1412, %v1565, -inf
        %1571 = vmax.xlane.f32.xlu0 %v1570
        %v1572 = vpop.xlane.xlu0 %1571
        %v1573 = vsub.f32 %v1565, %v1572
        %v1574 = vmul.f32 %v1573, 1.442695
        %v1575 = vpow.pop %v1574
        %v1576 = vsel %vm1412, %v1575, 0.0
        %1577 = vadd.xlane.f32.xlu0 %v1576
        %v1578 = vpop.xlane.xlu0 %1577
        %v1579 = vrcp.pop %v1578
        %v1580 = vmul.f32 %v1575, %v1579
        %v1581 = vpack.c.bf16 %v1580, %v1580
        %1583 = vrot.lane.b32.xlu0 %v1410, 120
        %v1584 = vpop.permute.xlu0 %1583
        %v1586 = vsel %vm1412, %v1581, 0
        %v1589 = vsel %vm1474, %v1584, 0
        %1591 = vmatprep.subr.bf16.mxu0 0
        %1592 = vmatpush1.bf16.msra.mxu0 %v1589
        %1593 = vmatprep.subr.bf16.mxu0 0
        %1594 = vmatpush1.bf16.msra.mxu0 0
        %1595 = vmatprep.subr.bf16.mxu0 0
        %1596 = vmatpush1.bf16.msra.mxu0 0
        %1597 = vmatprep.subr.bf16.mxu0 0
        %1598 = vmatpush1.bf16.msra.mxu0 0
        %1599 = vmatprep.subr.bf16.mxu0 0
        %1600 = vmatpush1.bf16.msra.mxu0 0
        %1601 = vmatprep.subr.bf16.mxu0 0
        %1602 = vmatpush1.bf16.msra.mxu0 0
        %1603 = vmatprep.subr.bf16.mxu0 0
        %1604 = vmatpush1.bf16.msra.mxu0 0
        %1605 = vmatprep.subr.bf16.mxu0 0
        %1606 = vmatpush1.bf16.msra.mxu0 0
        %1607 = vmatprep.subr.bf16.mxu0 0
        %1608 = vmatpush1.bf16.msra.mxu0 0
        %1609 = vmatprep.subr.bf16.mxu0 0
        %1610 = vmatpush1.bf16.msra.mxu0 0
        %1611 = vmatprep.subr.bf16.mxu0 0
        %1612 = vmatpush1.bf16.msra.mxu0 0
        %1613 = vmatprep.subr.bf16.mxu0 0
        %1614 = vmatpush1.bf16.msra.mxu0 0
        %1615 = vmatprep.subr.bf16.mxu0 0
        %1616 = vmatpush1.bf16.msra.mxu0 0
        %1617 = vmatprep.subr.bf16.mxu0 0
        %1618 = vmatpush1.bf16.msra.mxu0 0
        %1619 = vmatprep.subr.bf16.mxu0 0
        %1620 = vmatpush1.bf16.msra.mxu0 0
        %1621 = vmatprep.subr.bf16.mxu0 0
        %1622 = vmatpush1.bf16.msra.mxu0 0
        %1623 = vmatprep.mubr.bf16.mxu0 0
        %1624 = vmatmul.mubr.bf16.gmra.mrb[0].mxu0 %v1586
        %v1625 = vpop.f32.mrb[0].mxu0
        %v1626 = vadd.f32 0.0, %v1625
        %v1627 = vpop.f32.mrb[0].mxu0
        %v1628 = vpop.f32.mrb[0].mxu0
        %v1629 = vpop.f32.mrb[0].mxu0
        %1630 = vdwg.mxu0
        %1631 = vrot.lane.b32.xlu0 %v1408, 112
        %v1632 = vpop.permute.xlu0 %1631
        %1633 = vrot.lane.b32.xlu0 %v1409, 112
        %v1634 = vpop.permute.xlu0 %1633
        %v1636 = vsel %vm1412, %v1632, 0
        %v1639 = vsel %vm1412, %v1634, 0
        %1641 = vmatprep.subr.bf16.mxu0 0
        %1642 = vmatpush1.bf16.xpose.msra.mxu0 %v1639
        %1643 = vmatprep.subr.bf16.mxu0 0
        %1644 = vmatpush1.bf16.xpose.msra.mxu0 0
        %1645 = vmatprep.subr.bf16.mxu0 0
        %1646 = vmatpush1.bf16.xpose.msra.mxu0 0
        %1647 = vmatprep.subr.bf16.mxu0 0
        %1648 = vmatpush1.bf16.xpose.msra.mxu0 0
        %1649 = vmatprep.subr.bf16.mxu0 0
        %1650 = vmatpush1.bf16.xpose.msra.mxu0 0
        %1651 = vmatprep.subr.bf16.mxu0 0
        %1652 = vmatpush1.bf16.xpose.msra.mxu0 0
        %1653 = vmatprep.subr.bf16.mxu0 0
        %1654 = vmatpush1.bf16.xpose.msra.mxu0 0
        %1655 = vmatprep.subr.bf16.mxu0 0
        %1656 = vmatpush1.bf16.xpose.msra.mxu0 0
        %1657 = vmatprep.subr.bf16.mxu0 0
        %1658 = vmatpush1.bf16.xpose.msra.mxu0 0
        %1659 = vmatprep.subr.bf16.mxu0 0
        %1660 = vmatpush1.bf16.xpose.msra.mxu0 0
        %1661 = vmatprep.subr.bf16.mxu0 0
        %1662 = vmatpush1.bf16.xpose.msra.mxu0 0
        %1663 = vmatprep.subr.bf16.mxu0 0
        %1664 = vmatpush1.bf16.xpose.msra.mxu0 0
        %1665 = vmatprep.subr.bf16.mxu0 0
        %1666 = vmatpush1.bf16.xpose.msra.mxu0 0
        %1667 = vmatprep.subr.bf16.mxu0 0
        %1668 = vmatpush1.bf16.xpose.msra.mxu0 0
        %1669 = vmatprep.subr.bf16.mxu0 0
        %1670 = vmatpush1.bf16.xpose.msra.mxu0 0
        %1671 = vmatprep.subr.bf16.mxu0 0
        %1672 = vmatpush1.bf16.xpose.msra.mxu0 0
        %1673 = vmatprep.mubr.bf16.mxu0 0
        %1674 = vmatmul.mubr.bf16.gmra.mrb[0].mxu0 %v1636
        %v1675 = vpop.f32.mrb[0].mxu0
        %v1676 = vadd.f32 %v1411, %v1675
        %v1677 = vpop.f32.mrb[0].mxu0
        %v1678 = vpop.f32.mrb[0].mxu0
        %v1679 = vpop.f32.mrb[0].mxu0
        %1680 = vdwg.mxu0
        %v1681 = vsel %vm1412, %v1676, -inf
        %1682 = vmax.xlane.f32.xlu0 %v1681
        %v1683 = vpop.xlane.xlu0 %1682
        %v1684 = vsub.f32 %v1676, %v1683
        %v1685 = vmul.f32 %v1684, 1.442695
        %v1686 = vpow.pop %v1685
        %v1687 = vsel %vm1412, %v1686, 0.0
        %1688 = vadd.xlane.f32.xlu0 %v1687
        %v1689 = vpop.xlane.xlu0 %1688
        %v1690 = vrcp.pop %v1689
        %v1691 = vmul.f32 %v1686, %v1690
        %v1692 = vpack.c.bf16 %v1691, %v1691
        %1693 = vrot.lane.b32.xlu0 %v1410, 112
        %v1694 = vpop.permute.xlu0 %1693
        %v1696 = vsel %vm1412, %v1692, 0
        %v1699 = vsel %vm1474, %v1694, 0
        %1701 = vmatprep.subr.bf16.mxu0 0
        %1702 = vmatpush1.bf16.msra.mxu0 %v1699
        %1703 = vmatprep.subr.bf16.mxu0 0
        %1704 = vmatpush1.bf16.msra.mxu0 0
        %1705 = vmatprep.subr.bf16.mxu0 0
        %1706 = vmatpush1.bf16.msra.mxu0 0
        %1707 = vmatprep.subr.bf16.mxu0 0
        %1708 = vmatpush1.bf16.msra.mxu0 0
        %1709 = vmatprep.subr.bf16.mxu0 0
        %1710 = vmatpush1.bf16.msra.mxu0 0
        %1711 = vmatprep.subr.bf16.mxu0 0
        %1712 = vmatpush1.bf16.msra.mxu0 0
        %1713 = vmatprep.subr.bf16.mxu0 0
        %1714 = vmatpush1.bf16.msra.mxu0 0
        %1715 = vmatprep.subr.bf16.mxu0 0
        %1716 = vmatpush1.bf16.msra.mxu0 0
        %1717 = vmatprep.subr.bf16.mxu0 0
        %1718 = vmatpush1.bf16.msra.mxu0 0
        %1719 = vmatprep.subr.bf16.mxu0 0
        %1720 = vmatpush1.bf16.msra.mxu0 0
        %1721 = vmatprep.subr.bf16.mxu0 0
        %1722 = vmatpush1.bf16.msra.mxu0 0
        %1723 = vmatprep.subr.bf16.mxu0 0
        %1724 = vmatpush1.bf16.msra.mxu0 0
        %1725 = vmatprep.subr.bf16.mxu0 0
        %1726 = vmatpush1.bf16.msra.mxu0 0
        %1727 = vmatprep.subr.bf16.mxu0 0
        %1728 = vmatpush1.bf16.msra.mxu0 0
        %1729 = vmatprep.subr.bf16.mxu0 0
        %1730 = vmatpush1.bf16.msra.mxu0 0
        %1731 = vmatprep.subr.bf16.mxu0 0
        %1732 = vmatpush1.bf16.msra.mxu0 0
        %1733 = vmatprep.mubr.bf16.mxu0 0
        %1734 = vmatmul.mubr.bf16.gmra.mrb[0].mxu0 %v1696
        %v1735 = vpop.f32.mrb[0].mxu0
        %v1736 = vadd.f32 0.0, %v1735
        %v1737 = vpop.f32.mrb[0].mxu0
        %v1738 = vpop.f32.mrb[0].mxu0
        %v1739 = vpop.f32.mrb[0].mxu0
        %1740 = vdwg.mxu0
        %1741 = vrot.lane.b32.xlu0 %v1408, 104
        %v1742 = vpop.permute.xlu0 %1741
        %1743 = vrot.lane.b32.xlu0 %v1409, 104
        %v1744 = vpop.permute.xlu0 %1743
        %v1746 = vsel %vm1412, %v1742, 0
        %v1749 = vsel %vm1412, %v1744, 0
        %1751 = vmatprep.subr.bf16.mxu0 0
        %1752 = vmatpush1.bf16.xpose.msra.mxu0 %v1749
        %1753 = vmatprep.subr.bf16.mxu0 0
        %1754 = vmatpush1.bf16.xpose.msra.mxu0 0
        %1755 = vmatprep.subr.bf16.mxu0 0
        %1756 = vmatpush1.bf16.xpose.msra.mxu0 0
        %1757 = vmatprep.subr.bf16.mxu0 0
        %1758 = vmatpush1.bf16.xpose.msra.mxu0 0
        %1759 = vmatprep.subr.bf16.mxu0 0
        %1760 = vmatpush1.bf16.xpose.msra.mxu0 0
        %1761 = vmatprep.subr.bf16.mxu0 0
        %1762 = vmatpush1.bf16.xpose.msra.mxu0 0
        %1763 = vmatprep.subr.bf16.mxu0 0
        %1764 = vmatpush1.bf16.xpose.msra.mxu0 0
        %1765 = vmatprep.subr.bf16.mxu0 0
        %1766 = vmatpush1.bf16.xpose.msra.mxu0 0
        %1767 = vmatprep.subr.bf16.mxu0 0
        %1768 = vmatpush1.bf16.xpose.msra.mxu0 0
        %1769 = vmatprep.subr.bf16.mxu0 0
        %1770 = vmatpush1.bf16.xpose.msra.mxu0 0
        %1771 = vmatprep.subr.bf16.mxu0 0
        %1772 = vmatpush1.bf16.xpose.msra.mxu0 0
        %1773 = vmatprep.subr.bf16.mxu0 0
        %1774 = vmatpush1.bf16.xpose.msra.mxu0 0
        %1775 = vmatprep.subr.bf16.mxu0 0
        %1776 = vmatpush1.bf16.xpose.msra.mxu0 0
        %1777 = vmatprep.subr.bf16.mxu0 0
        %1778 = vmatpush1.bf16.xpose.msra.mxu0 0
        %1779 = vmatprep.subr.bf16.mxu0 0
        %1780 = vmatpush1.bf16.xpose.msra.mxu0 0
        %1781 = vmatprep.subr.bf16.mxu0 0
        %1782 = vmatpush1.bf16.xpose.msra.mxu0 0
        %1783 = vmatprep.mubr.bf16.mxu0 0
        %1784 = vmatmul.mubr.bf16.gmra.mrb[0].mxu0 %v1746
        %v1785 = vpop.f32.mrb[0].mxu0
        %v1786 = vadd.f32 %v1411, %v1785
        %v1787 = vpop.f32.mrb[0].mxu0
        %v1788 = vpop.f32.mrb[0].mxu0
        %v1789 = vpop.f32.mrb[0].mxu0
        %1790 = vdwg.mxu0
        %v1791 = vsel %vm1412, %v1786, -inf
        %1792 = vmax.xlane.f32.xlu0 %v1791
        %v1793 = vpop.xlane.xlu0 %1792
        %v1794 = vsub.f32 %v1786, %v1793
        %v1795 = vmul.f32 %v1794, 1.442695
        %v1796 = vpow.pop %v1795
        %v1797 = vsel %vm1412, %v1796, 0.0
        %1798 = vadd.xlane.f32.xlu0 %v1797
        %v1799 = vpop.xlane.xlu0 %1798
        %v1800 = vrcp.pop %v1799
        %v1801 = vmul.f32 %v1796, %v1800
        %v1802 = vpack.c.bf16 %v1801, %v1801
        %1803 = vrot.lane.b32.xlu0 %v1410, 104
        %v1804 = vpop.permute.xlu0 %1803
        %v1806 = vsel %vm1412, %v1802, 0
        %v1809 = vsel %vm1474, %v1804, 0
        %1811 = vmatprep.subr.bf16.mxu0 0
        %1812 = vmatpush1.bf16.msra.mxu0 %v1809
        %1813 = vmatprep.subr.bf16.mxu0 0
        %1814 = vmatpush1.bf16.msra.mxu0 0
        %1815 = vmatprep.subr.bf16.mxu0 0
        %1816 = vmatpush1.bf16.msra.mxu0 0
        %1817 = vmatprep.subr.bf16.mxu0 0
        %1818 = vmatpush1.bf16.msra.mxu0 0
        %1819 = vmatprep.subr.bf16.mxu0 0
        %1820 = vmatpush1.bf16.msra.mxu0 0
        %1821 = vmatprep.subr.bf16.mxu0 0
        %1822 = vmatpush1.bf16.msra.mxu0 0
        %1823 = vmatprep.subr.bf16.mxu0 0
        %1824 = vmatpush1.bf16.msra.mxu0 0
        %1825 = vmatprep.subr.bf16.mxu0 0
        %1826 = vmatpush1.bf16.msra.mxu0 0
        %1827 = vmatprep.subr.bf16.mxu0 0
        %1828 = vmatpush1.bf16.msra.mxu0 0
        %1829 = vmatprep.subr.bf16.mxu0 0
        %1830 = vmatpush1.bf16.msra.mxu0 0
        %1831 = vmatprep.subr.bf16.mxu0 0
        %1832 = vmatpush1.bf16.msra.mxu0 0
        %1833 = vmatprep.subr.bf16.mxu0 0
        %1834 = vmatpush1.bf16.msra.mxu0 0
        %1835 = vmatprep.subr.bf16.mxu0 0
        %1836 = vmatpush1.bf16.msra.mxu0 0
        %1837 = vmatprep.subr.bf16.mxu0 0
        %1838 = vmatpush1.bf16.msra.mxu0 0
        %1839 = vmatprep.subr.bf16.mxu0 0
        %1840 = vmatpush1.bf16.msra.mxu0 0
        %1841 = vmatprep.subr.bf16.mxu0 0
        %1842 = vmatpush1.bf16.msra.mxu0 0
        %1843 = vmatprep.mubr.bf16.mxu0 0
        %1844 = vmatmul.mubr.bf16.gmra.mrb[0].mxu0 %v1806
        %v1845 = vpop.f32.mrb[0].mxu0
        %v1846 = vadd.f32 0.0, %v1845
        %v1847 = vpop.f32.mrb[0].mxu0
        %v1848 = vpop.f32.mrb[0].mxu0
        %v1849 = vpop.f32.mrb[0].mxu0
        %1850 = vdwg.mxu0
        %1852 = vrot.lane.b32.xlu0 %v1626, 8
        %v1853 = vpop.permute.xlu0 %1852
        %1856 = vrot.lane.b32.xlu0 %v1736, 16
        %v1857 = vpop.permute.xlu0 %1856
        %1860 = vrot.lane.b32.xlu0 %v1846, 24
        %v1861 = vpop.permute.xlu0 %1860
        %v1863 = vsel %vm1412, %v1513, %v1853
        %vm1864 = vcmask 130048
        %v1865 = vsel %vm1864, %v1863, %v1857
        %vm1866 = vcmask 195584
        %v1867 = vsel %vm1866, %v1865, %v1861
        %v1868 = vpack.c.bf16 %v1867, %v1867
        %v1870 = vlaneseq
        %v1871 = vshrl.u32 %v1870, 7
        %v1872 = vsub.s32 0, %v1871
        %v1873 = vrot.slane %v1178, %v1872
        %v1879 = vunpack.c.l.b16 %v1174
        %v1880 = vunpack.c.l.b16 %v1175
        %v1881 = vunpack.c.l.b16 %v1176
        %v1882 = vunpack.c.l.b16 %v1177
        %v1883 = vpack.c.b16 %v1880, %v1879
        %v1884 = vpack.c.b16 %v1882, %v1881
        %vm1887 = vcmask 261120
        %v1889 = vsel %vm1887, %v1868, 0
        %1891 = vmatprep.subr.bf16.mxu0 0
        %1892 = vmatpush1.bf16.msra.mxu0 %v1883
        %1893 = vmatprep.subr.bf16.mxu0 0
        %1894 = vmatpush1.bf16.msra.mxu0 %v1884
        %1895 = vmatprep.subr.bf16.mxu0 0
        %1896 = vmatpush1.bf16.msra.mxu0 0
        %1897 = vmatprep.subr.bf16.mxu0 0
        %1898 = vmatpush1.bf16.msra.mxu0 0
        %1899 = vmatprep.subr.bf16.mxu0 0
        %1900 = vmatpush1.bf16.msra.mxu0 0
        %1901 = vmatprep.subr.bf16.mxu0 0
        %1902 = vmatpush1.bf16.msra.mxu0 0
        %1903 = vmatprep.subr.bf16.mxu0 0
        %1904 = vmatpush1.bf16.msra.mxu0 0
        %1905 = vmatprep.subr.bf16.mxu0 0
        %1906 = vmatpush1.bf16.msra.mxu0 0
        %1907 = vmatprep.subr.bf16.mxu0 0
        %1908 = vmatpush1.bf16.msra.mxu0 0
        %1909 = vmatprep.subr.bf16.mxu0 0
        %1910 = vmatpush1.bf16.msra.mxu0 0
        %1911 = vmatprep.subr.bf16.mxu0 0
        %1912 = vmatpush1.bf16.msra.mxu0 0
        %1913 = vmatprep.subr.bf16.mxu0 0
        %1914 = vmatpush1.bf16.msra.mxu0 0
        %1915 = vmatprep.subr.bf16.mxu0 0
        %1916 = vmatpush1.bf16.msra.mxu0 0
        %1917 = vmatprep.subr.bf16.mxu0 0
        %1918 = vmatpush1.bf16.msra.mxu0 0
        %1919 = vmatprep.subr.bf16.mxu0 0
        %1920 = vmatpush1.bf16.msra.mxu0 0
        %1921 = vmatprep.subr.bf16.mxu0 0
        %1922 = vmatpush1.bf16.msra.mxu0 0
        %1923 = vmatprep.mubr.bf16.mxu0 0
        %1924 = vmatmul.mubr.bf16.gmra.mrb[0].mxu0 %v1889
        %v1925 = vpop.f32.mrb[0].mxu0
        %v1926 = vadd.f32 %v1873, %v1925
        %v1927 = vpop.f32.mrb[0].mxu0
        %v1928 = vpop.f32.mrb[0].mxu0
        %v1929 = vpop.f32.mrb[0].mxu0
        %1930 = vdwg.mxu0
        %v1931 = vadd.f32 %v1926, %v1135
        %1932 = vadd.xlane.f32.xlu0 %v1931
        %v1933 = vpop.xlane.xlu0 %1932
        %v1934 = vmul.f32 %v1933, 0.03125
        %v1935 = vmul.f32 %v1931, %v1931
        %1936 = vadd.xlane.f32.xlu0 %v1935
        %v1937 = vpop.xlane.xlu0 %1936
        %v1938 = vmul.f32 %v1937, 0.03125
        %v1939 = vmul.f32 %v1934, %v1934
        %v1940 = vsub.f32 %v1938, %v1939
        %v1941 = vsub.f32 %v1931, %v1934
        %v1942 = vadd.f32 %v1940, 1e-05
        %v1943 = vrsqrt.pop %v1942
        %v1944 = vmul.f32 %v1941, %v1943
        %v1946 = vlaneseq
        %v1947 = vshrl.u32 %v1946, 7
        %v1948 = vsub.s32 0, %v1947
        %v1949 = vrot.slane %v1138, %v1948
        %v1951 = vmul.f32 %v1944, %v1949
        %v1953 = vlaneseq
        %v1954 = vshrl.u32 %v1953, 7
        %v1955 = vsub.s32 0, %v1954
        %v1956 = vrot.slane %v1139, %v1955
        %v1958 = vadd.f32 %v1951, %v1956
        %v1959 = vld [vmem:[#allocation20] sm:$0xf]
        %v1960 = vld [vmem:[#allocation20 + $0x4] sm:$0xf]
        %v1961 = vld [vmem:[#allocation20 + $0x8] sm:$0xf]
        %v1962 = vld [vmem:[#allocation20 + $0xc] sm:$0xf]
        %v1963 = vld [vmem:[#allocation20 + $0x10] sm:$0xf]
        %v1964 = vld [vmem:[#allocation20 + $0x14] sm:$0xf]
        %v1965 = vld [vmem:[#allocation20 + $0x18] sm:$0xf]
        %v1966 = vld [vmem:[#allocation20 + $0x1c] sm:$0xf]
        %v1967 = vld [vmem:[#allocation20 + $0x20] sm:$0xf]
        %v1968 = vld [vmem:[#allocation20 + $0x24] sm:$0xf]
        %v1969 = vld [vmem:[#allocation20 + $0x28] sm:$0xf]
        %v1970 = vld [vmem:[#allocation20 + $0x2c] sm:$0xf]
        %v1971 = vld [vmem:[#allocation20 + $0x30] sm:$0xf]
        %v1972 = vld [vmem:[#allocation20 + $0x34] sm:$0xf]
        %v1973 = vld [vmem:[#allocation20 + $0x38] sm:$0xf]
        %v1974 = vld [vmem:[#allocation20 + $0x3c] sm:$0xf]
        %v1975 = vld [vmem:[#allocation22] sm:$0x1]
        %v1976 = vld [vmem:[#allocation23] sm:$0xff]
        %v1977 = vld [vmem:[#allocation23 + $0x8] sm:$0xff]
        %v1978 = vld [vmem:[#allocation23 + $0x10] sm:$0xff]
        %v1979 = vld [vmem:[#allocation23 + $0x18] sm:$0xff]
        %v1980 = vld [vmem:[#allocation23 + $0x20] sm:$0xff]
        %v1981 = vld [vmem:[#allocation23 + $0x28] sm:$0xff]
        %v1982 = vld [vmem:[#allocation23 + $0x30] sm:$0xff]
        %v1983 = vld [vmem:[#allocation23 + $0x38] sm:$0xff]
        %v1984 = vld [vmem:[#allocation23 + $0x40] sm:$0xff]
        %v1985 = vld [vmem:[#allocation23 + $0x48] sm:$0xff]
        %v1986 = vld [vmem:[#allocation23 + $0x50] sm:$0xff]
        %v1987 = vld [vmem:[#allocation23 + $0x58] sm:$0xff]
        %v1988 = vld [vmem:[#allocation23 + $0x60] sm:$0xff]
        %v1989 = vld [vmem:[#allocation23 + $0x68] sm:$0xff]
        %v1990 = vld [vmem:[#allocation23 + $0x70] sm:$0xff]
        %v1991 = vld [vmem:[#allocation23 + $0x78] sm:$0xff]
        %v1992 = vld [vmem:[#allocation25] sm:$0x3]
        %v1993 = vld [vmem:[#allocation26] sm:$0xf]
        %v1994 = vld [vmem:[#allocation26 + $0x4] sm:$0xf]
        %v1995 = vld [vmem:[#allocation26 + $0x8] sm:$0xf]
        %v1996 = vld [vmem:[#allocation26 + $0xc] sm:$0xf]
        %v1997 = vld [vmem:[#allocation28] sm:$0x1]
        %v1998 = vpack.c.bf16 %v1958, %v1958
        %v2000 = vlaneseq
        %v2001 = vshrl.u32 %v2000, 7
        %v2002 = vsub.s32 0, %v2001
        %v2003 = vrot.slane %v1975, %v2002
        %v2021 = vunpack.c.l.b16 %v1959
        %v2022 = vunpack.c.l.b16 %v1960
        %v2023 = vunpack.c.l.b16 %v1961
        %v2024 = vunpack.c.l.b16 %v1962
        %v2025 = vunpack.c.l.b16 %v1963
        %v2026 = vunpack.c.l.b16 %v1964
        %v2027 = vunpack.c.l.b16 %v1965
        %v2028 = vunpack.c.l.b16 %v1966
        %v2029 = vunpack.c.l.b16 %v1967
        %v2030 = vunpack.c.l.b16 %v1968
        %v2031 = vunpack.c.l.b16 %v1969
        %v2032 = vunpack.c.l.b16 %v1970
        %v2033 = vunpack.c.l.b16 %v1971
        %v2034 = vunpack.c.l.b16 %v1972
        %v2035 = vunpack.c.l.b16 %v1973
        %v2036 = vunpack.c.l.b16 %v1974
        %v2037 = vpack.c.b16 %v2022, %v2021
        %v2038 = vpack.c.b16 %v2024, %v2023
        %v2039 = vpack.c.b16 %v2026, %v2025
        %v2040 = vpack.c.b16 %v2028, %v2027
        %v2041 = vpack.c.b16 %v2030, %v2029
        %v2042 = vpack.c.b16 %v2032, %v2031
        %v2043 = vpack.c.b16 %v2034, %v2033
        %v2044 = vpack.c.b16 %v2036, %v2035
        %2053 = vmatprep.subr.bf16.mxu0 0
        %2054 = vmatpush1.bf16.msra.mxu0 %v2037
        %2055 = vmatprep.subr.bf16.mxu0 0
        %2056 = vmatpush1.bf16.msra.mxu0 %v2038
        %2057 = vmatprep.subr.bf16.mxu0 0
        %2058 = vmatpush1.bf16.msra.mxu0 %v2039
        %2059 = vmatprep.subr.bf16.mxu0 0
        %2060 = vmatpush1.bf16.msra.mxu0 %v2040
        %2061 = vmatprep.subr.bf16.mxu0 0
        %2062 = vmatpush1.bf16.msra.mxu0 %v2041
        %2063 = vmatprep.subr.bf16.mxu0 0
        %2064 = vmatpush1.bf16.msra.mxu0 %v2042
        %2065 = vmatprep.subr.bf16.mxu0 0
        %2066 = vmatpush1.bf16.msra.mxu0 %v2043
        %2067 = vmatprep.subr.bf16.mxu0 0
        %2068 = vmatpush1.bf16.msra.mxu0 %v2044
        %2069 = vmatprep.subr.bf16.mxu0 0
        %2070 = vmatpush1.bf16.msra.mxu0 0
        %2071 = vmatprep.subr.bf16.mxu0 0
        %2072 = vmatpush1.bf16.msra.mxu0 0
        %2073 = vmatprep.subr.bf16.mxu0 0
        %2074 = vmatpush1.bf16.msra.mxu0 0
        %2075 = vmatprep.subr.bf16.mxu0 0
        %2076 = vmatpush1.bf16.msra.mxu0 0
        %2077 = vmatprep.subr.bf16.mxu0 0
        %2078 = vmatpush1.bf16.msra.mxu0 0
        %2079 = vmatprep.subr.bf16.mxu0 0
        %2080 = vmatpush1.bf16.msra.mxu0 0
        %2081 = vmatprep.subr.bf16.mxu0 0
        %2082 = vmatpush1.bf16.msra.mxu0 0
        %2083 = vmatprep.subr.bf16.mxu0 0
        %2084 = vmatpush1.bf16.msra.mxu0 0
        %2085 = vmatprep.mubr.bf16.mxu0 0
        %2086 = vmatmul.mubr.bf16.gmra.mrb[0].mxu0 %v1998
        %v2087 = vpop.f32.mrb[0].mxu0
        %v2088 = vadd.f32 %v2003, %v2087
        %v2089 = vpop.f32.mrb[0].mxu0
        %v2090 = vpop.f32.mrb[0].mxu0
        %v2091 = vpop.f32.mrb[0].mxu0
        %2092 = vdwg.mxu0
        %v2093 = vpack.c.bf16 %v1133, %v1133
        %v2095 = vlaneseq
        %v2096 = vshrl.u32 %v2095, 7
        %v2097 = vsub.s32 0, %v2096
        %v2098 = vrot.slane %v1992, %v2097
        %v2099 = vlaneseq
        %v2100 = vshrl.u32 %v2099, 7
        %v2101 = vsub.s32 1, %v2100
        %v2102 = vrot.slane %v1992, %v2101
        %v2121 = vunpack.c.l.b16 %v1976
        %v2122 = vunpack.c.h.b16 %v1976
        %v2123 = vunpack.c.l.b16 %v1977
        %v2124 = vunpack.c.h.b16 %v1977
        %v2125 = vunpack.c.l.b16 %v1978
        %v2126 = vunpack.c.h.b16 %v1978
        %v2127 = vunpack.c.l.b16 %v1979
        %v2128 = vunpack.c.h.b16 %v1979
        %v2129 = vunpack.c.l.b16 %v1980
        %v2130 = vunpack.c.h.b16 %v1980
        %v2131 = vunpack.c.l.b16 %v1981
        %v2132 = vunpack.c.h.b16 %v1981
        %v2133 = vunpack.c.l.b16 %v1982
        %v2134 = vunpack.c.h.b16 %v1982
        %v2135 = vunpack.c.l.b16 %v1983
        %v2136 = vunpack.c.h.b16 %v1983
        %v2137 = vunpack.c.l.b16 %v1984
        %v2138 = vunpack.c.h.b16 %v1984
        %v2139 = vunpack.c.l.b16 %v1985
        %v2140 = vunpack.c.h.b16 %v1985
        %v2141 = vunpack.c.l.b16 %v1986
        %v2142 = vunpack.c.h.b16 %v1986
        %v2143 = vunpack.c.l.b16 %v1987
        %v2144 = vunpack.c.h.b16 %v1987
        %v2145 = vunpack.c.l.b16 %v1988
        %v2146 = vunpack.c.h.b16 %v1988
        %v2147 = vunpack.c.l.b16 %v1989
        %v2148 = vunpack.c.h.b16 %v1989
        %v2149 = vunpack.c.l.b16 %v1990
        %v2150 = vunpack.c.h.b16 %v1990
        %v2151 = vunpack.c.l.b16 %v1991
        %v2152 = vunpack.c.h.b16 %v1991
        %v2153 = vpack.c.b16 %v2123, %v2121
        %v2154 = vpack.c.b16 %v2124, %v2122
        %v2155 = vpack.c.b16 %v2127, %v2125
        %v2156 = vpack.c.b16 %v2128, %v2126
        %v2157 = vpack.c.b16 %v2131, %v2129
        %v2158 = vpack.c.b16 %v2132, %v2130
        %v2159 = vpack.c.b16 %v2135, %v2133
        %v2160 = vpack.c.b16 %v2136, %v2134
        %v2161 = vpack.c.b16 %v2139, %v2137
        %v2162 = vpack.c.b16 %v2140, %v2138
        %v2163 = vpack.c.b16 %v2143, %v2141
        %v2164 = vpack.c.b16 %v2144, %v2142
        %v2165 = vpack.c.b16 %v2147, %v2145
        %v2166 = vpack.c.b16 %v2148, %v2146
        %v2167 = vpack.c.b16 %v2151, %v2149
        %v2168 = vpack.c.b16 %v2152, %v2150
        %2185 = vmatprep.subr.bf16.mxu0 %v2154
        %2186 = vmatpush1.bf16.msra.mxu0 %v2153
        %2187 = vmatprep.subr.bf16.mxu0 %v2156
        %2188 = vmatpush1.bf16.msra.mxu0 %v2155
        %2189 = vmatprep.subr.bf16.mxu0 %v2158
        %2190 = vmatpush1.bf16.msra.mxu0 %v2157
        %2191 = vmatprep.subr.bf16.mxu0 %v2160
        %2192 = vmatpush1.bf16.msra.mxu0 %v2159
        %2193 = vmatprep.subr.bf16.mxu0 %v2162
        %2194 = vmatpush1.bf16.msra.mxu0 %v2161
        %2195 = vmatprep.subr.bf16.mxu0 %v2164
        %2196 = vmatpush1.bf16.msra.mxu0 %v2163
        %2197 = vmatprep.subr.bf16.mxu0 %v2166
        %2198 = vmatpush1.bf16.msra.mxu0 %v2165
        %2199 = vmatprep.subr.bf16.mxu0 %v2168
        %2200 = vmatpush1.bf16.msra.mxu0 %v2167
        %2201 = vmatprep.subr.bf16.mxu0 0
        %2202 = vmatpush1.bf16.msra.mxu0 0
        %2203 = vmatprep.subr.bf16.mxu0 0
        %2204 = vmatpush1.bf16.msra.mxu0 0
        %2205 = vmatprep.subr.bf16.mxu0 0
        %2206 = vmatpush1.bf16.msra.mxu0 0
        %2207 = vmatprep.subr.bf16.mxu0 0
        %2208 = vmatpush1.bf16.msra.mxu0 0
        %2209 = vmatprep.subr.bf16.mxu0 0
        %2210 = vmatpush1.bf16.msra.mxu0 0
        %2211 = vmatprep.subr.bf16.mxu0 0
        %2212 = vmatpush1.bf16.msra.mxu0 0
        %2213 = vmatprep.subr.bf16.mxu0 0
        %2214 = vmatpush1.bf16.msra.mxu0 0
        %2215 = vmatprep.subr.bf16.mxu0 0
        %2216 = vmatpush1.bf16.msra.mxu0 0
        %2217 = vmatprep.mubr.bf16.mxu0 0
        %2218 = vmatmul.mubr.bf16.gmra.mrb[0].mxu0 %v2093
        %v2219 = vpop.f32.mrb[0].mxu0
        %v2220 = vadd.f32 %v2098, %v2219
        %v2221 = vpop.f32.mrb[0].mxu0
        %v2222 = vadd.f32 %v2102, %v2221
        %v2223 = vpop.f32.mrb[0].mxu0
        %v2224 = vpop.f32.mrb[0].mxu0
        %2225 = vdwg.mxu0
        %v2226 = vmul.f32 %v2088, 0.35355338
        %v2227 = vpack.c.bf16 %v2226, %v2226
        %v2228 = vpack.c.bf16 %v2220, %v2220
        %v2229 = vpack.c.bf16 %v2222, %v2222
        %v2230 = vunpack.c.l.bf16 %v1137
        %v2232 = vsel %vm1412, %v2227, 0
        %v2235 = vsel %vm1412, %v2228, 0
        %2237 = vmatprep.subr.bf16.mxu0 0
        %2238 = vmatpush1.bf16.xpose.msra.mxu0 %v2235
        %2239 = vmatprep.subr.bf16.mxu0 0
        %2240 = vmatpush1.bf16.xpose.msra.mxu0 0
        %2241 = vmatprep.subr.bf16.mxu0 0
        %2242 = vmatpush1.bf16.xpose.msra.mxu0 0
        %2243 = vmatprep.subr.bf16.mxu0 0
        %2244 = vmatpush1.bf16.xpose.msra.mxu0 0
        %2245 = vmatprep.subr.bf16.mxu0 0
        %2246 = vmatpush1.bf16.xpose.msra.mxu0 0
        %2247 = vmatprep.subr.bf16.mxu0 0
        %2248 = vmatpush1.bf16.xpose.msra.mxu0 0
        %2249 = vmatprep.subr.bf16.mxu0 0
        %2250 = vmatpush1.bf16.xpose.msra.mxu0 0
        %2251 = vmatprep.subr.bf16.mxu0 0
        %2252 = vmatpush1.bf16.xpose.msra.mxu0 0
        %2253 = vmatprep.subr.bf16.mxu0 0
        %2254 = vmatpush1.bf16.xpose.msra.mxu0 0
        %2255 = vmatprep.subr.bf16.mxu0 0
        %2256 = vmatpush1.bf16.xpose.msra.mxu0 0
        %2257 = vmatprep.subr.bf16.mxu0 0
        %2258 = vmatpush1.bf16.xpose.msra.mxu0 0
        %2259 = vmatprep.subr.bf16.mxu0 0
        %2260 = vmatpush1.bf16.xpose.msra.mxu0 0
        %2261 = vmatprep.subr.bf16.mxu0 0
        %2262 = vmatpush1.bf16.xpose.msra.mxu0 0
        %2263 = vmatprep.subr.bf16.mxu0 0
        %2264 = vmatpush1.bf16.xpose.msra.mxu0 0
        %2265 = vmatprep.subr.bf16.mxu0 0
        %2266 = vmatpush1.bf16.xpose.msra.mxu0 0
        %2267 = vmatprep.subr.bf16.mxu0 0
        %2268 = vmatpush1.bf16.xpose.msra.mxu0 0
        %2269 = vmatprep.mubr.bf16.mxu0 0
        %2270 = vmatmul.mubr.bf16.gmra.mrb[0].mxu0 %v2232
        %v2271 = vpop.f32.mrb[0].mxu0
        %v2272 = vadd.f32 %v2230, %v2271
        %v2273 = vpop.f32.mrb[0].mxu0
        %v2274 = vpop.f32.mrb[0].mxu0
        %v2275 = vpop.f32.mrb[0].mxu0
        %2276 = vdwg.mxu0
        %v2277 = vsel %vm1412, %v2272, -inf
        %2278 = vmax.xlane.f32.xlu0 %v2277
        %v2279 = vpop.xlane.xlu0 %2278
        %v2280 = vsub.f32 %v2272, %v2279
        %v2281 = vmul.f32 %v2280, 1.442695
        %v2282 = vpow.pop %v2281
        %v2283 = vsel %vm1412, %v2282, 0.0
        %2284 = vadd.xlane.f32.xlu0 %v2283
        %v2285 = vpop.xlane.xlu0 %2284
        %v2286 = vrcp.pop %v2285
        %v2287 = vmul.f32 %v2282, %v2286
        %v2288 = vpack.c.bf16 %v2287, %v2287
        %v2290 = vsel %vm1412, %v2288, 0
        %v2293 = vsel %vm1474, %v2229, 0
        %2295 = vmatprep.subr.bf16.mxu0 0
        %2296 = vmatpush1.bf16.msra.mxu0 %v2293
        %2297 = vmatprep.subr.bf16.mxu0 0
        %2298 = vmatpush1.bf16.msra.mxu0 0
        %2299 = vmatprep.subr.bf16.mxu0 0
        %2300 = vmatpush1.bf16.msra.mxu0 0
        %2301 = vmatprep.subr.bf16.mxu0 0
        %2302 = vmatpush1.bf16.msra.mxu0 0
        %2303 = vmatprep.subr.bf16.mxu0 0
        %2304 = vmatpush1.bf16.msra.mxu0 0
        %2305 = vmatprep.subr.bf16.mxu0 0
        %2306 = vmatpush1.bf16.msra.mxu0 0
        %2307 = vmatprep.subr.bf16.mxu0 0
        %2308 = vmatpush1.bf16.msra.mxu0 0
        %2309 = vmatprep.subr.bf16.mxu0 0
        %2310 = vmatpush1.bf16.msra.mxu0 0
        %2311 = vmatprep.subr.bf16.mxu0 0
        %2312 = vmatpush1.bf16.msra.mxu0 0
        %2313 = vmatprep.subr.bf16.mxu0 0
        %2314 = vmatpush1.bf16.msra.mxu0 0
        %2315 = vmatprep.subr.bf16.mxu0 0
        %2316 = vmatpush1.bf16.msra.mxu0 0
        %2317 = vmatprep.subr.bf16.mxu0 0
        %2318 = vmatpush1.bf16.msra.mxu0 0
        %2319 = vmatprep.subr.bf16.mxu0 0
        %2320 = vmatpush1.bf16.msra.mxu0 0
        %2321 = vmatprep.subr.bf16.mxu0 0
        %2322 = vmatpush1.bf16.msra.mxu0 0
        %2323 = vmatprep.subr.bf16.mxu0 0
        %2324 = vmatpush1.bf16.msra.mxu0 0
        %2325 = vmatprep.subr.bf16.mxu0 0
        %2326 = vmatpush1.bf16.msra.mxu0 0
        %2327 = vmatprep.mubr.bf16.mxu0 0
        %2328 = vmatmul.mubr.bf16.gmra.mrb[0].mxu0 %v2290
        %v2329 = vpop.f32.mrb[0].mxu0
        %v2330 = vadd.f32 0.0, %v2329
        %v2331 = vpop.f32.mrb[0].mxu0
        %v2332 = vpop.f32.mrb[0].mxu0
        %v2333 = vpop.f32.mrb[0].mxu0
        %2334 = vdwg.mxu0
        %2336 = vrot.lane.b32.xlu0 %v2227, 120
        %v2337 = vpop.permute.xlu0 %2336
        %2339 = vrot.lane.b32.xlu0 %v2228, 120
        %v2340 = vpop.permute.xlu0 %2339
        %v2342 = vsel %vm1412, %v2337, 0
        %v2345 = vsel %vm1412, %v2340, 0
        %2347 = vmatprep.subr.bf16.mxu0 0
        %2348 = vmatpush1.bf16.xpose.msra.mxu0 %v2345
        %2349 = vmatprep.subr.bf16.mxu0 0
        %2350 = vmatpush1.bf16.xpose.msra.mxu0 0
        %2351 = vmatprep.subr.bf16.mxu0 0
        %2352 = vmatpush1.bf16.xpose.msra.mxu0 0
        %2353 = vmatprep.subr.bf16.mxu0 0
        %2354 = vmatpush1.bf16.xpose.msra.mxu0 0
        %2355 = vmatprep.subr.bf16.mxu0 0
        %2356 = vmatpush1.bf16.xpose.msra.mxu0 0
        %2357 = vmatprep.subr.bf16.mxu0 0
        %2358 = vmatpush1.bf16.xpose.msra.mxu0 0
        %2359 = vmatprep.subr.bf16.mxu0 0
        %2360 = vmatpush1.bf16.xpose.msra.mxu0 0
        %2361 = vmatprep.subr.bf16.mxu0 0
        %2362 = vmatpush1.bf16.xpose.msra.mxu0 0
        %2363 = vmatprep.subr.bf16.mxu0 0
        %2364 = vmatpush1.bf16.xpose.msra.mxu0 0
        %2365 = vmatprep.subr.bf16.mxu0 0
        %2366 = vmatpush1.bf16.xpose.msra.mxu0 0
        %2367 = vmatprep.subr.bf16.mxu0 0
        %2368 = vmatpush1.bf16.xpose.msra.mxu0 0
        %2369 = vmatprep.subr.bf16.mxu0 0
        %2370 = vmatpush1.bf16.xpose.msra.mxu0 0
        %2371 = vmatprep.subr.bf16.mxu0 0
        %2372 = vmatpush1.bf16.xpose.msra.mxu0 0
        %2373 = vmatprep.subr.bf16.mxu0 0
        %2374 = vmatpush1.bf16.xpose.msra.mxu0 0
        %2375 = vmatprep.subr.bf16.mxu0 0
        %2376 = vmatpush1.bf16.xpose.msra.mxu0 0
        %2377 = vmatprep.subr.bf16.mxu0 0
        %2378 = vmatpush1.bf16.xpose.msra.mxu0 0
        %2379 = vmatprep.mubr.bf16.mxu0 0
        %2380 = vmatmul.mubr.bf16.gmra.mrb[0].mxu0 %v2342
        %v2381 = vpop.f32.mrb[0].mxu0
        %v2382 = vadd.f32 %v2230, %v2381
        %v2383 = vpop.f32.mrb[0].mxu0
        %v2384 = vpop.f32.mrb[0].mxu0
        %v2385 = vpop.f32.mrb[0].mxu0
        %2386 = vdwg.mxu0
        %v2387 = vsel %vm1412, %v2382, -inf
        %2388 = vmax.xlane.f32.xlu0 %v2387
        %v2389 = vpop.xlane.xlu0 %2388
        %v2390 = vsub.f32 %v2382, %v2389
        %v2391 = vmul.f32 %v2390, 1.442695
        %v2392 = vpow.pop %v2391
        %v2393 = vsel %vm1412, %v2392, 0.0
        %2394 = vadd.xlane.f32.xlu0 %v2393
        %v2395 = vpop.xlane.xlu0 %2394
        %v2396 = vrcp.pop %v2395
        %v2397 = vmul.f32 %v2392, %v2396
        %v2398 = vpack.c.bf16 %v2397, %v2397
        %2400 = vrot.lane.b32.xlu0 %v2229, 120
        %v2401 = vpop.permute.xlu0 %2400
        %v2403 = vsel %vm1412, %v2398, 0
        %v2406 = vsel %vm1474, %v2401, 0
        %2408 = vmatprep.subr.bf16.mxu0 0
        %2409 = vmatpush1.bf16.msra.mxu0 %v2406
        %2410 = vmatprep.subr.bf16.mxu0 0
        %2411 = vmatpush1.bf16.msra.mxu0 0
        %2412 = vmatprep.subr.bf16.mxu0 0
        %2413 = vmatpush1.bf16.msra.mxu0 0
        %2414 = vmatprep.subr.bf16.mxu0 0
        %2415 = vmatpush1.bf16.msra.mxu0 0
        %2416 = vmatprep.subr.bf16.mxu0 0
        %2417 = vmatpush1.bf16.msra.mxu0 0
        %2418 = vmatprep.subr.bf16.mxu0 0
        %2419 = vmatpush1.bf16.msra.mxu0 0
        %2420 = vmatprep.subr.bf16.mxu0 0
        %2421 = vmatpush1.bf16.msra.mxu0 0
        %2422 = vmatprep.subr.bf16.mxu0 0
        %2423 = vmatpush1.bf16.msra.mxu0 0
        %2424 = vmatprep.subr.bf16.mxu0 0
        %2425 = vmatpush1.bf16.msra.mxu0 0
        %2426 = vmatprep.subr.bf16.mxu0 0
        %2427 = vmatpush1.bf16.msra.mxu0 0
        %2428 = vmatprep.subr.bf16.mxu0 0
        %2429 = vmatpush1.bf16.msra.mxu0 0
        %2430 = vmatprep.subr.bf16.mxu0 0
        %2431 = vmatpush1.bf16.msra.mxu0 0
        %2432 = vmatprep.subr.bf16.mxu0 0
        %2433 = vmatpush1.bf16.msra.mxu0 0
        %2434 = vmatprep.subr.bf16.mxu0 0
        %2435 = vmatpush1.bf16.msra.mxu0 0
        %2436 = vmatprep.subr.bf16.mxu0 0
        %2437 = vmatpush1.bf16.msra.mxu0 0
        %2438 = vmatprep.subr.bf16.mxu0 0
        %2439 = vmatpush1.bf16.msra.mxu0 0
        %2440 = vmatprep.mubr.bf16.mxu0 0
        %2441 = vmatmul.mubr.bf16.gmra.mrb[0].mxu0 %v2403
        %v2442 = vpop.f32.mrb[0].mxu0
        %v2443 = vadd.f32 0.0, %v2442
        %v2444 = vpop.f32.mrb[0].mxu0
        %v2445 = vpop.f32.mrb[0].mxu0
        %v2446 = vpop.f32.mrb[0].mxu0
        %2447 = vdwg.mxu0
        %2448 = vrot.lane.b32.xlu0 %v2227, 112
        %v2449 = vpop.permute.xlu0 %2448
        %2450 = vrot.lane.b32.xlu0 %v2228, 112
        %v2451 = vpop.permute.xlu0 %2450
        %v2453 = vsel %vm1412, %v2449, 0
        %v2456 = vsel %vm1412, %v2451, 0
        %2458 = vmatprep.subr.bf16.mxu0 0
        %2459 = vmatpush1.bf16.xpose.msra.mxu0 %v2456
        %2460 = vmatprep.subr.bf16.mxu0 0
        %2461 = vmatpush1.bf16.xpose.msra.mxu0 0
        %2462 = vmatprep.subr.bf16.mxu0 0
        %2463 = vmatpush1.bf16.xpose.msra.mxu0 0
        %2464 = vmatprep.subr.bf16.mxu0 0
        %2465 = vmatpush1.bf16.xpose.msra.mxu0 0
        %2466 = vmatprep.subr.bf16.mxu0 0
        %2467 = vmatpush1.bf16.xpose.msra.mxu0 0
        %2468 = vmatprep.subr.bf16.mxu0 0
        %2469 = vmatpush1.bf16.xpose.msra.mxu0 0
        %2470 = vmatprep.subr.bf16.mxu0 0
        %2471 = vmatpush1.bf16.xpose.msra.mxu0 0
        %2472 = vmatprep.subr.bf16.mxu0 0
        %2473 = vmatpush1.bf16.xpose.msra.mxu0 0
        %2474 = vmatprep.subr.bf16.mxu0 0
        %2475 = vmatpush1.bf16.xpose.msra.mxu0 0
        %2476 = vmatprep.subr.bf16.mxu0 0
        %2477 = vmatpush1.bf16.xpose.msra.mxu0 0
        %2478 = vmatprep.subr.bf16.mxu0 0
        %2479 = vmatpush1.bf16.xpose.msra.mxu0 0
        %2480 = vmatprep.subr.bf16.mxu0 0
        %2481 = vmatpush1.bf16.xpose.msra.mxu0 0
        %2482 = vmatprep.subr.bf16.mxu0 0
        %2483 = vmatpush1.bf16.xpose.msra.mxu0 0
        %2484 = vmatprep.subr.bf16.mxu0 0
        %2485 = vmatpush1.bf16.xpose.msra.mxu0 0
        %2486 = vmatprep.subr.bf16.mxu0 0
        %2487 = vmatpush1.bf16.xpose.msra.mxu0 0
        %2488 = vmatprep.subr.bf16.mxu0 0
        %2489 = vmatpush1.bf16.xpose.msra.mxu0 0
        %2490 = vmatprep.mubr.bf16.mxu0 0
        %2491 = vmatmul.mubr.bf16.gmra.mrb[0].mxu0 %v2453
        %v2492 = vpop.f32.mrb[0].mxu0
        %v2493 = vadd.f32 %v2230, %v2492
        %v2494 = vpop.f32.mrb[0].mxu0
        %v2495 = vpop.f32.mrb[0].mxu0
        %v2496 = vpop.f32.mrb[0].mxu0
        %2497 = vdwg.mxu0
        %v2498 = vsel %vm1412, %v2493, -inf
        %2499 = vmax.xlane.f32.xlu0 %v2498
        %v2500 = vpop.xlane.xlu0 %2499
        %v2501 = vsub.f32 %v2493, %v2500
        %v2502 = vmul.f32 %v2501, 1.442695
        %v2503 = vpow.pop %v2502
        %v2504 = vsel %vm1412, %v2503, 0.0
        %2505 = vadd.xlane.f32.xlu0 %v2504
        %v2506 = vpop.xlane.xlu0 %2505
        %v2507 = vrcp.pop %v2506
        %v2508 = vmul.f32 %v2503, %v2507
        %v2509 = vpack.c.bf16 %v2508, %v2508
        %2510 = vrot.lane.b32.xlu0 %v2229, 112
        %v2511 = vpop.permute.xlu0 %2510
        %v2513 = vsel %vm1412, %v2509, 0
        %v2516 = vsel %vm1474, %v2511, 0
        %2518 = vmatprep.subr.bf16.mxu0 0
        %2519 = vmatpush1.bf16.msra.mxu0 %v2516
        %2520 = vmatprep.subr.bf16.mxu0 0
        %2521 = vmatpush1.bf16.msra.mxu0 0
        %2522 = vmatprep.subr.bf16.mxu0 0
        %2523 = vmatpush1.bf16.msra.mxu0 0
        %2524 = vmatprep.subr.bf16.mxu0 0
        %2525 = vmatpush1.bf16.msra.mxu0 0
        %2526 = vmatprep.subr.bf16.mxu0 0
        %2527 = vmatpush1.bf16.msra.mxu0 0
        %2528 = vmatprep.subr.bf16.mxu0 0
        %2529 = vmatpush1.bf16.msra.mxu0 0
        %2530 = vmatprep.subr.bf16.mxu0 0
        %2531 = vmatpush1.bf16.msra.mxu0 0
        %2532 = vmatprep.subr.bf16.mxu0 0
        %2533 = vmatpush1.bf16.msra.mxu0 0
        %2534 = vmatprep.subr.bf16.mxu0 0
        %2535 = vmatpush1.bf16.msra.mxu0 0
        %2536 = vmatprep.subr.bf16.mxu0 0
        %2537 = vmatpush1.bf16.msra.mxu0 0
        %2538 = vmatprep.subr.bf16.mxu0 0
        %2539 = vmatpush1.bf16.msra.mxu0 0
        %2540 = vmatprep.subr.bf16.mxu0 0
        %2541 = vmatpush1.bf16.msra.mxu0 0
        %2542 = vmatprep.subr.bf16.mxu0 0
        %2543 = vmatpush1.bf16.msra.mxu0 0
        %2544 = vmatprep.subr.bf16.mxu0 0
        %2545 = vmatpush1.bf16.msra.mxu0 0
        %2546 = vmatprep.subr.bf16.mxu0 0
        %2547 = vmatpush1.bf16.msra.mxu0 0
        %2548 = vmatprep.subr.bf16.mxu0 0
        %2549 = vmatpush1.bf16.msra.mxu0 0
        %2550 = vmatprep.mubr.bf16.mxu0 0
        %2551 = vmatmul.mubr.bf16.gmra.mrb[0].mxu0 %v2513
        %v2552 = vpop.f32.mrb[0].mxu0
        %v2553 = vadd.f32 0.0, %v2552
        %v2554 = vpop.f32.mrb[0].mxu0
        %v2555 = vpop.f32.mrb[0].mxu0
        %v2556 = vpop.f32.mrb[0].mxu0
        %2557 = vdwg.mxu0
        %2558 = vrot.lane.b32.xlu0 %v2227, 104
        %v2559 = vpop.permute.xlu0 %2558
        %2560 = vrot.lane.b32.xlu0 %v2228, 104
        %v2561 = vpop.permute.xlu0 %2560
        %v2563 = vsel %vm1412, %v2559, 0
        %v2566 = vsel %vm1412, %v2561, 0
        %2568 = vmatprep.subr.bf16.mxu0 0
        %2569 = vmatpush1.bf16.xpose.msra.mxu0 %v2566
        %2570 = vmatprep.subr.bf16.mxu0 0
        %2571 = vmatpush1.bf16.xpose.msra.mxu0 0
        %2572 = vmatprep.subr.bf16.mxu0 0
        %2573 = vmatpush1.bf16.xpose.msra.mxu0 0
        %2574 = vmatprep.subr.bf16.mxu0 0
        %2575 = vmatpush1.bf16.xpose.msra.mxu0 0
        %2576 = vmatprep.subr.bf16.mxu0 0
        %2577 = vmatpush1.bf16.xpose.msra.mxu0 0
        %2578 = vmatprep.subr.bf16.mxu0 0
        %2579 = vmatpush1.bf16.xpose.msra.mxu0 0
        %2580 = vmatprep.subr.bf16.mxu0 0
        %2581 = vmatpush1.bf16.xpose.msra.mxu0 0
        %2582 = vmatprep.subr.bf16.mxu0 0
        %2583 = vmatpush1.bf16.xpose.msra.mxu0 0
        %2584 = vmatprep.subr.bf16.mxu0 0
        %2585 = vmatpush1.bf16.xpose.msra.mxu0 0
        %2586 = vmatprep.subr.bf16.mxu0 0
        %2587 = vmatpush1.bf16.xpose.msra.mxu0 0
        %2588 = vmatprep.subr.bf16.mxu0 0
        %2589 = vmatpush1.bf16.xpose.msra.mxu0 0
        %2590 = vmatprep.subr.bf16.mxu0 0
        %2591 = vmatpush1.bf16.xpose.msra.mxu0 0
        %2592 = vmatprep.subr.bf16.mxu0 0
        %2593 = vmatpush1.bf16.xpose.msra.mxu0 0
        %2594 = vmatprep.subr.bf16.mxu0 0
        %2595 = vmatpush1.bf16.xpose.msra.mxu0 0
        %2596 = vmatprep.subr.bf16.mxu0 0
        %2597 = vmatpush1.bf16.xpose.msra.mxu0 0
        %2598 = vmatprep.subr.bf16.mxu0 0
        %2599 = vmatpush1.bf16.xpose.msra.mxu0 0
        %2600 = vmatprep.mubr.bf16.mxu0 0
        %2601 = vmatmul.mubr.bf16.gmra.mrb[0].mxu0 %v2563
        %v2602 = vpop.f32.mrb[0].mxu0
        %v2603 = vadd.f32 %v2230, %v2602
        %v2604 = vpop.f32.mrb[0].mxu0
        %v2605 = vpop.f32.mrb[0].mxu0
        %v2606 = vpop.f32.mrb[0].mxu0
        %2607 = vdwg.mxu0
        %v2608 = vsel %vm1412, %v2603, -inf
        %2609 = vmax.xlane.f32.xlu0 %v2608
        %v2610 = vpop.xlane.xlu0 %2609
        %v2611 = vsub.f32 %v2603, %v2610
        %v2612 = vmul.f32 %v2611, 1.442695
        %v2613 = vpow.pop %v2612
        %v2614 = vsel %vm1412, %v2613, 0.0
        %2615 = vadd.xlane.f32.xlu0 %v2614
        %v2616 = vpop.xlane.xlu0 %2615
        %v2617 = vrcp.pop %v2616
        %v2618 = vmul.f32 %v2613, %v2617
        %v2619 = vpack.c.bf16 %v2618, %v2618
        %2620 = vrot.lane.b32.xlu0 %v2229, 104
        %v2621 = vpop.permute.xlu0 %2620
        %v2623 = vsel %vm1412, %v2619, 0
        %v2626 = vsel %vm1474, %v2621, 0
        %2628 = vmatprep.subr.bf16.mxu0 0
        %2629 = vmatpush1.bf16.msra.mxu0 %v2626
        %2630 = vmatprep.subr.bf16.mxu0 0
        %2631 = vmatpush1.bf16.msra.mxu0 0
        %2632 = vmatprep.subr.bf16.mxu0 0
        %2633 = vmatpush1.bf16.msra.mxu0 0
        %2634 = vmatprep.subr.bf16.mxu0 0
        %2635 = vmatpush1.bf16.msra.mxu0 0
        %2636 = vmatprep.subr.bf16.mxu0 0
        %2637 = vmatpush1.bf16.msra.mxu0 0
        %2638 = vmatprep.subr.bf16.mxu0 0
        %2639 = vmatpush1.bf16.msra.mxu0 0
        %2640 = vmatprep.subr.bf16.mxu0 0
        %2641 = vmatpush1.bf16.msra.mxu0 0
        %2642 = vmatprep.subr.bf16.mxu0 0
        %2643 = vmatpush1.bf16.msra.mxu0 0
        %2644 = vmatprep.subr.bf16.mxu0 0
        %2645 = vmatpush1.bf16.msra.mxu0 0
        %2646 = vmatprep.subr.bf16.mxu0 0
        %2647 = vmatpush1.bf16.msra.mxu0 0
        %2648 = vmatprep.subr.bf16.mxu0 0
        %2649 = vmatpush1.bf16.msra.mxu0 0
        %2650 = vmatprep.subr.bf16.mxu0 0
        %2651 = vmatpush1.bf16.msra.mxu0 0
        %2652 = vmatprep.subr.bf16.mxu0 0
        %2653 = vmatpush1.bf16.msra.mxu0 0
        %2654 = vmatprep.subr.bf16.mxu0 0
        %2655 = vmatpush1.bf16.msra.mxu0 0
        %2656 = vmatprep.subr.bf16.mxu0 0
        %2657 = vmatpush1.bf16.msra.mxu0 0
        %2658 = vmatprep.subr.bf16.mxu0 0
        %2659 = vmatpush1.bf16.msra.mxu0 0
        %2660 = vmatprep.mubr.bf16.mxu0 0
        %2661 = vmatmul.mubr.bf16.gmra.mrb[0].mxu0 %v2623
        %v2662 = vpop.f32.mrb[0].mxu0
        %v2663 = vadd.f32 0.0, %v2662
        %v2664 = vpop.f32.mrb[0].mxu0
        %v2665 = vpop.f32.mrb[0].mxu0
        %v2666 = vpop.f32.mrb[0].mxu0
        %2667 = vdwg.mxu0
        %2669 = vrot.lane.b32.xlu0 %v2443, 8
        %v2670 = vpop.permute.xlu0 %2669
        %2673 = vrot.lane.b32.xlu0 %v2553, 16
        %v2674 = vpop.permute.xlu0 %2673
        %2677 = vrot.lane.b32.xlu0 %v2663, 24
        %v2678 = vpop.permute.xlu0 %2677
        %v2680 = vsel %vm1412, %v2330, %v2670
        %v2681 = vsel %vm1864, %v2680, %v2674
        %v2682 = vsel %vm1866, %v2681, %v2678
        %v2683 = vpack.c.bf16 %v2682, %v2682
        %v2685 = vlaneseq
        %v2686 = vshrl.u32 %v2685, 7
        %v2687 = vsub.s32 0, %v2686
        %v2688 = vrot.slane %v1997, %v2687
        %v2694 = vunpack.c.l.b16 %v1993
        %v2695 = vunpack.c.l.b16 %v1994
        %v2696 = vunpack.c.l.b16 %v1995
        %v2697 = vunpack.c.l.b16 %v1996
        %v2698 = vpack.c.b16 %v2695, %v2694
        %v2699 = vpack.c.b16 %v2697, %v2696
        %v2703 = vsel %vm1887, %v2683, 0
        %2705 = vmatprep.subr.bf16.mxu0 0
        %2706 = vmatpush1.bf16.msra.mxu0 %v2698
        %2707 = vmatprep.subr.bf16.mxu0 0
        %2708 = vmatpush1.bf16.msra.mxu0 %v2699
        %2709 = vmatprep.subr.bf16.mxu0 0
        %2710 = vmatpush1.bf16.msra.mxu0 0
        %2711 = vmatprep.subr.bf16.mxu0 0
        %2712 = vmatpush1.bf16.msra.mxu0 0
        %2713 = vmatprep.subr.bf16.mxu0 0
        %2714 = vmatpush1.bf16.msra.mxu0 0
        %2715 = vmatprep.subr.bf16.mxu0 0
        %2716 = vmatpush1.bf16.msra.mxu0 0
        %2717 = vmatprep.subr.bf16.mxu0 0
        %2718 = vmatpush1.bf16.msra.mxu0 0
        %2719 = vmatprep.subr.bf16.mxu0 0
        %2720 = vmatpush1.bf16.msra.mxu0 0
        %2721 = vmatprep.subr.bf16.mxu0 0
        %2722 = vmatpush1.bf16.msra.mxu0 0
        %2723 = vmatprep.subr.bf16.mxu0 0
        %2724 = vmatpush1.bf16.msra.mxu0 0
        %2725 = vmatprep.subr.bf16.mxu0 0
        %2726 = vmatpush1.bf16.msra.mxu0 0
        %2727 = vmatprep.subr.bf16.mxu0 0
        %2728 = vmatpush1.bf16.msra.mxu0 0
        %2729 = vmatprep.subr.bf16.mxu0 0
        %2730 = vmatpush1.bf16.msra.mxu0 0
        %2731 = vmatprep.subr.bf16.mxu0 0
        %2732 = vmatpush1.bf16.msra.mxu0 0
        %2733 = vmatprep.subr.bf16.mxu0 0
        %2734 = vmatpush1.bf16.msra.mxu0 0
        %2735 = vmatprep.subr.bf16.mxu0 0
        %2736 = vmatpush1.bf16.msra.mxu0 0
        %2737 = vmatprep.mubr.bf16.mxu0 0
        %2738 = vmatmul.mubr.bf16.gmra.mrb[0].mxu0 %v2703
        %v2739 = vpop.f32.mrb[0].mxu0
        %v2740 = vadd.f32 %v2688, %v2739
        %v2741 = vpop.f32.mrb[0].mxu0
        %v2742 = vpop.f32.mrb[0].mxu0
        %v2743 = vpop.f32.mrb[0].mxu0
        %2744 = vdwg.mxu0
        %v2745 = vadd.f32 %v2740, %v1958
        %2746 = vadd.xlane.f32.xlu0 %v2745
        %v2747 = vpop.xlane.xlu0 %2746
        %v2748 = vmul.f32 %v2747, 0.03125
        %v2749 = vmul.f32 %v2745, %v2745
        %2750 = vadd.xlane.f32.xlu0 %v2749
        %v2751 = vpop.xlane.xlu0 %2750
        %v2752 = vmul.f32 %v2751, 0.03125
        %v2753 = vmul.f32 %v2748, %v2748
        %v2754 = vsub.f32 %v2752, %v2753
        %v2755 = vsub.f32 %v2745, %v2748
        %v2756 = vadd.f32 %v2754, 1e-05
        %v2757 = vrsqrt.pop %v2756
        %v2758 = vmul.f32 %v2755, %v2757
        %v2759 = vmul.f32 %v2758, %v1949
        %v2760 = vadd.f32 %v2759, %v1956
        %v2761 = vpack.c.bf16 %v2760, %v2760
        %v2762 = vld [vmem:[#allocation32] sm:$0xf]
        %v2763 = vld [vmem:[#allocation32 + $0x4] sm:$0xf]
        %v2764 = vld [vmem:[#allocation32 + $0x8] sm:$0xf]
        %v2765 = vld [vmem:[#allocation32 + $0xc] sm:$0xf]
        %v2766 = vld [vmem:[#allocation32 + $0x10] sm:$0xf]
        %v2767 = vld [vmem:[#allocation32 + $0x14] sm:$0xf]
        %v2768 = vld [vmem:[#allocation32 + $0x18] sm:$0xf]
        %v2769 = vld [vmem:[#allocation32 + $0x1c] sm:$0xf]
        %v2770 = vld [vmem:[#allocation32 + $0x20] sm:$0xf]
        %v2771 = vld [vmem:[#allocation32 + $0x24] sm:$0xf]
        %v2772 = vld [vmem:[#allocation32 + $0x28] sm:$0xf]
        %v2773 = vld [vmem:[#allocation32 + $0x2c] sm:$0xf]
        %v2774 = vld [vmem:[#allocation32 + $0x30] sm:$0xf]
        %v2775 = vld [vmem:[#allocation32 + $0x34] sm:$0xf]
        %v2776 = vld [vmem:[#allocation32 + $0x38] sm:$0xf]
        %v2777 = vld [vmem:[#allocation32 + $0x3c] sm:$0xf]
        %v2778 = vld [vmem:[#allocation34] sm:$0x1]
        %v2780 = vlaneseq
        %v2781 = vshrl.u32 %v2780, 7
        %v2782 = vsub.s32 0, %v2781
        %v2783 = vrot.slane %v2778, %v2782
        %v2801 = vunpack.c.l.b16 %v2762
        %v2802 = vunpack.c.l.b16 %v2763
        %v2803 = vunpack.c.l.b16 %v2764
        %v2804 = vunpack.c.l.b16 %v2765
        %v2805 = vunpack.c.l.b16 %v2766
        %v2806 = vunpack.c.l.b16 %v2767
        %v2807 = vunpack.c.l.b16 %v2768
        %v2808 = vunpack.c.l.b16 %v2769
        %v2809 = vunpack.c.l.b16 %v2770
        %v2810 = vunpack.c.l.b16 %v2771
        %v2811 = vunpack.c.l.b16 %v2772
        %v2812 = vunpack.c.l.b16 %v2773
        %v2813 = vunpack.c.l.b16 %v2774
        %v2814 = vunpack.c.l.b16 %v2775
        %v2815 = vunpack.c.l.b16 %v2776
        %v2816 = vunpack.c.l.b16 %v2777
        %v2817 = vpack.c.b16 %v2802, %v2801
        %v2818 = vpack.c.b16 %v2804, %v2803
        %v2819 = vpack.c.b16 %v2806, %v2805
        %v2820 = vpack.c.b16 %v2808, %v2807
        %v2821 = vpack.c.b16 %v2810, %v2809
        %v2822 = vpack.c.b16 %v2812, %v2811
        %v2823 = vpack.c.b16 %v2814, %v2813
        %v2824 = vpack.c.b16 %v2816, %v2815
        %2833 = vmatprep.subr.bf16.mxu0 0
        %2834 = vmatpush1.bf16.msra.mxu0 %v2817
        %2835 = vmatprep.subr.bf16.mxu0 0
        %2836 = vmatpush1.bf16.msra.mxu0 %v2818
        %2837 = vmatprep.subr.bf16.mxu0 0
        %2838 = vmatpush1.bf16.msra.mxu0 %v2819
        %2839 = vmatprep.subr.bf16.mxu0 0
        %2840 = vmatpush1.bf16.msra.mxu0 %v2820
        %2841 = vmatprep.subr.bf16.mxu0 0
        %2842 = vmatpush1.bf16.msra.mxu0 %v2821
        %2843 = vmatprep.subr.bf16.mxu0 0
        %2844 = vmatpush1.bf16.msra.mxu0 %v2822
        %2845 = vmatprep.subr.bf16.mxu0 0
        %2846 = vmatpush1.bf16.msra.mxu0 %v2823
        %2847 = vmatprep.subr.bf16.mxu0 0
        %2848 = vmatpush1.bf16.msra.mxu0 %v2824
        %2849 = vmatprep.subr.bf16.mxu0 0
        %2850 = vmatpush1.bf16.msra.mxu0 0
        %2851 = vmatprep.subr.bf16.mxu0 0
        %2852 = vmatpush1.bf16.msra.mxu0 0
        %2853 = vmatprep.subr.bf16.mxu0 0
        %2854 = vmatpush1.bf16.msra.mxu0 0
        %2855 = vmatprep.subr.bf16.mxu0 0
        %2856 = vmatpush1.bf16.msra.mxu0 0
        %2857 = vmatprep.subr.bf16.mxu0 0
        %2858 = vmatpush1.bf16.msra.mxu0 0
        %2859 = vmatprep.subr.bf16.mxu0 0
        %2860 = vmatpush1.bf16.msra.mxu0 0
        %2861 = vmatprep.subr.bf16.mxu0 0
        %2862 = vmatpush1.bf16.msra.mxu0 0
        %2863 = vmatprep.subr.bf16.mxu0 0
        %2864 = vmatpush1.bf16.msra.mxu0 0
        %2865 = vmatprep.mubr.bf16.mxu0 0
        %2866 = vmatmul.mubr.bf16.gmra.mrb[0].mxu0 %v2761
        %v2867 = vpop.f32.mrb[0].mxu0
        %v2868 = vadd.f32 %v2783, %v2867
        %v2869 = vpop.f32.mrb[0].mxu0
        %v2870 = vpop.f32.mrb[0].mxu0
        %v2871 = vpop.f32.mrb[0].mxu0
        %2872 = vdwg.mxu0
        %v2873 = vmax.f32 %v2868, 0.0
        %v2874 = vpack.c.bf16 %v2873, %v2873
        %v2875 = vld [vmem:[#allocation35] sm:$0xf]
        %v2876 = vld [vmem:[#allocation35 + $0x4] sm:$0xf]
        %v2877 = vld [vmem:[#allocation35 + $0x8] sm:$0xf]
        %v2878 = vld [vmem:[#allocation35 + $0xc] sm:$0xf]
        %v2879 = vld [vmem:[#allocation35 + $0x10] sm:$0xf]
        %v2880 = vld [vmem:[#allocation35 + $0x14] sm:$0xf]
        %v2881 = vld [vmem:[#allocation35 + $0x18] sm:$0xf]
        %v2882 = vld [vmem:[#allocation35 + $0x1c] sm:$0xf]
        %v2883 = vld [vmem:[#allocation35 + $0x20] sm:$0xf]
        %v2884 = vld [vmem:[#allocation35 + $0x24] sm:$0xf]
        %v2885 = vld [vmem:[#allocation35 + $0x28] sm:$0xf]
        %v2886 = vld [vmem:[#allocation35 + $0x2c] sm:$0xf]
        %v2887 = vld [vmem:[#allocation35 + $0x30] sm:$0xf]
        %v2888 = vld [vmem:[#allocation35 + $0x34] sm:$0xf]
        %v2889 = vld [vmem:[#allocation35 + $0x38] sm:$0xf]
        %v2890 = vld [vmem:[#allocation35 + $0x3c] sm:$0xf]
        %v2891 = vld [vmem:[#allocation37] sm:$0x1]
        %v2893 = vlaneseq
        %v2894 = vshrl.u32 %v2893, 7
        %v2895 = vsub.s32 0, %v2894
        %v2896 = vrot.slane %v2891, %v2895
        %v2914 = vunpack.c.l.b16 %v2875
        %v2915 = vunpack.c.l.b16 %v2876
        %v2916 = vunpack.c.l.b16 %v2877
        %v2917 = vunpack.c.l.b16 %v2878
        %v2918 = vunpack.c.l.b16 %v2879
        %v2919 = vunpack.c.l.b16 %v2880
        %v2920 = vunpack.c.l.b16 %v2881
        %v2921 = vunpack.c.l.b16 %v2882
        %v2922 = vunpack.c.l.b16 %v2883
        %v2923 = vunpack.c.l.b16 %v2884
        %v2924 = vunpack.c.l.b16 %v2885
        %v2925 = vunpack.c.l.b16 %v2886
        %v2926 = vunpack.c.l.b16 %v2887
        %v2927 = vunpack.c.l.b16 %v2888
        %v2928 = vunpack.c.l.b16 %v2889
        %v2929 = vunpack.c.l.b16 %v2890
        %v2930 = vpack.c.b16 %v2915, %v2914
        %v2931 = vpack.c.b16 %v2917, %v2916
        %v2932 = vpack.c.b16 %v2919, %v2918
        %v2933 = vpack.c.b16 %v2921, %v2920
        %v2934 = vpack.c.b16 %v2923, %v2922
        %v2935 = vpack.c.b16 %v2925, %v2924
        %v2936 = vpack.c.b16 %v2927, %v2926
        %v2937 = vpack.c.b16 %v2929, %v2928
        %2946 = vmatprep.subr.bf16.mxu0 0
        %2947 = vmatpush1.bf16.msra.mxu0 %v2930
        %2948 = vmatprep.subr.bf16.mxu0 0
        %2949 = vmatpush1.bf16.msra.mxu0 %v2931
        %2950 = vmatprep.subr.bf16.mxu0 0
        %2951 = vmatpush1.bf16.msra.mxu0 %v2932
        %2952 = vmatprep.subr.bf16.mxu0 0
        %2953 = vmatpush1.bf16.msra.mxu0 %v2933
        %2954 = vmatprep.subr.bf16.mxu0 0
        %2955 = vmatpush1.bf16.msra.mxu0 %v2934
        %2956 = vmatprep.subr.bf16.mxu0 0
        %2957 = vmatpush1.bf16.msra.mxu0 %v2935
        %2958 = vmatprep.subr.bf16.mxu0 0
        %2959 = vmatpush1.bf16.msra.mxu0 %v2936
        %2960 = vmatprep.subr.bf16.mxu0 0
        %2961 = vmatpush1.bf16.msra.mxu0 %v2937
        %2962 = vmatprep.subr.bf16.mxu0 0
        %2963 = vmatpush1.bf16.msra.mxu0 0
        %2964 = vmatprep.subr.bf16.mxu0 0
        %2965 = vmatpush1.bf16.msra.mxu0 0
        %2966 = vmatprep.subr.bf16.mxu0 0
        %2967 = vmatpush1.bf16.msra.mxu0 0
        %2968 = vmatprep.subr.bf16.mxu0 0
        %2969 = vmatpush1.bf16.msra.mxu0 0
        %2970 = vmatprep.subr.bf16.mxu0 0
        %2971 = vmatpush1.bf16.msra.mxu0 0
        %2972 = vmatprep.subr.bf16.mxu0 0
        %2973 = vmatpush1.bf16.msra.mxu0 0
        %2974 = vmatprep.subr.bf16.mxu0 0
        %2975 = vmatpush1.bf16.msra.mxu0 0
        %2976 = vmatprep.subr.bf16.mxu0 0
        %2977 = vmatpush1.bf16.msra.mxu0 0
        %2978 = vmatprep.mubr.bf16.mxu0 0
        %2979 = vmatmul.mubr.bf16.gmra.mrb[0].mxu0 %v2874
        %v2980 = vpop.f32.mrb[0].mxu0
        %v2981 = vadd.f32 %v2896, %v2980
        %v2982 = vpop.f32.mrb[0].mxu0
        %v2983 = vpop.f32.mrb[0].mxu0
        %v2984 = vpop.f32.mrb[0].mxu0
        %2985 = vdwg.mxu0
        %v2986 = vadd.f32 %v2981, %v2760
        %2987 = vadd.xlane.f32.xlu0 %v2986
        %v2988 = vpop.xlane.xlu0 %2987
        %v2989 = vmul.f32 %v2988, 0.03125
        %v2990 = vmul.f32 %v2986, %v2986
        %2991 = vadd.xlane.f32.xlu0 %v2990
        %v2992 = vpop.xlane.xlu0 %2991
        %v2993 = vmul.f32 %v2992, 0.03125
        %v2994 = vmul.f32 %v2989, %v2989
        %v2995 = vsub.f32 %v2993, %v2994
        %v2996 = vsub.f32 %v2986, %v2989
        %v2997 = vadd.f32 %v2995, 1e-05
        %v2998 = vrsqrt.pop %v2997
        %v2999 = vmul.f32 %v2996, %v2998
        %v3000 = vmul.f32 %v2999, %v1949
        %v3001 = vadd.f32 %v3000, %v1956
        %3002 = vst [vmem:[%s1131] sm:$0xff] %v3001
        %s3003 = sand.u32 %s591, 1
        %s3004 = scalar_lea.sflag [#allocation4], %s3003
        %s3005 = sand.u32 %s591, 1
        %s3006 = smul.addr %s3005, 8
        %s3007 = scalar_lea.vmem [#allocation38], %s3006
        // Predicated region
        $region205: #{tpu_custom_call.1} parent=111 // pred_check
          %p3008 = pneg %p601
        $region206: #{tpu_custom_call.1} parent=111 // pred_check_branch
          %3010 = sbr.rel (%p3008) target = $region208
        $region207: #{tpu_custom_call.1} parent=111 // pred_region
          %s3012 = ssub.s32 128, 128
          %3013 = vsyncadd %s3004, %s3012
          %s3014 = sadd.s32 %s60, %s59
          %s3015 = smul.addr %s3014, 128
          %s3016 = scalar_lea.hbm %s23, %s3015
          %s3018 = sshll.u32 %s3007, 4
          %s3019 = int_to_ptr.vmem [resolvable:$true] %s3018
          %3021 = dma.vmem_to_hbm [thread:$0]  %s3019, 128, %s3016, %s3004
        $region208: #{tpu_custom_call.1} parent=111 // pred_fallthru
          _
      $region112: #{tpu_custom_call.1} parent=5 // pred_fallthru
        _
      %p3022 = scmp.le.s32.totalorder 2, %s50
      // Predicated region
      $region209: #{tpu_custom_call.1} parent=5 // pred_check
        %p3023 = pneg %p3022
      $region210: #{tpu_custom_call.1} parent=5 // pred_check_branch
        %3025 = sbr.rel (%p3023) target = $region212
      $region211: #{tpu_custom_call.1} parent=5 // pred_region
        %s3026 = ssub.s32 %s50, 2
        // Predicated region
        $region213: #{tpu_custom_call.1} parent=211 // pred_check
          %p3027 = pneg %p607
        $region214: #{tpu_custom_call.1} parent=211 // pred_check_branch
          %3029 = sbr.rel (%p3027) target = $region216
        $region215: #{tpu_custom_call.1} parent=211 // pred_region
          %s3030 = sand.u32 %s592, 1
          %s3031 = scalar_lea.sflag [#allocation4], %s3030
          %s3032 = sand.u32 %s592, 1
          %s3033 = smul.addr %s3032, 8
          %s3034 = scalar_lea.vmem [#allocation38], %s3033
          %3035 = dma.done %s3031, 128
        $region216: #{tpu_custom_call.1} parent=211 // pred_fallthru
          _
      $region212: #{tpu_custom_call.1} parent=5 // pred_fallthru
        _
    $region6: #{tpu_custom_call.1} parent=1 // loop_footer
      %s54 = sadd.s32 1, %s50
    $region7: #{tpu_custom_call.1} parent=1 // loop_footer_branch
      %49 = sbr.rel target = $region3
    $region8: #{tpu_custom_call.1} parent=1 // loop_exit
      _
    %3036 = vsyncpa [#allocation3], 1
    %s3037 = scalar_lea.sflag [#allocation3], 1
    %3038 = vsyncpa %s3037, 1
    %3039 = vsyncpa [#allocation6], 1
    %s3040 = scalar_lea.sflag [#allocation6], 1
    %3041 = vsyncpa %s3040, 1
    %3042 = vsyncpa [#allocation9], 1
    %s3043 = scalar_lea.sflag [#allocation9], 1
    %3044 = vsyncpa %s3043, 1
    %3045 = vsyncpa [#allocation12], 1
    %3046 = vsyncpa [#allocation15], 1
    %3047 = vsyncpa [#allocation18], 1
    %3048 = vsyncpa [#allocation21], 1
    %3049 = vsyncpa [#allocation24], 1
    %3050 = vsyncpa [#allocation27], 1
    %3051 = vsyncpa [#allocation30], 1
    %3052 = vsyncpa [#allocation33], 1
    %3053 = vsyncpa [#allocation36], 1
    %3054 = vsyncpa [#allocation4], 1
    %s3055 = scalar_lea.sflag [#allocation4], 1
    %3056 = vsyncpa %s3055, 1

</llo_original>
